<compile_context>
chip_gen: v5e
topology: v5e:2x2
jax: 0.10.0
libtpu: 0.0.40
codegen_flags: <defaults>
</compile_context>

<pallas_src>
import functools

import jax
import jax.numpy as jnp
from jax.experimental import pallas as pl
from jax.experimental.pallas import tpu as pltpu

F_DIM = 32


def _round_up(x, m):
    return ((x + m - 1) // m) * m


def _round_down_pos(x, m):
    return max(m, (x // m) * m)


def _default_gpack():
    """Batches packed along the lane dim: 4 (128 lanes) on v5e, else 8 (256)."""
    try:
        kind = jax.devices()[0].device_kind.lower()
    except Exception:
        return 8
    if "v5 lite" in kind or "v5e" in kind or "v5lite" in kind:
        return 4
    return 8


def _resnet_kernel(shape_ref, samples_ref, w_cbn_ref, b_cbn_ref,
                   w_fc_ref, b_fc_ref, out_ref, *, dot_dtype):
    TB, TN, GF = samples_ref.shape

    se = shape_ref[...]                                      # (TB, GF), 2-D

    # Fused CBN projection: one lane-dense block-diagonal (GF, 4*GF) matmul.
    # Columns: [beta1 | gamma1 | beta2 | gamma2]; 1/sqrt(var+eps) already
    # folded into the gamma columns by the wrapper.
    cbn = jnp.dot(se.astype(dot_dtype), w_cbn_ref[...],
                  preferred_element_type=jnp.float32) + b_cbn_ref[...]  # (TB, 4GF)
    beta1 = cbn[:, 0 * GF:1 * GF][:, None, :]                # (TB, 1, GF)
    gamma1 = cbn[:, 1 * GF:2 * GF][:, None, :]
    beta2 = cbn[:, 2 * GF:3 * GF][:, None, :]
    gamma2 = cbn[:, 3 * GF:4 * GF][:, None, :]

    # Elementwise math stays in f32 (v5e has no bf16 VALU).
    s = samples_ref[...].astype(jnp.float32)                 # (TB, TN, GF)

    # --- bn1 (running_mean=0; var scale folded into gamma) ---
    h0 = gamma1 * s + beta1                                  # init_sample_embeddings

    # --- relu -> fc1 over TB*TN lane-dense rows (full MXU tile at GF=256) ---
    h = jnp.maximum(h0, 0.0).reshape(TB * TN, GF)
    h = jnp.dot(h.astype(dot_dtype), w_fc_ref[0],
                preferred_element_type=jnp.float32) + b_fc_ref[0]
    h = h.reshape(TB, TN, GF)

    # --- bn2 ---
    h = gamma2 * h + beta2

    # --- relu -> fc2 ---
    h = jnp.maximum(h, 0.0).reshape(TB * TN, GF)
    h = jnp.dot(h.astype(dot_dtype), w_fc_ref[1],
                preferred_element_type=jnp.float32) + b_fc_ref[1]
    h = h.reshape(TB, TN, GF)

    # residual
    out_ref[...] = (h0 + h).astype(out_ref.dtype)


def batched_occnet_resnet_layer(shape_embedding, sample_embeddings, params, *,
                                g_pack=None, tile_bp=None, tile_n=None,
                                dot_dtype=None):
    """shape_embedding: (B, F); sample_embeddings: (B, N, F)."""
    B, F = shape_embedding.shape
    _, N, _ = sample_embeddings.shape
    out_dtype = sample_embeddings.dtype
    if dot_dtype is None:
        dot_dtype = out_dtype          # f32 in -> f32 MXU; bf16 in -> bf16 MXU
    dot_dtype = jnp.dtype(dot_dtype)

    G = int(g_pack) if g_pack is not None else _default_gpack()
    GF = G * F

    # ---- Fuse + block-diagonalize the 12 Linear params into 4 operands ----
    inv_std = (1.0 + 1e-5) ** -0.5     # fresh running_var=1 buffer, eval mode
    eye_g = jnp.eye(G, dtype=jnp.float32)

    def bdiag(w):                       # (F, F) -> block-diag (GF, GF)
        return jnp.kron(eye_g, w)

    def brep(b):                        # (1, F) -> (1, GF)
        return jnp.tile(b, (1, G))

    p = params
    w_cbn = jnp.concatenate(
        [bdiag(p["wb1"]), bdiag(p["wg1"]) * inv_std,
         bdiag(p["wb2"]), bdiag(p["wg2"]) * inv_std], axis=1).astype(dot_dtype)
    b_cbn = jnp.concatenate(
        [brep(p["bb1"]), brep(p["bg1"]) * inv_std,
         brep(p["bb2"]), brep(p["bg2"]) * inv_std], axis=1)            # f32
    w_fc = jnp.stack([bdiag(p["w1"]), bdiag(p["w2"])], axis=0).astype(dot_dtype)
    b_fc = jnp.stack([brep(p["b1"]), brep(p["b2"])], axis=0)           # f32

    # ---- Pack G batches along the lane dim (pad B up to a multiple of G) ----
    Bp = _round_up(B, G)
    if Bp != B:
        shape_embedding = jnp.pad(shape_embedding, ((0, Bp - B), (0, 0)))
        sample_embeddings = jnp.pad(sample_embeddings,
                                    ((0, Bp - B), (0, 0), (0, 0)))
    BP = Bp // G
    shape_packed = shape_embedding.reshape(BP, GF)                      # (BP, GF)
    samples_packed = (sample_embeddings
                      .reshape(BP, G, N, F)
                      .transpose(0, 2, 1, 3)
                      .reshape(BP, N, GF))                              # (BP, N, GF)

    # ---- Tile selection: target ~2 MiB of samples per grid step ----
    item = jnp.dtype(out_dtype).itemsize
    rows_target = max(8, (2 << 20) // (GF * item))
    Nr = _round_up(N, 8)
    auto = tile_bp is None and tile_n is None

    if tile_bp is None:
        if BP <= 16:
            tile_bp = BP                                    # full-dim block
        else:
            tile_bp = min(_round_up(BP, 8),
                          _round_down_pos(rows_target // min(Nr, rows_target), 8))
    tile_bp = int(tile_bp)
    if tile_bp < BP:
        tile_bp = _round_up(tile_bp, 8)   # 2-D shape block needs 8-aligned sublanes
    BPp = _round_up(BP, tile_bp)
    tile_bp = min(tile_bp, BPp)

    if tile_n is None:
        tile_n = min(Nr, _round_down_pos(rows_target // tile_bp, 8))
    tile_n = _round_up(int(tile_n), 8)
    Np = _round_up(N, tile_n)

    # Keep >= 2 grid steps when possible so v7x's two TensorCores both work.
    if auto and BPp // tile_bp == 1 and Np // tile_n == 1 and tile_n >= 16:
        tile_n = _round_down_pos(tile_n // 2, 8)
        Np = _round_up(N, tile_n)

    if BPp != BP or Np != N:
        samples_packed = jnp.pad(samples_packed,
                                 ((0, BPp - BP), (0, Np - N), (0, 0)))
        shape_packed = jnp.pad(shape_packed, ((0, BPp - BP), (0, 0)))

    grid = (BPp // tile_bp, Np // tile_n)

    # ---- Explicit VMEM budget (v7x has only 64 MiB physical) ----
    tile_rows = tile_bp * tile_n
    io_bytes = 2 * tile_rows * GF * item * 2            # double-buffered in + out
    w_bytes = 2 * ((w_cbn.size + w_fc.size) * dot_dtype.itemsize
                   + (b_cbn.size + b_fc.size) * 4)
    scratch_bytes = 6 * tile_rows * GF * 4               # f32 temporaries in kernel
    vmem_limit = int(min(48 << 20,
                         max(32 << 20,
                             io_bytes + w_bytes + scratch_bytes + (4 << 20))))

    kernel = functools.partial(_resnet_kernel, dot_dtype=dot_dtype)
    out_shape = jax.ShapeDtypeStruct((BPp, Np, GF), out_dtype)

    def run(single_buffer_weights):
        if single_buffer_weights and hasattr(pl, "Buffered"):
            # Constant-index weights never re-fetch; one buffer saves VMEM.
            def wspec(shape, imap):
                return pl.BlockSpec(shape, imap, pipeline_mode=pl.Buffered(1))
        else:
            wspec = pl.BlockSpec
        grid_spec = pltpu.PrefetchScalarGridSpec(
            num_scalar_prefetch=0,
            grid=grid,
            in_specs=[
                pl.BlockSpec((tile_bp, GF), lambda b, n: (b, 0)),          # shape emb
                pl.BlockSpec((tile_bp, tile_n, GF), lambda b, n: (b, n, 0)),  # samples
                wspec((GF, 4 * GF), lambda b, n: (0, 0)),                  # w_cbn
                wspec((1, 4 * GF), lambda b, n: (0, 0)),                   # b_cbn
                wspec((2, GF, GF), lambda b, n: (0, 0, 0)),                # w_fc
                wspec((2, 1, GF), lambda b, n: (0, 0, 0)),                 # b_fc
            ],
            out_specs=pl.BlockSpec((tile_bp, tile_n, GF), lambda b, n: (b, n, 0)),
        )
        return pl.pallas_call(
            kernel,
            out_shape=out_shape,
            grid_spec=grid_spec,
            compiler_params=pltpu.CompilerParams(
                dimension_semantics=("parallel", "parallel"),
                vmem_limit_bytes=vmem_limit),
        )(shape_packed, samples_packed, w_cbn, b_cbn, w_fc, b_fc)

    try:
        out_packed = run(single_buffer_weights=True)
    except Exception:
        # Fallback if this JAX/Mosaic version rejects single-buffered specs.
        out_packed = run(single_buffer_weights=False)

    # ---- Un-pack lanes back to (B, N, F) and drop padding ----
    out = (out_packed[:BP, :N, :]
           .reshape(BP, N, G, F)
           .transpose(0, 2, 1, 3)
           .reshape(Bp, N, F)[:B])
    return out


def make_params(key, f_dim=F_DIM):
    """Deterministic Linear(f_dim, f_dim) params. Weights are stored
    PRE-TRANSPOSED (in, out) so kernels compute x @ W + b, matching PyTorch's
    x @ W_pt.T + b."""
    keys = jax.random.split(key, 12)
    scale = 1.0 / jnp.sqrt(f_dim)

    def lin(kw, kb):
        w = jax.random.uniform(kw, (f_dim, f_dim), jnp.float32, -scale, scale)
        b = jax.random.uniform(kb, (1, f_dim), jnp.float32, -scale, scale)
        return w, b

    wb1, bb1 = lin(keys[0], keys[1])    # bn1.fc_beta
    wg1, bg1 = lin(keys[2], keys[3])    # bn1.fc_gamma
    w1, b1 = lin(keys[4], keys[5])      # fc1
    wb2, bb2 = lin(keys[6], keys[7])    # bn2.fc_beta
    wg2, bg2 = lin(keys[8], keys[9])    # bn2.fc_gamma
    w2, b2 = lin(keys[10], keys[11])    # fc2
    return dict(wb1=wb1, bb1=bb1, wg1=wg1, bg1=bg1, w1=w1, b1=b1,
                wb2=wb2, bb2=bb2, wg2=wg2, bg2=bg2, w2=w2, b2=b2)


def reference_forward(shape_embedding, sample_embeddings, params):
    """Pure-JAX reference mirroring the PyTorch forward (eval mode)."""
    inv = 1.0 / jnp.sqrt(1.0 + 1e-5)

    def cbn(wb, bb, wg, bg, se, s):
        beta = se @ wb + bb
        gamma = se @ wg + bg
        s = s * inv
        return gamma[:, None, :] * s + beta[:, None, :]

    p = params
    s = cbn(p["wb1"], p["bb1"][0], p["wg1"], p["bg1"][0],
            shape_embedding, sample_embeddings)
    init = s
    s = jnp.maximum(s, 0.0) @ p["w1"] + p["b1"][0]
    s = cbn(p["wb2"], p["bb2"][0], p["wg2"], p["bg2"][0], shape_embedding, s)
    s = jnp.maximum(s, 0.0) @ p["w2"] + p["b2"][0]
    return init + s


if __name__ == "__main__":
    key = jax.random.PRNGKey(0)
    k_p, k_shape, k_samp = jax.random.split(key, 3)

    B, N, F = 2, 64, F_DIM
    params = make_params(k_p, F)
    shape_embedding = jax.random.normal(k_shape, (B, F), jnp.float32)
    sample_embeddings = jax.random.normal(k_samp, (B, N, F), jnp.float32)

    ref = reference_forward(shape_embedding, sample_embeddings, params)

    # f32 path (matches the PyTorch eval-mode forward).
    out = batched_occnet_resnet_layer(shape_embedding, sample_embeddings, params)
    out = jax.block_until_ready(out)
    assert out.shape == (B, N, F)
    err = float(jnp.max(jnp.abs(out - ref)))
    assert jnp.allclose(out, ref, atol=1e-4, rtol=1e-4), err

    # bf16-MXU path (v6e/v7x feedback): f32 accumulation + f32 elementwise,
    # bf16 matmul inputs — sanity-checked at bf16 tolerance.
    out_bf = batched_occnet_resnet_layer(shape_embedding, sample_embeddings,
                                         params, dot_dtype=jnp.bfloat16)
    out_bf = jax.block_until_ready(out_bf)
    err_bf = float(jnp.max(jnp.abs(out_bf.astype(jnp.float32) - ref)))
    assert err_bf < 0.25, err_bf

    print("KERNEL_OK")
</pallas_src>

<mosaic_0001>
module attributes {stable_mosaic.version = 11 : i64} {
  func.func @_resnet_kernel(%arg0: i32, %arg1: i32, %arg2: memref<1x256xf32, #tpu.memory_space<vmem>>, %arg3: memref<1x32x256xf32, #tpu.memory_space<vmem>>, %arg4: memref<256x1024xf32, #tpu.memory_space<vmem>>, %arg5: memref<1x1024xf32, #tpu.memory_space<vmem>>, %arg6: memref<2x256x256xf32, #tpu.memory_space<vmem>>, %arg7: memref<2x1x256xf32, #tpu.memory_space<vmem>>, %arg8: memref<1x32x256xf32, #tpu.memory_space<vmem>>) attributes {dimension_semantics = [#tpu.dimension_semantics<parallel>, #tpu.dimension_semantics<parallel>], iteration_bounds = array<i64: 1, 2>, scalar_prefetch = 0 : i64, scratch_operands = 0 : i64, tpu.core_type = #tpu.core_type<tc>, window_params = [{transform_indices = @transform_0, window_bounds = array<i64: 1, 256>}, {transform_indices = @transform_1, window_bounds = array<i64: 1, 32, 256>}, {pipeline_mode = #tpu.pipeline_mode<synchronous>, transform_indices = @transform_2, window_bounds = array<i64: 256, 1024>}, {pipeline_mode = #tpu.pipeline_mode<synchronous>, transform_indices = @transform_3, window_bounds = array<i64: 1, 1024>}, {pipeline_mode = #tpu.pipeline_mode<synchronous>, transform_indices = @transform_4, window_bounds = array<i64: 2, 256, 256>}, {pipeline_mode = #tpu.pipeline_mode<synchronous>, transform_indices = @transform_5, window_bounds = array<i64: 2, 1, 256>}, {transform_indices = @transform_6, window_bounds = array<i64: 1, 32, 256>}]} {
    %c0 = arith.constant 0 : index
    %c0_0 = arith.constant 0 : index
    %0 = vector.load %arg2[%c0, %c0_0] : memref<1x256xf32, #tpu.memory_space<vmem>>, vector<1x256xf32>
    %c0_1 = arith.constant 0 : index
    %c0_2 = arith.constant 0 : index
    %1 = vector.load %arg4[%c0_1, %c0_2] : memref<256x1024xf32, #tpu.memory_space<vmem>>, vector<256x1024xf32>
    %cst = arith.constant dense<0.000000e+00> : vector<1x1024xf32>
    %2 = tpu.matmul %0, %1, %cst {dimension_numbers = #tpu.dot_dimension_numbers<[1], [0], [0], [1], [0, 0, 1, 1], [], []>} : vector<1x256xf32>, vector<256x1024xf32>, vector<1x1024xf32> -> vector<1x1024xf32>
    %c0_3 = arith.constant 0 : index
    %c0_4 = arith.constant 0 : index
    %3 = vector.load %arg5[%c0_3, %c0_4] : memref<1x1024xf32, #tpu.memory_space<vmem>>, vector<1x1024xf32>
    %4 = arith.addf %2, %3 : vector<1x1024xf32>
    %5 = vector.extract_strided_slice %4 {offsets = [0, 0], sizes = [1, 256], strides = [1, 1]} : vector<1x1024xf32> to vector<1x256xf32>
    %6 = vector.shape_cast %5 : vector<1x256xf32> to vector<1x1x256xf32>
    %7 = vector.extract_strided_slice %4 {offsets = [0, 256], sizes = [1, 256], strides = [1, 1]} : vector<1x1024xf32> to vector<1x256xf32>
    %8 = vector.shape_cast %7 : vector<1x256xf32> to vector<1x1x256xf32>
    %9 = vector.extract_strided_slice %4 {offsets = [0, 512], sizes = [1, 256], strides = [1, 1]} : vector<1x1024xf32> to vector<1x256xf32>
    %10 = vector.shape_cast %9 : vector<1x256xf32> to vector<1x1x256xf32>
    %11 = vector.extract_strided_slice %4 {offsets = [0, 768], sizes = [1, 256], strides = [1, 1]} : vector<1x1024xf32> to vector<1x256xf32>
    %12 = vector.shape_cast %11 : vector<1x256xf32> to vector<1x1x256xf32>
    %c0_5 = arith.constant 0 : index
    %c0_6 = arith.constant 0 : index
    %c0_7 = arith.constant 0 : index
    %13 = vector.load %arg3[%c0_5, %c0_6, %c0_7] : memref<1x32x256xf32, #tpu.memory_space<vmem>>, vector<1x32x256xf32>
    %14 = vector.broadcast %8 : vector<1x1x256xf32> to vector<1x32x256xf32>
    %15 = arith.mulf %14, %13 : vector<1x32x256xf32>
    %16 = vector.broadcast %6 : vector<1x1x256xf32> to vector<1x32x256xf32>
    %17 = arith.addf %15, %16 : vector<1x32x256xf32>
    %cst_8 = arith.constant 0.000000e+00 : f32
    %18 = vector.broadcast %cst_8 : f32 to vector<1x32x256xf32>
    %19 = arith.maximumf %17, %18 : vector<1x32x256xf32>
    %20 = vector.shape_cast %19 : vector<1x32x256xf32> to vector<32x256xf32>
    %c0_9 = arith.constant 0 : index
    %c0_10 = arith.constant 0 : index
    %c0_11 = arith.constant 0 : index
    %21 = vector.load %arg6[%c0_9, %c0_10, %c0_11] : memref<2x256x256xf32, #tpu.memory_space<vmem>>, vector<1x256x256xf32>
    %22 = vector.shape_cast %21 : vector<1x256x256xf32> to vector<256x256xf32>
    %cst_12 = arith.constant dense<0.000000e+00> : vector<32x256xf32>
    %23 = tpu.matmul %20, %22, %cst_12 {dimension_numbers = #tpu.dot_dimension_numbers<[1], [0], [0], [1], [0, 0, 1, 1], [], []>} : vector<32x256xf32>, vector<256x256xf32>, vector<32x256xf32> -> vector<32x256xf32>
    %c0_13 = arith.constant 0 : index
    %c0_14 = arith.constant 0 : index
    %c0_15 = arith.constant 0 : index
    %24 = vector.load %arg7[%c0_13, %c0_14, %c0_15] : memref<2x1x256xf32, #tpu.memory_space<vmem>>, vector<1x1x256xf32>
    %25 = vector.shape_cast %24 : vector<1x1x256xf32> to vector<1x256xf32>
    %26 = vector.broadcast %25 : vector<1x256xf32> to vector<32x256xf32>
    %27 = arith.addf %23, %26 : vector<32x256xf32>
    %28 = vector.shape_cast %27 : vector<32x256xf32> to vector<1x32x256xf32>
    %29 = vector.broadcast %12 : vector<1x1x256xf32> to vector<1x32x256xf32>
    %30 = arith.mulf %29, %28 : vector<1x32x256xf32>
    %31 = vector.broadcast %10 : vector<1x1x256xf32> to vector<1x32x256xf32>
    %32 = arith.addf %30, %31 : vector<1x32x256xf32>
    %cst_16 = arith.constant 0.000000e+00 : f32
    %33 = vector.broadcast %cst_16 : f32 to vector<1x32x256xf32>
    %34 = arith.maximumf %32, %33 : vector<1x32x256xf32>
    %35 = vector.shape_cast %34 : vector<1x32x256xf32> to vector<32x256xf32>
    %c1 = arith.constant 1 : index
    %c0_17 = arith.constant 0 : index
    %c0_18 = arith.constant 0 : index
    %36 = vector.load %arg6[%c1, %c0_17, %c0_18] : memref<2x256x256xf32, #tpu.memory_space<vmem>>, vector<1x256x256xf32>
    %37 = vector.shape_cast %36 : vector<1x256x256xf32> to vector<256x256xf32>
    %cst_19 = arith.constant dense<0.000000e+00> : vector<32x256xf32>
    %38 = tpu.matmul %35, %37, %cst_19 {dimension_numbers = #tpu.dot_dimension_numbers<[1], [0], [0], [1], [0, 0, 1, 1], [], []>} : vector<32x256xf32>, vector<256x256xf32>, vector<32x256xf32> -> vector<32x256xf32>
    %c1_20 = arith.constant 1 : index
    %c0_21 = arith.constant 0 : index
    %c0_22 = arith.constant 0 : index
    %39 = vector.load %arg7[%c1_20, %c0_21, %c0_22] : memref<2x1x256xf32, #tpu.memory_space<vmem>>, vector<1x1x256xf32>
    %40 = vector.shape_cast %39 : vector<1x1x256xf32> to vector<1x256xf32>
    %41 = vector.broadcast %40 : vector<1x256xf32> to vector<32x256xf32>
    %42 = arith.addf %38, %41 : vector<32x256xf32>
    %43 = vector.shape_cast %42 : vector<32x256xf32> to vector<1x32x256xf32>
    %44 = arith.addf %17, %43 : vector<1x32x256xf32>
    %c0_23 = arith.constant 0 : index
    %c0_24 = arith.constant 0 : index
    %c0_25 = arith.constant 0 : index
    %45 = vector.load %arg8[%c0_23, %c0_24, %c0_25] : memref<1x32x256xf32, #tpu.memory_space<vmem>>, vector<1x32x256xf32>
    tpu.vector_store %arg8[%c0_23, %c0_24, %c0_25], %44 {strides = array<i32>} : memref<1x32x256xf32, #tpu.memory_space<vmem>>, vector<1x32x256xf32>,
    return
  }
  func.func @transform_0(%arg0: i32, %arg1: i32) -> (i32, i32) {
    %c0_i32 = arith.constant 0 : i32
    %c0_i32_0 = arith.constant 0 : i32
    return %arg0, %c0_i32 : i32, i32
  }
  func.func @transform_1(%arg0: i32, %arg1: i32) -> (i32, i32, i32) {
    %c0_i32 = arith.constant 0 : i32
    %c0_i32_0 = arith.constant 0 : i32
    return %arg0, %arg1, %c0_i32 : i32, i32, i32
  }
  func.func @transform_2(%arg0: i32, %arg1: i32) -> (i32, i32) {
    %c0_i32 = arith.constant 0 : i32
    %c0_i32_0 = arith.constant 0 : i32
    %c0_i32_1 = arith.constant 0 : i32
    return %c0_i32, %c0_i32_0 : i32, i32
  }
  func.func @transform_3(%arg0: i32, %arg1: i32) -> (i32, i32) {
    %c0_i32 = arith.constant 0 : i32
    %c0_i32_0 = arith.constant 0 : i32
    %c0_i32_1 = arith.constant 0 : i32
    return %c0_i32, %c0_i32_0 : i32, i32
  }
  func.func @transform_4(%arg0: i32, %arg1: i32) -> (i32, i32, i32) {
    %c0_i32 = arith.constant 0 : i32
    %c0_i32_0 = arith.constant 0 : i32
    %c0_i32_1 = arith.constant 0 : i32
    %c0_i32_2 = arith.constant 0 : i32
    return %c0_i32, %c0_i32_0, %c0_i32_1 : i32, i32, i32
  }
  func.func @transform_5(%arg0: i32, %arg1: i32) -> (i32, i32, i32) {
    %c0_i32 = arith.constant 0 : i32
    %c0_i32_0 = arith.constant 0 : i32
    %c0_i32_1 = arith.constant 0 : i32
    %c0_i32_2 = arith.constant 0 : i32
    return %c0_i32, %c0_i32_0, %c0_i32_1 : i32, i32, i32
  }
  func.func @transform_6(%arg0: i32, %arg1: i32) -> (i32, i32, i32) {
    %c0_i32 = arith.constant 0 : i32
    %c0_i32_0 = arith.constant 0 : i32
    return %arg0, %arg1, %c0_i32 : i32, i32, i32
  }
}

module attributes {stable_mosaic.version = 11 : i64} {
  func.func @_resnet_kernel(%arg0: i32, %arg1: i32, %arg2: memref<1x256xf32, #tpu.memory_space<vmem>>, %arg3: memref<1x32x256xf32, #tpu.memory_space<vmem>>, %arg4: memref<256x1024xf32, #tpu.memory_space<vmem>>, %arg5: memref<1x1024xf32, #tpu.memory_space<vmem>>, %arg6: memref<2x256x256xf32, #tpu.memory_space<vmem>>, %arg7: memref<2x1x256xf32, #tpu.memory_space<vmem>>, %arg8: memref<1x32x256xf32, #tpu.memory_space<vmem>>) attributes {dimension_semantics = [#tpu.dimension_semantics<parallel>, #tpu.dimension_semantics<parallel>], iteration_bounds = array<i64: 1, 2>, scalar_prefetch = 0 : i64, scratch_operands = 0 : i64, tpu.core_type = #tpu.core_type<tc>, window_params = [{transform_indices = @transform_0, window_bounds = array<i64: 1, 256>}, {transform_indices = @transform_1, window_bounds = array<i64: 1, 32, 256>}, {pipeline_mode = #tpu.pipeline_mode<synchronous>, transform_indices = @transform_2, window_bounds = array<i64: 256, 1024>}, {pipeline_mode = #tpu.pipeline_mode<synchronous>, transform_indices = @transform_3, window_bounds = array<i64: 1, 1024>}, {pipeline_mode = #tpu.pipeline_mode<synchronous>, transform_indices = @transform_4, window_bounds = array<i64: 2, 256, 256>}, {pipeline_mode = #tpu.pipeline_mode<synchronous>, transform_indices = @transform_5, window_bounds = array<i64: 2, 1, 256>}, {transform_indices = @transform_6, window_bounds = array<i64: 1, 32, 256>}]} {
    %c0 = arith.constant 0 : index
    %c0_0 = arith.constant 0 : index
    %0 = vector.load %arg2[%c0, %c0_0] : memref<1x256xf32, #tpu.memory_space<vmem>>, vector<1x256xf32>
    %c0_1 = arith.constant 0 : index
    %c0_2 = arith.constant 0 : index
    %1 = vector.load %arg4[%c0_1, %c0_2] : memref<256x1024xf32, #tpu.memory_space<vmem>>, vector<256x1024xf32>
    %cst = arith.constant dense<0.000000e+00> : vector<1x1024xf32>
    %2 = tpu.matmul %0, %1, %cst {dimension_numbers = #tpu.dot_dimension_numbers<[1], [0], [0], [1], [0, 0, 1, 1], [], []>} : vector<1x256xf32>, vector<256x1024xf32>, vector<1x1024xf32> -> vector<1x1024xf32>
    %c0_3 = arith.constant 0 : index
    %c0_4 = arith.constant 0 : index
    %3 = vector.load %arg5[%c0_3, %c0_4] : memref<1x1024xf32, #tpu.memory_space<vmem>>, vector<1x1024xf32>
    %4 = arith.addf %2, %3 : vector<1x1024xf32>
    %5 = vector.extract_strided_slice %4 {offsets = [0, 0], sizes = [1, 256], strides = [1, 1]} : vector<1x1024xf32> to vector<1x256xf32>
    %6 = vector.shape_cast %5 : vector<1x256xf32> to vector<1x1x256xf32>
    %7 = vector.extract_strided_slice %4 {offsets = [0, 256], sizes = [1, 256], strides = [1, 1]} : vector<1x1024xf32> to vector<1x256xf32>
    %8 = vector.shape_cast %7 : vector<1x256xf32> to vector<1x1x256xf32>
    %9 = vector.extract_strided_slice %4 {offsets = [0, 512], sizes = [1, 256], strides = [1, 1]} : vector<1x1024xf32> to vector<1x256xf32>
    %10 = vector.shape_cast %9 : vector<1x256xf32> to vector<1x1x256xf32>
    %11 = vector.extract_strided_slice %4 {offsets = [0, 768], sizes = [1, 256], strides = [1, 1]} : vector<1x1024xf32> to vector<1x256xf32>
    %12 = vector.shape_cast %11 : vector<1x256xf32> to vector<1x1x256xf32>
    %c0_5 = arith.constant 0 : index
    %c0_6 = arith.constant 0 : index
    %c0_7 = arith.constant 0 : index
    %13 = vector.load %arg3[%c0_5, %c0_6, %c0_7] : memref<1x32x256xf32, #tpu.memory_space<vmem>>, vector<1x32x256xf32>
    %14 = vector.broadcast %8 : vector<1x1x256xf32> to vector<1x32x256xf32>
    %15 = arith.mulf %14, %13 : vector<1x32x256xf32>
    %16 = vector.broadcast %6 : vector<1x1x256xf32> to vector<1x32x256xf32>
    %17 = arith.addf %15, %16 : vector<1x32x256xf32>
    %cst_8 = arith.constant 0.000000e+00 : f32
    %18 = vector.broadcast %cst_8 : f32 to vector<1x32x256xf32>
    %19 = arith.maximumf %17, %18 : vector<1x32x256xf32>
    %20 = vector.shape_cast %19 : vector<1x32x256xf32> to vector<32x256xf32>
    %c0_9 = arith.constant 0 : index
    %c0_10 = arith.constant 0 : index
    %c0_11 = arith.constant 0 : index
    %21 = vector.load %arg6[%c0_9, %c0_10, %c0_11] : memref<2x256x256xf32, #tpu.memory_space<vmem>>, vector<1x256x256xf32>
    %22 = vector.shape_cast %21 : vector<1x256x256xf32> to vector<256x256xf32>
    %cst_12 = arith.constant dense<0.000000e+00> : vector<32x256xf32>
    %23 = tpu.matmul %20, %22, %cst_12 {dimension_numbers = #tpu.dot_dimension_numbers<[1], [0], [0], [1], [0, 0, 1, 1], [], []>} : vector<32x256xf32>, vector<256x256xf32>, vector<32x256xf32> -> vector<32x256xf32>
    %c0_13 = arith.constant 0 : index
    %c0_14 = arith.constant 0 : index
    %c0_15 = arith.constant 0 : index
    %24 = vector.load %arg7[%c0_13, %c0_14, %c0_15] : memref<2x1x256xf32, #tpu.memory_space<vmem>>, vector<1x1x256xf32>
    %25 = vector.shape_cast %24 : vector<1x1x256xf32> to vector<1x256xf32>
    %26 = vector.broadcast %25 : vector<1x256xf32> to vector<32x256xf32>
    %27 = arith.addf %23, %26 : vector<32x256xf32>
    %28 = vector.shape_cast %27 : vector<32x256xf32> to vector<1x32x256xf32>
    %29 = vector.broadcast %12 : vector<1x1x256xf32> to vector<1x32x256xf32>
    %30 = arith.mulf %29, %28 : vector<1x32x256xf32>
    %31 = vector.broadcast %10 : vector<1x1x256xf32> to vector<1x32x256xf32>
    %32 = arith.addf %30, %31 : vector<1x32x256xf32>
    %cst_16 = arith.constant 0.000000e+00 : f32
    %33 = vector.broadcast %cst_16 : f32 to vector<1x32x256xf32>
    %34 = arith.maximumf %32, %33 : vector<1x32x256xf32>
    %35 = vector.shape_cast %34 : vector<1x32x256xf32> to vector<32x256xf32>
    %c1 = arith.constant 1 : index
    %c0_17 = arith.constant 0 : index
    %c0_18 = arith.constant 0 : index
    %36 = vector.load %arg6[%c1, %c0_17, %c0_18] : memref<2x256x256xf32, #tpu.memory_space<vmem>>, vector<1x256x256xf32>
    %37 = vector.shape_cast %36 : vector<1x256x256xf32> to vector<256x256xf32>
    %cst_19 = arith.constant dense<0.000000e+00> : vector<32x256xf32>
    %38 = tpu.matmul %35, %37, %cst_19 {dimension_numbers = #tpu.dot_dimension_numbers<[1], [0], [0], [1], [0, 0, 1, 1], [], []>} : vector<32x256xf32>, vector<256x256xf32>, vector<32x256xf32> -> vector<32x256xf32>
    %c1_20 = arith.constant 1 : index
    %c0_21 = arith.constant 0 : index
    %c0_22 = arith.constant 0 : index
    %39 = vector.load %arg7[%c1_20, %c0_21, %c0_22] : memref<2x1x256xf32, #tpu.memory_space<vmem>>, vector<1x1x256xf32>
    %40 = vector.shape_cast %39 : vector<1x1x256xf32> to vector<1x256xf32>
    %41 = vector.broadcast %40 : vector<1x256xf32> to vector<32x256xf32>
    %42 = arith.addf %38, %41 : vector<32x256xf32>
    %43 = vector.shape_cast %42 : vector<32x256xf32> to vector<1x32x256xf32>
    %44 = arith.addf %17, %43 : vector<1x32x256xf32>
    %c0_23 = arith.constant 0 : index
    %c0_24 = arith.constant 0 : index
    %c0_25 = arith.constant 0 : index
    %45 = vector.load %arg8[%c0_23, %c0_24, %c0_25] : memref<1x32x256xf32, #tpu.memory_space<vmem>>, vector<1x32x256xf32>
    tpu.vector_store %arg8[%c0_23, %c0_24, %c0_25], %44 {strides = array<i32>} : memref<1x32x256xf32, #tpu.memory_space<vmem>>, vector<1x32x256xf32>,
    return
  }
  func.func @transform_0(%arg0: i32, %arg1: i32) -> (i32, i32) {
    %c0_i32 = arith.constant 0 : i32
    %c0_i32_0 = arith.constant 0 : i32
    return %arg0, %c0_i32 : i32, i32
  }
  func.func @transform_1(%arg0: i32, %arg1: i32) -> (i32, i32, i32) {
    %c0_i32 = arith.constant 0 : i32
    %c0_i32_0 = arith.constant 0 : i32
    return %arg0, %arg1, %c0_i32 : i32, i32, i32
  }
  func.func @transform_2(%arg0: i32, %arg1: i32) -> (i32, i32) {
    %c0_i32 = arith.constant 0 : i32
    %c0_i32_0 = arith.constant 0 : i32
    %c0_i32_1 = arith.constant 0 : i32
    return %c0_i32, %c0_i32_0 : i32, i32
  }
  func.func @transform_3(%arg0: i32, %arg1: i32) -> (i32, i32) {
    %c0_i32 = arith.constant 0 : i32
    %c0_i32_0 = arith.constant 0 : i32
    %c0_i32_1 = arith.constant 0 : i32
    return %c0_i32, %c0_i32_0 : i32, i32
  }
  func.func @transform_4(%arg0: i32, %arg1: i32) -> (i32, i32, i32) {
    %c0_i32 = arith.constant 0 : i32
    %c0_i32_0 = arith.constant 0 : i32
    %c0_i32_1 = arith.constant 0 : i32
    %c0_i32_2 = arith.constant 0 : i32
    return %c0_i32, %c0_i32_0, %c0_i32_1 : i32, i32, i32
  }
  func.func @transform_5(%arg0: i32, %arg1: i32) -> (i32, i32, i32) {
    %c0_i32 = arith.constant 0 : i32
    %c0_i32_0 = arith.constant 0 : i32
    %c0_i32_1 = arith.constant 0 : i32
    %c0_i32_2 = arith.constant 0 : i32
    return %c0_i32, %c0_i32_0, %c0_i32_1 : i32, i32, i32
  }
  func.func @transform_6(%arg0: i32, %arg1: i32) -> (i32, i32, i32) {
    %c0_i32 = arith.constant 0 : i32
    %c0_i32_0 = arith.constant 0 : i32
    return %arg0, %arg1, %c0_i32 : i32, i32, i32
  }
}

</mosaic_0001>

<llo_original>
// kernel: tpu_custom_call.1
$region0: #{tpu_custom_call.1}
  #allocation0 [shape = 'u32[]', space=smem, size = 0x4, offset = 0x4, fixed_abs, tag = 'smem constant byte address 0x4 - core index']
  #allocation1 [shape = 'u32[72,128]{1,0:T(1,128)}', space=vmem, size = 0x9000, scoped, tag = 'internal scratch']
  %s0 = inlined_call_operand.hbm [shape: f32[1,256], index: 0, kind: input, shape index: {}]
  %s1 = inlined_call_operand.hbm [shape: f32[1,64,256], index: 1, kind: input, shape index: {}]
  %s2 = inlined_call_operand.hbm [shape: f32[256,1024], index: 2, kind: input, shape index: {}]
  %s3 = inlined_call_operand.hbm [shape: f32[1,1024], index: 3, kind: input, shape index: {}]
  %s4 = inlined_call_operand.hbm [shape: f32[2,256,256], index: 4, kind: input, shape index: {}]
  %s5 = inlined_call_operand.vmem [shape: f32[2,1,256], index: 5, kind: input, shape index: {}]
  %s6 = inlined_call_operand.hbm [shape: f32[1,64,256], index: 6, kind: output, shape index: {}]
  %s7 = sld [smem:[#allocation0]]
  $region77: #{tpu_custom_call.1} parent=0
    _
  %s9 = ssub.s32 1, %s7
  %s10 = scalar_select 0, %s9, %s7
  $region1: #{tpu_custom_call.1} parent=0
    #allocation2 [shape = 'u8[1024]{0}', space=vmem, size = 0x400, scoped, tag = 'input window, operand 0, single buffered']
    #allocation3 [shape = 's32[2]{0}', space=sflag, size = 0x8, scoped, tag = 'scoped memory for tpu_custom_call.1']
    #allocation4 [shape = 's32[2]{0}', space=sflag, size = 0x8, scoped, tag = 'scoped memory for tpu_custom_call.1']
    #allocation5 [shape = 'u8[65536]{0}', space=vmem, size = 0x10000, scoped, tag = 'input window, operand 1']
    #allocation6 [shape = 's32[2]{0}', space=sflag, size = 0x8, scoped, tag = 'scoped memory for tpu_custom_call.1']
    #allocation7 [shape = 'u8[1048576]{0}', space=vmem, size = 0x100000, scoped, tag = 'input window, operand 2, single buffered']
    #allocation8 [shape = 'u8[4096]{0}', space=vmem, size = 0x1000, scoped, tag = 'input window, operand 3, single buffered']
    #allocation9 [shape = 's32[1]{0}', space=sflag, size = 0x4, scoped, tag = 'scoped memory for tpu_custom_call.1']
    #allocation10 [shape = 'u8[524288]{0}', space=vmem, size = 0x80000, scoped, tag = 'input window, operand 4, single buffered']
    #allocation11 [shape = 'u8[65536]{0}', space=vmem, size = 0x10000, scoped, tag = 'output window, operand 0']
    %11 = vsyncpa [#allocation3], 0
    %12 = vsyncpa [#allocation6], 0
    %s13 = scalar_lea.sflag [#allocation6], 1
    %14 = vsyncpa %s13, 0
    %15 = vsyncpa [#allocation9], 0
    %16 = vsyncpa [#allocation4], 0
    %s17 = scalar_lea.sflag [#allocation4], 1
    %18 = vsyncpa %s17, 0
    loop: start=0, step=1, limit=4
    $region2: #{tpu_custom_call.1} parent=1 // loop_pre_header
      _
    $region3: #{tpu_custom_call.1} parent=1 // loop_header
      %s20 = sphi 0, %s24
      %p21 = scmp.ge.s32.totalorder %s20, 4
      %s27 = sphi 0, %s39
      %s28 = sphi 0, %s35
      %s29 = sphi 0, %s27
      %s30 = sphi 0, %s28
      %s31 = sphi 0, %s29
      %s32 = sphi 0, %s30
      %s42 = sphi 0, %s44
      %s45 = sphi 0, %s42
      %s46 = sphi 0, %s45
      %s62 = sphi 0, %s46
      %s70 = sphi 0, %s72
      %s73 = sphi 0, %s70
      %s74 = sphi 0, %s73
      %s90 = sphi 0, %s74
      %s94 = sphi 0, %s94
      %s96 = sphi 0, %s94
      %s97 = sphi 0, %s96
      %s111 = sphi 0, %s97
      %s115 = sphi 0, %s115
      %s117 = sphi 0, %s115
      %s118 = sphi 0, %s117
      %s132 = sphi 0, %s118
      %s136 = sphi 0, %s136
      %s138 = sphi 0, %s136
      %s139 = sphi 0, %s138
      %s153 = sphi 0, %s139
      %s157 = sphi 0, %s157
      %s159 = sphi 0, %s157
      %s160 = sphi 0, %s159
      %s174 = sphi 0, %s160
      %s182 = sphi 0, %s184
      %s185 = sphi 0, %s182
      %s186 = sphi 0, %s185
      %s202 = sphi 0, %s186
    $region4: #{tpu_custom_call.1} parent=1 // loop_header_branch
      %23 = sbr.rel (%p21) target = $region8
    $region5: #{tpu_custom_call.1} parent=1 // loop_body
      %s25 = ssub.s32 %s20, 1
      %s26 = ssub.s32 %s20, 2
      %s33 = sadd.s32 1, %s28
      %p34 = scmp.ge.s32.totalorder %s33, 2
      %s35 = scalar_select %p34, 0, %s33
      %s36 = sadd.s32 1, %s27
      %s37 = scalar_select %p34, %s36, %s27
      %p38 = scmp.ge.s32.totalorder %s37, 1
      %s39 = scalar_select %p38, 0, %s37
      %s40 = ssub.s32 %s27, %s39
      %p41 = scmp.eq.s32.totalorder %s40, 0
      %s43 = sadd.s32 %s42, 1
      %s44 = scalar_select %p41, %s42, %s43
      %p47 = pneg %p41
      %p48 = scmp.eq.s32.totalorder %s20, 1
      %p49 = por %p47, %p48
      %p50 = scmp.ne.s32.totalorder %s42, %s45
      %p51 = scmp.eq.s32.totalorder %s20, 0
      %p52 = por %p50, %p51
      %p53 = scmp.ne.s32.totalorder %s42, %s45
      %p54 = scmp.eq.s32.totalorder %s25, 1
      %p55 = por %p53, %p54
      %p56 = scmp.ne.s32.totalorder %s45, %s46
      %p57 = scmp.eq.s32.totalorder %s25, 0
      %p58 = por %p56, %p57
      %p59 = scmp.ne.s32.totalorder %s45, %s46
      %p60 = scmp.eq.s32.totalorder %s26, 1
      %p61 = por %p59, %p60
      %p63 = scmp.ne.s32.totalorder %s46, %s62
      %p64 = scmp.eq.s32.totalorder %s26, 0
      %p65 = por %p63, %p64
      %s66 = ssub.s32 %s27, %s39
      %s67 = ssub.s32 %s28, %s35
      %s68 = sor.u32 %s66, %s67
      %p69 = scmp.eq.s32.totalorder %s68, 0
      %s71 = sadd.s32 %s70, 1
      %s72 = scalar_select %p69, %s70, %s71
      %p75 = pneg %p69
      %p76 = scmp.eq.s32.totalorder %s20, 1
      %p77 = por %p75, %p76
      %p78 = scmp.ne.s32.totalorder %s70, %s73
      %p79 = scmp.eq.s32.totalorder %s20, 0
      %p80 = por %p78, %p79
      %p81 = scmp.ne.s32.totalorder %s70, %s73
      %p82 = scmp.eq.s32.totalorder %s25, 1
      %p83 = por %p81, %p82
      %p84 = scmp.ne.s32.totalorder %s73, %s74
      %p85 = scmp.eq.s32.totalorder %s25, 0
      %p86 = por %p84, %p85
      %p87 = scmp.ne.s32.totalorder %s73, %s74
      %p88 = scmp.eq.s32.totalorder %s26, 1
      %p89 = por %p87, %p88
      %p91 = scmp.ne.s32.totalorder %s74, %s90
      %p92 = scmp.eq.s32.totalorder %s26, 0
      %p93 = por %p91, %p92
      %s95 = sadd.s32 %s94, 1
      %p98 = scmp.eq.s32.totalorder %s20, 1
      %p99 = scmp.ne.s32.totalorder %s94, %s96
      %p100 = scmp.eq.s32.totalorder %s20, 0
      %p101 = por %p99, %p100
      %p102 = scmp.ne.s32.totalorder %s94, %s96
      %p103 = scmp.eq.s32.totalorder %s25, 1
      %p104 = por %p102, %p103
      %p105 = scmp.ne.s32.totalorder %s96, %s97
      %p106 = scmp.eq.s32.totalorder %s25, 0
      %p107 = por %p105, %p106
      %p108 = scmp.ne.s32.totalorder %s96, %s97
      %p109 = scmp.eq.s32.totalorder %s26, 1
      %p110 = por %p108, %p109
      %p112 = scmp.ne.s32.totalorder %s97, %s111
      %p113 = scmp.eq.s32.totalorder %s26, 0
      %p114 = por %p112, %p113
      %s116 = sadd.s32 %s115, 1
      %p119 = scmp.eq.s32.totalorder %s20, 1
      %p120 = scmp.ne.s32.totalorder %s115, %s117
      %p121 = scmp.eq.s32.totalorder %s20, 0
      %p122 = por %p120, %p121
      %p123 = scmp.ne.s32.totalorder %s115, %s117
      %p124 = scmp.eq.s32.totalorder %s25, 1
      %p125 = por %p123, %p124
      %p126 = scmp.ne.s32.totalorder %s117, %s118
      %p127 = scmp.eq.s32.totalorder %s25, 0
      %p128 = por %p126, %p127
      %p129 = scmp.ne.s32.totalorder %s117, %s118
      %p130 = scmp.eq.s32.totalorder %s26, 1
      %p131 = por %p129, %p130
      %p133 = scmp.ne.s32.totalorder %s118, %s132
      %p134 = scmp.eq.s32.totalorder %s26, 0
      %p135 = por %p133, %p134
      %s137 = sadd.s32 %s136, 1
      %p140 = scmp.eq.s32.totalorder %s20, 1
      %p141 = scmp.ne.s32.totalorder %s136, %s138
      %p142 = scmp.eq.s32.totalorder %s20, 0
      %p143 = por %p141, %p142
      %p144 = scmp.ne.s32.totalorder %s136, %s138
      %p145 = scmp.eq.s32.totalorder %s25, 1
      %p146 = por %p144, %p145
      %p147 = scmp.ne.s32.totalorder %s138, %s139
      %p148 = scmp.eq.s32.totalorder %s25, 0
      %p149 = por %p147, %p148
      %p150 = scmp.ne.s32.totalorder %s138, %s139
      %p151 = scmp.eq.s32.totalorder %s26, 1
      %p152 = por %p150, %p151
      %p154 = scmp.ne.s32.totalorder %s139, %s153
      %p155 = scmp.eq.s32.totalorder %s26, 0
      %p156 = por %p154, %p155
      %s158 = sadd.s32 %s157, 1
      %p161 = scmp.eq.s32.totalorder %s20, 1
      %p162 = scmp.ne.s32.totalorder %s157, %s159
      %p163 = scmp.eq.s32.totalorder %s20, 0
      %p164 = por %p162, %p163
      %p165 = scmp.ne.s32.totalorder %s157, %s159
      %p166 = scmp.eq.s32.totalorder %s25, 1
      %p167 = por %p165, %p166
      %p168 = scmp.ne.s32.totalorder %s159, %s160
      %p169 = scmp.eq.s32.totalorder %s25, 0
      %p170 = por %p168, %p169
      %p171 = scmp.ne.s32.totalorder %s159, %s160
      %p172 = scmp.eq.s32.totalorder %s26, 1
      %p173 = por %p171, %p172
      %p175 = scmp.ne.s32.totalorder %s160, %s174
      %p176 = scmp.eq.s32.totalorder %s26, 0
      %p177 = por %p175, %p176
      %s178 = ssub.s32 %s27, %s39
      %s179 = ssub.s32 %s28, %s35
      %s180 = sor.u32 %s178, %s179
      %p181 = scmp.eq.s32.totalorder %s180, 0
      %s183 = sadd.s32 %s182, 1
      %s184 = scalar_select %p181, %s182, %s183
      %p187 = pneg %p181
      %p188 = scmp.eq.s32.totalorder %s20, 1
      %p189 = por %p187, %p188
      %p190 = scmp.ne.s32.totalorder %s182, %s185
      %p191 = scmp.eq.s32.totalorder %s20, 0
      %p192 = por %p190, %p191
      %p193 = scmp.ne.s32.totalorder %s182, %s185
      %p194 = scmp.eq.s32.totalorder %s25, 1
      %p195 = por %p193, %p194
      %p196 = scmp.ne.s32.totalorder %s185, %s186
      %p197 = scmp.eq.s32.totalorder %s25, 0
      %p198 = por %p196, %p197
      %p199 = scmp.ne.s32.totalorder %s185, %s186
      %p200 = scmp.eq.s32.totalorder %s26, 1
      %p201 = por %p199, %p200
      %p203 = scmp.ne.s32.totalorder %s186, %s202
      %p204 = scmp.eq.s32.totalorder %s26, 0
      %p205 = por %p203, %p204
      %p206 = scmp.le.s32.totalorder 1, %s20
      %p207 = scmp.lt.s32.totalorder %s20, 3
      %p208 = pnand %p206, %p207
      %p209 = pneg %p208
      // Predicated region
      $region9: #{tpu_custom_call.1} parent=5 // pred_check
        _
      $region10: #{tpu_custom_call.1} parent=5 // pred_check_branch
        %211 = sbr.rel (%p208) target = $region12
      $region11: #{tpu_custom_call.1} parent=5 // pred_region
        %s212 = ssub.s32 %s20, 1
        // Predicated region
        $region13: #{tpu_custom_call.1} parent=11 // pred_check
          %p213 = pneg %p58
        $region14: #{tpu_custom_call.1} parent=11 // pred_check_branch
          %215 = sbr.rel (%p213) target = $region16
        $region15: #{tpu_custom_call.1} parent=11 // pred_region
          %217 = vsyncadd [#allocation3], 0
          %s218 = smul.addr %s29, 2
          %s219 = scalar_lea.hbm %s0, %s218
          %s221 = sshll.u32 %s219, 4
          %s222 = int_to_ptr.hbm [resolvable:$true] %s221
          %s223 = sshll.u32 [#allocation2], 4
          %s224 = int_to_ptr.vmem [resolvable:$true] %s223
          %226 = dma.hbm_to_vmem [thread:$0]  %s222, 32, %s224, [#allocation3]
        $region16: #{tpu_custom_call.1} parent=11 // pred_fallthru
          _
        // Predicated region
        $region17: #{tpu_custom_call.1} parent=11 // pred_check
          %p227 = pneg %p107
        $region18: #{tpu_custom_call.1} parent=11 // pred_check_branch
          %229 = sbr.rel (%p227) target = $region20
        $region19: #{tpu_custom_call.1} parent=11 // pred_region
          %231 = vsyncadd [#allocation6], 0
          %s232 = sshll.u32 %s2, 4
          %s233 = int_to_ptr.hbm [resolvable:$true] %s232
          %s234 = sshll.u32 [#allocation7], 4
          %s235 = int_to_ptr.vmem [resolvable:$true] %s234
          %240 = dma.hbm_to_vmem [thread:$0]  %s233, 32768, %s235, [#allocation6], 1024, 1024, 64
        $region20: #{tpu_custom_call.1} parent=11 // pred_fallthru
          _
        // Predicated region
        $region21: #{tpu_custom_call.1} parent=11 // pred_check
          %p241 = pneg %p128
        $region22: #{tpu_custom_call.1} parent=11 // pred_check_branch
          %243 = sbr.rel (%p241) target = $region24
        $region23: #{tpu_custom_call.1} parent=11 // pred_region
          %245 = vsyncadd [#allocation9], 0
          %s247 = sshll.u32 %s3, 4
          %s248 = int_to_ptr.hbm [resolvable:$true] %s247
          %s249 = sshll.u32 [#allocation8], 4
          %s250 = int_to_ptr.vmem [resolvable:$true] %s249
          %252 = dma.hbm_to_vmem [thread:$0]  %s248, 128, %s250, [#allocation9]
        $region24: #{tpu_custom_call.1} parent=11 // pred_fallthru
          _
        // Predicated region
        $region25: #{tpu_custom_call.1} parent=11 // pred_check
          %p253 = pneg %p149
        $region26: #{tpu_custom_call.1} parent=11 // pred_check_branch
          %255 = sbr.rel (%p253) target = $region28
        $region27: #{tpu_custom_call.1} parent=11 // pred_region
          %257 = vsyncadd [#allocation9], 0
          %s258 = sshll.u32 %s4, 4
          %s259 = int_to_ptr.hbm [resolvable:$true] %s258
          %s260 = sshll.u32 [#allocation10], 4
          %s261 = int_to_ptr.vmem [resolvable:$true] %s260
          %266 = dma.hbm_to_vmem [thread:$0]  %s259, 16384, %s261, [#allocation9], 256, 256, 16
        $region28: #{tpu_custom_call.1} parent=11 // pred_fallthru
          _
        // Predicated region
        $region29: #{tpu_custom_call.1} parent=11 // pred_check
          %p267 = pneg %p170
        $region30: #{tpu_custom_call.1} parent=11 // pred_check_branch
          %269 = sbr.rel (%p267) target = $region32
        $region31: #{tpu_custom_call.1} parent=11 // pred_region
          _
        $region32: #{tpu_custom_call.1} parent=11 // pred_fallthru
          _
      $region12: #{tpu_custom_call.1} parent=5 // pred_fallthru
        _
      %p270 = scmp.lt.s32.totalorder %s20, 2
      // Predicated region
      $region33: #{tpu_custom_call.1} parent=5 // pred_check
        %p271 = pneg %p270
      $region34: #{tpu_custom_call.1} parent=5 // pred_check_branch
        %273 = sbr.rel (%p271) target = $region36
      $region35: #{tpu_custom_call.1} parent=5 // pred_region
        // Predicated region
        $region37: #{tpu_custom_call.1} parent=35 // pred_check
          %p274 = pneg %p80
        $region38: #{tpu_custom_call.1} parent=35 // pred_check_branch
          %276 = sbr.rel (%p274) target = $region40
        $region39: #{tpu_custom_call.1} parent=35 // pred_region
          %s277 = sand.u32 %s20, 1
          %s278 = scalar_lea.sflag [#allocation6], %s277
          %s279 = sand.u32 %s70, 1
          %s280 = smul.addr %s279, 64
          %s281 = scalar_lea.vmem [#allocation5], %s280
          %s282 = smul.u32 4, %s28
          %284 = vsyncadd %s278, 0
          %s285 = smul.addr %s282, 2
          %s286 = smul.addr %s27, 16
          %s287 = sadd.s32 %s285, %s286
          %s288 = smul.addr %s287, 8
          %s289 = scalar_lea.hbm %s1, %s288
          %s290 = sshll.u32 %s289, 4
          %s291 = int_to_ptr.hbm [resolvable:$true] %s290
          %s292 = sshll.u32 %s281, 4
          %s293 = int_to_ptr.vmem [resolvable:$true] %s292
          %298 = dma.hbm_to_vmem [thread:$0]  %s291, 1024, %s293, %s278, 256, 256, 16
        $region40: #{tpu_custom_call.1} parent=35 // pred_fallthru
          _
      $region36: #{tpu_custom_call.1} parent=5 // pred_fallthru
        _
      %p299 = scmp.le.s32.totalorder 1, %s20
      %p300 = scmp.lt.s32.totalorder %s20, 3
      %p301 = pnand %p299, %p300
      %p302 = pneg %p301
      // Predicated region
      $region41: #{tpu_custom_call.1} parent=5 // pred_check
        _
      $region42: #{tpu_custom_call.1} parent=5 // pred_check_branch
        %304 = sbr.rel (%p301) target = $region44
      $region43: #{tpu_custom_call.1} parent=5 // pred_region
        %s305 = ssub.s32 %s20, 1
        // Predicated region
        $region45: #{tpu_custom_call.1} parent=43 // pred_check
          %p306 = pneg %p58
        $region46: #{tpu_custom_call.1} parent=43 // pred_check_branch
          %308 = sbr.rel (%p306) target = $region48
        $region47: #{tpu_custom_call.1} parent=43 // pred_region
          %310 = dma.done [#allocation3], 32
        $region48: #{tpu_custom_call.1} parent=43 // pred_fallthru
          _
        %s311 = sand.u32 %s25, 1
        %s312 = scalar_lea.sflag [#allocation6], %s311
        %s313 = sand.u32 %s73, 1
        %s314 = smul.addr %s313, 64
        %s315 = scalar_lea.vmem [#allocation5], %s314
        // Predicated region
        $region49: #{tpu_custom_call.1} parent=43 // pred_check
          %p316 = pneg %p86
        $region50: #{tpu_custom_call.1} parent=43 // pred_check_branch
          %318 = sbr.rel (%p316) target = $region52
        $region51: #{tpu_custom_call.1} parent=43 // pred_region
          %320 = dma.done %s312, 1024
        $region52: #{tpu_custom_call.1} parent=43 // pred_fallthru
          _
        // Predicated region
        $region53: #{tpu_custom_call.1} parent=43 // pred_check
          %p321 = pneg %p107
        $region54: #{tpu_custom_call.1} parent=43 // pred_check_branch
          %323 = sbr.rel (%p321) target = $region56
        $region55: #{tpu_custom_call.1} parent=43 // pred_region
          %325 = dma.done [#allocation6], 32768
        $region56: #{tpu_custom_call.1} parent=43 // pred_fallthru
          _
        // Predicated region
        $region57: #{tpu_custom_call.1} parent=43 // pred_check
          %p326 = pneg %p128
        $region58: #{tpu_custom_call.1} parent=43 // pred_check_branch
          %328 = sbr.rel (%p326) target = $region60
        $region59: #{tpu_custom_call.1} parent=43 // pred_region
          %330 = dma.done [#allocation9], 128
        $region60: #{tpu_custom_call.1} parent=43 // pred_fallthru
          _
        // Predicated region
        $region61: #{tpu_custom_call.1} parent=43 // pred_check
          %p331 = pneg %p149
        $region62: #{tpu_custom_call.1} parent=43 // pred_check_branch
          %333 = sbr.rel (%p331) target = $region64
        $region63: #{tpu_custom_call.1} parent=43 // pred_region
          %335 = dma.done [#allocation9], 16384
        $region64: #{tpu_custom_call.1} parent=43 // pred_fallthru
          _
        %p336 = pneg %p58
        %p337 = pneg %p55
        %s338 = sand.u32 %s25, 1
        %s339 = scalar_lea.sflag [#allocation6], %s338
        %s340 = sand.u32 %s73, 1
        %s341 = smul.addr %s340, 64
        %s342 = scalar_lea.vmem [#allocation5], %s341
        %p343 = pneg %p86
        %p344 = pneg %p83
        %p345 = pneg %p107
        %p346 = pneg %p104
        %p347 = pneg %p128
        %p348 = pneg %p125
        %p349 = pneg %p149
        %p350 = pneg %p146
        %p351 = pneg %p170
        %p352 = pneg %p167
        %p353 = pneg %p198
        %p354 = pneg %p195
        %s355 = sand.u32 %s185, 1
        %s356 = scalar_lea.sflag [#allocation4], %s355
        %s357 = sand.u32 %s185, 1
        %s358 = smul.addr %s357, 64
        %s359 = scalar_lea.vmem [#allocation11], %s358
        %s360 = smul.u32 4, %s30
        %s361 = smul.u32 4, %s30
        %v362 = vld [vmem:[#allocation2] sm:$0x3]
        %v363 = vld [vmem:[#allocation7] sm:$0xff]
        %v364 = vld [vmem:[#allocation7 + $0x8] sm:$0xff]
        %v365 = vld [vmem:[#allocation7 + $0x10] sm:$0xff]
        %v366 = vld [vmem:[#allocation7 + $0x18] sm:$0xff]
        %v367 = vld [vmem:[#allocation7 + $0x20] sm:$0xff]
        %v368 = vld [vmem:[#allocation7 + $0x28] sm:$0xff]
        %v369 = vld [vmem:[#allocation7 + $0x30] sm:$0xff]
        %v370 = vld [vmem:[#allocation7 + $0x38] sm:$0xff]
        %v371 = vld [vmem:[#allocation7 + $0x40] sm:$0xff]
        %v372 = vld [vmem:[#allocation7 + $0x48] sm:$0xff]
        %v373 = vld [vmem:[#allocation7 + $0x50] sm:$0xff]
        %v374 = vld [vmem:[#allocation7 + $0x58] sm:$0xff]
        %v375 = vld [vmem:[#allocation7 + $0x60] sm:$0xff]
        %v376 = vld [vmem:[#allocation7 + $0x68] sm:$0xff]
        %v377 = vld [vmem:[#allocation7 + $0x70] sm:$0xff]
        %v378 = vld [vmem:[#allocation7 + $0x78] sm:$0xff]
        %v379 = vld [vmem:[#allocation7 + $0x80] sm:$0xff]
        %v380 = vld [vmem:[#allocation7 + $0x88] sm:$0xff]
        %v381 = vld [vmem:[#allocation7 + $0x90] sm:$0xff]
        %v382 = vld [vmem:[#allocation7 + $0x98] sm:$0xff]
        %v383 = vld [vmem:[#allocation7 + $0xa0] sm:$0xff]
        %v384 = vld [vmem:[#allocation7 + $0xa8] sm:$0xff]
        %v385 = vld [vmem:[#allocation7 + $0xb0] sm:$0xff]
        %v386 = vld [vmem:[#allocation7 + $0xb8] sm:$0xff]
        %v387 = vld [vmem:[#allocation7 + $0xc0] sm:$0xff]
        %v388 = vld [vmem:[#allocation7 + $0xc8] sm:$0xff]
        %v389 = vld [vmem:[#allocation7 + $0xd0] sm:$0xff]
        %v390 = vld [vmem:[#allocation7 + $0xd8] sm:$0xff]
        %v391 = vld [vmem:[#allocation7 + $0xe0] sm:$0xff]
        %v392 = vld [vmem:[#allocation7 + $0xe8] sm:$0xff]
        %v393 = vld [vmem:[#allocation7 + $0xf0] sm:$0xff]
        %v394 = vld [vmem:[#allocation7 + $0xf8] sm:$0xff]
        %v395 = vld [vmem:[#allocation7 + $0x100] sm:$0xff]
        %v396 = vld [vmem:[#allocation7 + $0x108] sm:$0xff]
        %v397 = vld [vmem:[#allocation7 + $0x110] sm:$0xff]
        %v398 = vld [vmem:[#allocation7 + $0x118] sm:$0xff]
        %v399 = vld [vmem:[#allocation7 + $0x120] sm:$0xff]
        %v400 = vld [vmem:[#allocation7 + $0x128] sm:$0xff]
        %v401 = vld [vmem:[#allocation7 + $0x130] sm:$0xff]
        %v402 = vld [vmem:[#allocation7 + $0x138] sm:$0xff]
        %v403 = vld [vmem:[#allocation7 + $0x140] sm:$0xff]
        %v404 = vld [vmem:[#allocation7 + $0x148] sm:$0xff]
        %v405 = vld [vmem:[#allocation7 + $0x150] sm:$0xff]
        %v406 = vld [vmem:[#allocation7 + $0x158] sm:$0xff]
        %v407 = vld [vmem:[#allocation7 + $0x160] sm:$0xff]
        %v408 = vld [vmem:[#allocation7 + $0x168] sm:$0xff]
        %v409 = vld [vmem:[#allocation7 + $0x170] sm:$0xff]
        %v410 = vld [vmem:[#allocation7 + $0x178] sm:$0xff]
        %v411 = vld [vmem:[#allocation7 + $0x180] sm:$0xff]
        %v412 = vld [vmem:[#allocation7 + $0x188] sm:$0xff]
        %v413 = vld [vmem:[#allocation7 + $0x190] sm:$0xff]
        %v414 = vld [vmem:[#allocation7 + $0x198] sm:$0xff]
        %v415 = vld [vmem:[#allocation7 + $0x1a0] sm:$0xff]
        %v416 = vld [vmem:[#allocation7 + $0x1a8] sm:$0xff]
        %v417 = vld [vmem:[#allocation7 + $0x1b0] sm:$0xff]
        %v418 = vld [vmem:[#allocation7 + $0x1b8] sm:$0xff]
        %v419 = vld [vmem:[#allocation7 + $0x1c0] sm:$0xff]
        %v420 = vld [vmem:[#allocation7 + $0x1c8] sm:$0xff]
        %v421 = vld [vmem:[#allocation7 + $0x1d0] sm:$0xff]
        %v422 = vld [vmem:[#allocation7 + $0x1d8] sm:$0xff]
        %v423 = vld [vmem:[#allocation7 + $0x1e0] sm:$0xff]
        %v424 = vld [vmem:[#allocation7 + $0x1e8] sm:$0xff]
        %v425 = vld [vmem:[#allocation7 + $0x1f0] sm:$0xff]
        %v426 = vld [vmem:[#allocation7 + $0x1f8] sm:$0xff]
        %v427 = vld [vmem:[#allocation7 + $0x200] sm:$0xff]
        %v428 = vld [vmem:[#allocation7 + $0x208] sm:$0xff]
        %v429 = vld [vmem:[#allocation7 + $0x210] sm:$0xff]
        %v430 = vld [vmem:[#allocation7 + $0x218] sm:$0xff]
        %v431 = vld [vmem:[#allocation7 + $0x220] sm:$0xff]
        %v432 = vld [vmem:[#allocation7 + $0x228] sm:$0xff]
        %v433 = vld [vmem:[#allocation7 + $0x230] sm:$0xff]
        %v434 = vld [vmem:[#allocation7 + $0x238] sm:$0xff]
        %v435 = vld [vmem:[#allocation7 + $0x240] sm:$0xff]
        %v436 = vld [vmem:[#allocation7 + $0x248] sm:$0xff]
        %v437 = vld [vmem:[#allocation7 + $0x250] sm:$0xff]
        %v438 = vld [vmem:[#allocation7 + $0x258] sm:$0xff]
        %v439 = vld [vmem:[#allocation7 + $0x260] sm:$0xff]
        %v440 = vld [vmem:[#allocation7 + $0x268] sm:$0xff]
        %v441 = vld [vmem:[#allocation7 + $0x270] sm:$0xff]
        %v442 = vld [vmem:[#allocation7 + $0x278] sm:$0xff]
        %v443 = vld [vmem:[#allocation7 + $0x280] sm:$0xff]
        %v444 = vld [vmem:[#allocation7 + $0x288] sm:$0xff]
        %v445 = vld [vmem:[#allocation7 + $0x290] sm:$0xff]
        %v446 = vld [vmem:[#allocation7 + $0x298] sm:$0xff]
        %v447 = vld [vmem:[#allocation7 + $0x2a0] sm:$0xff]
        %v448 = vld [vmem:[#allocation7 + $0x2a8] sm:$0xff]
        %v449 = vld [vmem:[#allocation7 + $0x2b0] sm:$0xff]
        %v450 = vld [vmem:[#allocation7 + $0x2b8] sm:$0xff]
        %v451 = vld [vmem:[#allocation7 + $0x2c0] sm:$0xff]
        %v452 = vld [vmem:[#allocation7 + $0x2c8] sm:$0xff]
        %v453 = vld [vmem:[#allocation7 + $0x2d0] sm:$0xff]
        %v454 = vld [vmem:[#allocation7 + $0x2d8] sm:$0xff]
        %v455 = vld [vmem:[#allocation7 + $0x2e0] sm:$0xff]
        %v456 = vld [vmem:[#allocation7 + $0x2e8] sm:$0xff]
        %v457 = vld [vmem:[#allocation7 + $0x2f0] sm:$0xff]
        %v458 = vld [vmem:[#allocation7 + $0x2f8] sm:$0xff]
        %v459 = vld [vmem:[#allocation7 + $0x300] sm:$0xff]
        %v460 = vld [vmem:[#allocation7 + $0x308] sm:$0xff]
        %v461 = vld [vmem:[#allocation7 + $0x310] sm:$0xff]
        %v462 = vld [vmem:[#allocation7 + $0x318] sm:$0xff]
        %v463 = vld [vmem:[#allocation7 + $0x320] sm:$0xff]
        %v464 = vld [vmem:[#allocation7 + $0x328] sm:$0xff]
        %v465 = vld [vmem:[#allocation7 + $0x330] sm:$0xff]
        %v466 = vld [vmem:[#allocation7 + $0x338] sm:$0xff]
        %v467 = vld [vmem:[#allocation7 + $0x340] sm:$0xff]
        %v468 = vld [vmem:[#allocation7 + $0x348] sm:$0xff]
        %v469 = vld [vmem:[#allocation7 + $0x350] sm:$0xff]
        %v470 = vld [vmem:[#allocation7 + $0x358] sm:$0xff]
        %v471 = vld [vmem:[#allocation7 + $0x360] sm:$0xff]
        %v472 = vld [vmem:[#allocation7 + $0x368] sm:$0xff]
        %v473 = vld [vmem:[#allocation7 + $0x370] sm:$0xff]
        %v474 = vld [vmem:[#allocation7 + $0x378] sm:$0xff]
        %v475 = vld [vmem:[#allocation7 + $0x380] sm:$0xff]
        %v476 = vld [vmem:[#allocation7 + $0x388] sm:$0xff]
        %v477 = vld [vmem:[#allocation7 + $0x390] sm:$0xff]
        %v478 = vld [vmem:[#allocation7 + $0x398] sm:$0xff]
        %v479 = vld [vmem:[#allocation7 + $0x3a0] sm:$0xff]
        %v480 = vld [vmem:[#allocation7 + $0x3a8] sm:$0xff]
        %v481 = vld [vmem:[#allocation7 + $0x3b0] sm:$0xff]
        %v482 = vld [vmem:[#allocation7 + $0x3b8] sm:$0xff]
        %v483 = vld [vmem:[#allocation7 + $0x3c0] sm:$0xff]
        %v484 = vld [vmem:[#allocation7 + $0x3c8] sm:$0xff]
        %v485 = vld [vmem:[#allocation7 + $0x3d0] sm:$0xff]
        %v486 = vld [vmem:[#allocation7 + $0x3d8] sm:$0xff]
        %v487 = vld [vmem:[#allocation7 + $0x3e0] sm:$0xff]
        %v488 = vld [vmem:[#allocation7 + $0x3e8] sm:$0xff]
        %v489 = vld [vmem:[#allocation7 + $0x3f0] sm:$0xff]
        %v490 = vld [vmem:[#allocation7 + $0x3f8] sm:$0xff]
        %v491 = vld [vmem:[#allocation7 + $0x400] sm:$0xff]
        %v492 = vld [vmem:[#allocation7 + $0x408] sm:$0xff]
        %v493 = vld [vmem:[#allocation7 + $0x410] sm:$0xff]
        %v494 = vld [vmem:[#allocation7 + $0x418] sm:$0xff]
        %v495 = vld [vmem:[#allocation7 + $0x420] sm:$0xff]
        %v496 = vld [vmem:[#allocation7 + $0x428] sm:$0xff]
        %v497 = vld [vmem:[#allocation7 + $0x430] sm:$0xff]
        %v498 = vld [vmem:[#allocation7 + $0x438] sm:$0xff]
        %v499 = vld [vmem:[#allocation7 + $0x440] sm:$0xff]
        %v500 = vld [vmem:[#allocation7 + $0x448] sm:$0xff]
        %v501 = vld [vmem:[#allocation7 + $0x450] sm:$0xff]
        %v502 = vld [vmem:[#allocation7 + $0x458] sm:$0xff]
        %v503 = vld [vmem:[#allocation7 + $0x460] sm:$0xff]
        %v504 = vld [vmem:[#allocation7 + $0x468] sm:$0xff]
        %v505 = vld [vmem:[#allocation7 + $0x470] sm:$0xff]
        %v506 = vld [vmem:[#allocation7 + $0x478] sm:$0xff]
        %v507 = vld [vmem:[#allocation7 + $0x480] sm:$0xff]
        %v508 = vld [vmem:[#allocation7 + $0x488] sm:$0xff]
        %v509 = vld [vmem:[#allocation7 + $0x490] sm:$0xff]
        %v510 = vld [vmem:[#allocation7 + $0x498] sm:$0xff]
        %v511 = vld [vmem:[#allocation7 + $0x4a0] sm:$0xff]
        %v512 = vld [vmem:[#allocation7 + $0x4a8] sm:$0xff]
        %v513 = vld [vmem:[#allocation7 + $0x4b0] sm:$0xff]
        %v514 = vld [vmem:[#allocation7 + $0x4b8] sm:$0xff]
        %v515 = vld [vmem:[#allocation7 + $0x4c0] sm:$0xff]
        %v516 = vld [vmem:[#allocation7 + $0x4c8] sm:$0xff]
        %v517 = vld [vmem:[#allocation7 + $0x4d0] sm:$0xff]
        %v518 = vld [vmem:[#allocation7 + $0x4d8] sm:$0xff]
        %v519 = vld [vmem:[#allocation7 + $0x4e0] sm:$0xff]
        %v520 = vld [vmem:[#allocation7 + $0x4e8] sm:$0xff]
        %v521 = vld [vmem:[#allocation7 + $0x4f0] sm:$0xff]
        %v522 = vld [vmem:[#allocation7 + $0x4f8] sm:$0xff]
        %v523 = vld [vmem:[#allocation7 + $0x500] sm:$0xff]
        %v524 = vld [vmem:[#allocation7 + $0x508] sm:$0xff]
        %v525 = vld [vmem:[#allocation7 + $0x510] sm:$0xff]
        %v526 = vld [vmem:[#allocation7 + $0x518] sm:$0xff]
        %v527 = vld [vmem:[#allocation7 + $0x520] sm:$0xff]
        %v528 = vld [vmem:[#allocation7 + $0x528] sm:$0xff]
        %v529 = vld [vmem:[#allocation7 + $0x530] sm:$0xff]
        %v530 = vld [vmem:[#allocation7 + $0x538] sm:$0xff]
        %v531 = vld [vmem:[#allocation7 + $0x540] sm:$0xff]
        %v532 = vld [vmem:[#allocation7 + $0x548] sm:$0xff]
        %v533 = vld [vmem:[#allocation7 + $0x550] sm:$0xff]
        %v534 = vld [vmem:[#allocation7 + $0x558] sm:$0xff]
        %v535 = vld [vmem:[#allocation7 + $0x560] sm:$0xff]
        %v536 = vld [vmem:[#allocation7 + $0x568] sm:$0xff]
        %v537 = vld [vmem:[#allocation7 + $0x570] sm:$0xff]
        %v538 = vld [vmem:[#allocation7 + $0x578] sm:$0xff]
        %v539 = vld [vmem:[#allocation7 + $0x580] sm:$0xff]
        %v540 = vld [vmem:[#allocation7 + $0x588] sm:$0xff]
        %v541 = vld [vmem:[#allocation7 + $0x590] sm:$0xff]
        %v542 = vld [vmem:[#allocation7 + $0x598] sm:$0xff]
        %v543 = vld [vmem:[#allocation7 + $0x5a0] sm:$0xff]
        %v544 = vld [vmem:[#allocation7 + $0x5a8] sm:$0xff]
        %v545 = vld [vmem:[#allocation7 + $0x5b0] sm:$0xff]
        %v546 = vld [vmem:[#allocation7 + $0x5b8] sm:$0xff]
        %v547 = vld [vmem:[#allocation7 + $0x5c0] sm:$0xff]
        %v548 = vld [vmem:[#allocation7 + $0x5c8] sm:$0xff]
        %v549 = vld [vmem:[#allocation7 + $0x5d0] sm:$0xff]
        %v550 = vld [vmem:[#allocation7 + $0x5d8] sm:$0xff]
        %v551 = vld [vmem:[#allocation7 + $0x5e0] sm:$0xff]
        %v552 = vld [vmem:[#allocation7 + $0x5e8] sm:$0xff]
        %v553 = vld [vmem:[#allocation7 + $0x5f0] sm:$0xff]
        %v554 = vld [vmem:[#allocation7 + $0x5f8] sm:$0xff]
        %v555 = vld [vmem:[#allocation7 + $0x600] sm:$0xff]
        %v556 = vld [vmem:[#allocation7 + $0x608] sm:$0xff]
        %v557 = vld [vmem:[#allocation7 + $0x610] sm:$0xff]
        %v558 = vld [vmem:[#allocation7 + $0x618] sm:$0xff]
        %v559 = vld [vmem:[#allocation7 + $0x620] sm:$0xff]
        %v560 = vld [vmem:[#allocation7 + $0x628] sm:$0xff]
        %v561 = vld [vmem:[#allocation7 + $0x630] sm:$0xff]
        %v562 = vld [vmem:[#allocation7 + $0x638] sm:$0xff]
        %v563 = vld [vmem:[#allocation7 + $0x640] sm:$0xff]
        %v564 = vld [vmem:[#allocation7 + $0x648] sm:$0xff]
        %v565 = vld [vmem:[#allocation7 + $0x650] sm:$0xff]
        %v566 = vld [vmem:[#allocation7 + $0x658] sm:$0xff]
        %v567 = vld [vmem:[#allocation7 + $0x660] sm:$0xff]
        %v568 = vld [vmem:[#allocation7 + $0x668] sm:$0xff]
        %v569 = vld [vmem:[#allocation7 + $0x670] sm:$0xff]
        %v570 = vld [vmem:[#allocation7 + $0x678] sm:$0xff]
        %v571 = vld [vmem:[#allocation7 + $0x680] sm:$0xff]
        %v572 = vld [vmem:[#allocation7 + $0x688] sm:$0xff]
        %v573 = vld [vmem:[#allocation7 + $0x690] sm:$0xff]
        %v574 = vld [vmem:[#allocation7 + $0x698] sm:$0xff]
        %v575 = vld [vmem:[#allocation7 + $0x6a0] sm:$0xff]
        %v576 = vld [vmem:[#allocation7 + $0x6a8] sm:$0xff]
        %v577 = vld [vmem:[#allocation7 + $0x6b0] sm:$0xff]
        %v578 = vld [vmem:[#allocation7 + $0x6b8] sm:$0xff]
        %v579 = vld [vmem:[#allocation7 + $0x6c0] sm:$0xff]
        %v580 = vld [vmem:[#allocation7 + $0x6c8] sm:$0xff]
        %v581 = vld [vmem:[#allocation7 + $0x6d0] sm:$0xff]
        %v582 = vld [vmem:[#allocation7 + $0x6d8] sm:$0xff]
        %v583 = vld [vmem:[#allocation7 + $0x6e0] sm:$0xff]
        %v584 = vld [vmem:[#allocation7 + $0x6e8] sm:$0xff]
        %v585 = vld [vmem:[#allocation7 + $0x6f0] sm:$0xff]
        %v586 = vld [vmem:[#allocation7 + $0x6f8] sm:$0xff]
        %v587 = vld [vmem:[#allocation7 + $0x700] sm:$0xff]
        %v588 = vld [vmem:[#allocation7 + $0x708] sm:$0xff]
        %v589 = vld [vmem:[#allocation7 + $0x710] sm:$0xff]
        %v590 = vld [vmem:[#allocation7 + $0x718] sm:$0xff]
        %v591 = vld [vmem:[#allocation7 + $0x720] sm:$0xff]
        %v592 = vld [vmem:[#allocation7 + $0x728] sm:$0xff]
        %v593 = vld [vmem:[#allocation7 + $0x730] sm:$0xff]
        %v594 = vld [vmem:[#allocation7 + $0x738] sm:$0xff]
        %v595 = vld [vmem:[#allocation7 + $0x740] sm:$0xff]
        %v596 = vld [vmem:[#allocation7 + $0x748] sm:$0xff]
        %v597 = vld [vmem:[#allocation7 + $0x750] sm:$0xff]
        %v598 = vld [vmem:[#allocation7 + $0x758] sm:$0xff]
        %v599 = vld [vmem:[#allocation7 + $0x760] sm:$0xff]
        %v600 = vld [vmem:[#allocation7 + $0x768] sm:$0xff]
        %v601 = vld [vmem:[#allocation7 + $0x770] sm:$0xff]
        %v602 = vld [vmem:[#allocation7 + $0x778] sm:$0xff]
        %v603 = vld [vmem:[#allocation7 + $0x780] sm:$0xff]
        %v604 = vld [vmem:[#allocation7 + $0x788] sm:$0xff]
        %v605 = vld [vmem:[#allocation7 + $0x790] sm:$0xff]
        %v606 = vld [vmem:[#allocation7 + $0x798] sm:$0xff]
        %v607 = vld [vmem:[#allocation7 + $0x7a0] sm:$0xff]
        %v608 = vld [vmem:[#allocation7 + $0x7a8] sm:$0xff]
        %v609 = vld [vmem:[#allocation7 + $0x7b0] sm:$0xff]
        %v610 = vld [vmem:[#allocation7 + $0x7b8] sm:$0xff]
        %v611 = vld [vmem:[#allocation7 + $0x7c0] sm:$0xff]
        %v612 = vld [vmem:[#allocation7 + $0x7c8] sm:$0xff]
        %v613 = vld [vmem:[#allocation7 + $0x7d0] sm:$0xff]
        %v614 = vld [vmem:[#allocation7 + $0x7d8] sm:$0xff]
        %v615 = vld [vmem:[#allocation7 + $0x7e0] sm:$0xff]
        %v616 = vld [vmem:[#allocation7 + $0x7e8] sm:$0xff]
        %v617 = vld [vmem:[#allocation7 + $0x7f0] sm:$0xff]
        %v618 = vld [vmem:[#allocation7 + $0x7f8] sm:$0xff]
        %v619 = vld [vmem:[#allocation8] sm:$0xff]
        %v621 = vperm.slane %v362, 0
        %v622 = vperm.slane %v362, 1
        %v626 = vperm.slane %v619, 0
        %v627 = vperm.slane %v619, 1
        %v628 = vperm.slane %v619, 2
        %v629 = vperm.slane %v619, 3
        %v630 = vperm.slane %v619, 4
        %v631 = vperm.slane %v619, 5
        %v632 = vperm.slane %v619, 6
        %v633 = vperm.slane %v619, 7
        %642 = vmatpush.msra.mxu0 %v483
        %643 = vmatpush.msra.mxu0 %v475
        %644 = vmatpush.msra.mxu0 %v467
        %645 = vmatpush.msra.mxu0 %v459
        %646 = vmatpush.msra.mxu0 %v451
        %647 = vmatpush.msra.mxu0 %v443
        %648 = vmatpush.msra.mxu0 %v435
        %649 = vmatpush.msra.mxu0 %v427
        %650 = vmatpush.msra.mxu0 %v419
        %651 = vmatpush.msra.mxu0 %v411
        %652 = vmatpush.msra.mxu0 %v403
        %653 = vmatpush.msra.mxu0 %v395
        %654 = vmatpush.msra.mxu0 %v387
        %655 = vmatpush.msra.mxu0 %v379
        %656 = vmatpush.msra.mxu0 %v371
        %657 = vmatpush.msra.mxu0 %v363
        %658 = vmatmul.f32.gmra.mxu0 %v621
        %v659 = vpop.f32.mrf.mxu0
        %v660 = vadd.f32 %v626, %v659
        %661 = vdwg.mxu0
        %662 = vmatpush.msra.mxu0 %v611
        %663 = vmatpush.msra.mxu0 %v603
        %664 = vmatpush.msra.mxu0 %v595
        %665 = vmatpush.msra.mxu0 %v587
        %666 = vmatpush.msra.mxu0 %v579
        %667 = vmatpush.msra.mxu0 %v571
        %668 = vmatpush.msra.mxu0 %v563
        %669 = vmatpush.msra.mxu0 %v555
        %670 = vmatpush.msra.mxu0 %v547
        %671 = vmatpush.msra.mxu0 %v539
        %672 = vmatpush.msra.mxu0 %v531
        %673 = vmatpush.msra.mxu0 %v523
        %674 = vmatpush.msra.mxu0 %v515
        %675 = vmatpush.msra.mxu0 %v507
        %676 = vmatpush.msra.mxu0 %v499
        %677 = vmatpush.msra.mxu0 %v491
        %678 = vmatmul.f32.gmra.mxu0 %v622
        %v679 = vpop.f32.mrf.mxu0
        %v680 = vadd.f32 %v660, %v679
        %681 = vdwg.mxu0
        %682 = vmatpush.msra.mxu0 %v484
        %683 = vmatpush.msra.mxu0 %v476
        %684 = vmatpush.msra.mxu0 %v468
        %685 = vmatpush.msra.mxu0 %v460
        %686 = vmatpush.msra.mxu0 %v452
        %687 = vmatpush.msra.mxu0 %v444
        %688 = vmatpush.msra.mxu0 %v436
        %689 = vmatpush.msra.mxu0 %v428
        %690 = vmatpush.msra.mxu0 %v420
        %691 = vmatpush.msra.mxu0 %v412
        %692 = vmatpush.msra.mxu0 %v404
        %693 = vmatpush.msra.mxu0 %v396
        %694 = vmatpush.msra.mxu0 %v388
        %695 = vmatpush.msra.mxu0 %v380
        %696 = vmatpush.msra.mxu0 %v372
        %697 = vmatpush.msra.mxu0 %v364
        %698 = vmatmul.f32.gmra.mxu0 %v621
        %v699 = vpop.f32.mrf.mxu0
        %v700 = vadd.f32 %v627, %v699
        %701 = vdwg.mxu0
        %702 = vmatpush.msra.mxu0 %v612
        %703 = vmatpush.msra.mxu0 %v604
        %704 = vmatpush.msra.mxu0 %v596
        %705 = vmatpush.msra.mxu0 %v588
        %706 = vmatpush.msra.mxu0 %v580
        %707 = vmatpush.msra.mxu0 %v572
        %708 = vmatpush.msra.mxu0 %v564
        %709 = vmatpush.msra.mxu0 %v556
        %710 = vmatpush.msra.mxu0 %v548
        %711 = vmatpush.msra.mxu0 %v540
        %712 = vmatpush.msra.mxu0 %v532
        %713 = vmatpush.msra.mxu0 %v524
        %714 = vmatpush.msra.mxu0 %v516
        %715 = vmatpush.msra.mxu0 %v508
        %716 = vmatpush.msra.mxu0 %v500
        %717 = vmatpush.msra.mxu0 %v492
        %718 = vmatmul.f32.gmra.mxu0 %v622
        %v719 = vpop.f32.mrf.mxu0
        %v720 = vadd.f32 %v700, %v719
        %721 = vdwg.mxu0
        %722 = vmatpush.msra.mxu0 %v485
        %723 = vmatpush.msra.mxu0 %v477
        %724 = vmatpush.msra.mxu0 %v469
        %725 = vmatpush.msra.mxu0 %v461
        %726 = vmatpush.msra.mxu0 %v453
        %727 = vmatpush.msra.mxu0 %v445
        %728 = vmatpush.msra.mxu0 %v437
        %729 = vmatpush.msra.mxu0 %v429
        %730 = vmatpush.msra.mxu0 %v421
        %731 = vmatpush.msra.mxu0 %v413
        %732 = vmatpush.msra.mxu0 %v405
        %733 = vmatpush.msra.mxu0 %v397
        %734 = vmatpush.msra.mxu0 %v389
        %735 = vmatpush.msra.mxu0 %v381
        %736 = vmatpush.msra.mxu0 %v373
        %737 = vmatpush.msra.mxu0 %v365
        %738 = vmatmul.f32.gmra.mxu0 %v621
        %v739 = vpop.f32.mrf.mxu0
        %v740 = vadd.f32 %v628, %v739
        %741 = vdwg.mxu0
        %742 = vmatpush.msra.mxu0 %v613
        %743 = vmatpush.msra.mxu0 %v605
        %744 = vmatpush.msra.mxu0 %v597
        %745 = vmatpush.msra.mxu0 %v589
        %746 = vmatpush.msra.mxu0 %v581
        %747 = vmatpush.msra.mxu0 %v573
        %748 = vmatpush.msra.mxu0 %v565
        %749 = vmatpush.msra.mxu0 %v557
        %750 = vmatpush.msra.mxu0 %v549
        %751 = vmatpush.msra.mxu0 %v541
        %752 = vmatpush.msra.mxu0 %v533
        %753 = vmatpush.msra.mxu0 %v525
        %754 = vmatpush.msra.mxu0 %v517
        %755 = vmatpush.msra.mxu0 %v509
        %756 = vmatpush.msra.mxu0 %v501
        %757 = vmatpush.msra.mxu0 %v493
        %758 = vmatmul.f32.gmra.mxu0 %v622
        %v759 = vpop.f32.mrf.mxu0
        %v760 = vadd.f32 %v740, %v759
        %761 = vdwg.mxu0
        %762 = vmatpush.msra.mxu0 %v486
        %763 = vmatpush.msra.mxu0 %v478
        %764 = vmatpush.msra.mxu0 %v470
        %765 = vmatpush.msra.mxu0 %v462
        %766 = vmatpush.msra.mxu0 %v454
        %767 = vmatpush.msra.mxu0 %v446
        %768 = vmatpush.msra.mxu0 %v438
        %769 = vmatpush.msra.mxu0 %v430
        %770 = vmatpush.msra.mxu0 %v422
        %771 = vmatpush.msra.mxu0 %v414
        %772 = vmatpush.msra.mxu0 %v406
        %773 = vmatpush.msra.mxu0 %v398
        %774 = vmatpush.msra.mxu0 %v390
        %775 = vmatpush.msra.mxu0 %v382
        %776 = vmatpush.msra.mxu0 %v374
        %777 = vmatpush.msra.mxu0 %v366
        %778 = vmatmul.f32.gmra.mxu0 %v621
        %v779 = vpop.f32.mrf.mxu0
        %v780 = vadd.f32 %v629, %v779
        %781 = vdwg.mxu0
        %782 = vmatpush.msra.mxu0 %v614
        %783 = vmatpush.msra.mxu0 %v606
        %784 = vmatpush.msra.mxu0 %v598
        %785 = vmatpush.msra.mxu0 %v590
        %786 = vmatpush.msra.mxu0 %v582
        %787 = vmatpush.msra.mxu0 %v574
        %788 = vmatpush.msra.mxu0 %v566
        %789 = vmatpush.msra.mxu0 %v558
        %790 = vmatpush.msra.mxu0 %v550
        %791 = vmatpush.msra.mxu0 %v542
        %792 = vmatpush.msra.mxu0 %v534
        %793 = vmatpush.msra.mxu0 %v526
        %794 = vmatpush.msra.mxu0 %v518
        %795 = vmatpush.msra.mxu0 %v510
        %796 = vmatpush.msra.mxu0 %v502
        %797 = vmatpush.msra.mxu0 %v494
        %798 = vmatmul.f32.gmra.mxu0 %v622
        %v799 = vpop.f32.mrf.mxu0
        %v800 = vadd.f32 %v780, %v799
        %801 = vdwg.mxu0
        %802 = vmatpush.msra.mxu0 %v487
        %803 = vmatpush.msra.mxu0 %v479
        %804 = vmatpush.msra.mxu0 %v471
        %805 = vmatpush.msra.mxu0 %v463
        %806 = vmatpush.msra.mxu0 %v455
        %807 = vmatpush.msra.mxu0 %v447
        %808 = vmatpush.msra.mxu0 %v439
        %809 = vmatpush.msra.mxu0 %v431
        %810 = vmatpush.msra.mxu0 %v423
        %811 = vmatpush.msra.mxu0 %v415
        %812 = vmatpush.msra.mxu0 %v407
        %813 = vmatpush.msra.mxu0 %v399
        %814 = vmatpush.msra.mxu0 %v391
        %815 = vmatpush.msra.mxu0 %v383
        %816 = vmatpush.msra.mxu0 %v375
        %817 = vmatpush.msra.mxu0 %v367
        %818 = vmatmul.f32.gmra.mxu0 %v621
        %v819 = vpop.f32.mrf.mxu0
        %v820 = vadd.f32 %v630, %v819
        %821 = vdwg.mxu0
        %822 = vmatpush.msra.mxu0 %v615
        %823 = vmatpush.msra.mxu0 %v607
        %824 = vmatpush.msra.mxu0 %v599
        %825 = vmatpush.msra.mxu0 %v591
        %826 = vmatpush.msra.mxu0 %v583
        %827 = vmatpush.msra.mxu0 %v575
        %828 = vmatpush.msra.mxu0 %v567
        %829 = vmatpush.msra.mxu0 %v559
        %830 = vmatpush.msra.mxu0 %v551
        %831 = vmatpush.msra.mxu0 %v543
        %832 = vmatpush.msra.mxu0 %v535
        %833 = vmatpush.msra.mxu0 %v527
        %834 = vmatpush.msra.mxu0 %v519
        %835 = vmatpush.msra.mxu0 %v511
        %836 = vmatpush.msra.mxu0 %v503
        %837 = vmatpush.msra.mxu0 %v495
        %838 = vmatmul.f32.gmra.mxu0 %v622
        %v839 = vpop.f32.mrf.mxu0
        %v840 = vadd.f32 %v820, %v839
        %841 = vdwg.mxu0
        %842 = vmatpush.msra.mxu0 %v488
        %843 = vmatpush.msra.mxu0 %v480
        %844 = vmatpush.msra.mxu0 %v472
        %845 = vmatpush.msra.mxu0 %v464
        %846 = vmatpush.msra.mxu0 %v456
        %847 = vmatpush.msra.mxu0 %v448
        %848 = vmatpush.msra.mxu0 %v440
        %849 = vmatpush.msra.mxu0 %v432
        %850 = vmatpush.msra.mxu0 %v424
        %851 = vmatpush.msra.mxu0 %v416
        %852 = vmatpush.msra.mxu0 %v408
        %853 = vmatpush.msra.mxu0 %v400
        %854 = vmatpush.msra.mxu0 %v392
        %855 = vmatpush.msra.mxu0 %v384
        %856 = vmatpush.msra.mxu0 %v376
        %857 = vmatpush.msra.mxu0 %v368
        %858 = vmatmul.f32.gmra.mxu0 %v621
        %v859 = vpop.f32.mrf.mxu0
        %v860 = vadd.f32 %v631, %v859
        %861 = vdwg.mxu0
        %862 = vmatpush.msra.mxu0 %v616
        %863 = vmatpush.msra.mxu0 %v608
        %864 = vmatpush.msra.mxu0 %v600
        %865 = vmatpush.msra.mxu0 %v592
        %866 = vmatpush.msra.mxu0 %v584
        %867 = vmatpush.msra.mxu0 %v576
        %868 = vmatpush.msra.mxu0 %v568
        %869 = vmatpush.msra.mxu0 %v560
        %870 = vmatpush.msra.mxu0 %v552
        %871 = vmatpush.msra.mxu0 %v544
        %872 = vmatpush.msra.mxu0 %v536
        %873 = vmatpush.msra.mxu0 %v528
        %874 = vmatpush.msra.mxu0 %v520
        %875 = vmatpush.msra.mxu0 %v512
        %876 = vmatpush.msra.mxu0 %v504
        %877 = vmatpush.msra.mxu0 %v496
        %878 = vmatmul.f32.gmra.mxu0 %v622
        %v879 = vpop.f32.mrf.mxu0
        %v880 = vadd.f32 %v860, %v879
        %881 = vdwg.mxu0
        %882 = vmatpush.msra.mxu0 %v489
        %883 = vmatpush.msra.mxu0 %v481
        %884 = vmatpush.msra.mxu0 %v473
        %885 = vmatpush.msra.mxu0 %v465
        %886 = vmatpush.msra.mxu0 %v457
        %887 = vmatpush.msra.mxu0 %v449
        %888 = vmatpush.msra.mxu0 %v441
        %889 = vmatpush.msra.mxu0 %v433
        %890 = vmatpush.msra.mxu0 %v425
        %891 = vmatpush.msra.mxu0 %v417
        %892 = vmatpush.msra.mxu0 %v409
        %893 = vmatpush.msra.mxu0 %v401
        %894 = vmatpush.msra.mxu0 %v393
        %895 = vmatpush.msra.mxu0 %v385
        %896 = vmatpush.msra.mxu0 %v377
        %897 = vmatpush.msra.mxu0 %v369
        %898 = vmatmul.f32.gmra.mxu0 %v621
        %v899 = vpop.f32.mrf.mxu0
        %v900 = vadd.f32 %v632, %v899
        %901 = vdwg.mxu0
        %902 = vmatpush.msra.mxu0 %v617
        %903 = vmatpush.msra.mxu0 %v609
        %904 = vmatpush.msra.mxu0 %v601
        %905 = vmatpush.msra.mxu0 %v593
        %906 = vmatpush.msra.mxu0 %v585
        %907 = vmatpush.msra.mxu0 %v577
        %908 = vmatpush.msra.mxu0 %v569
        %909 = vmatpush.msra.mxu0 %v561
        %910 = vmatpush.msra.mxu0 %v553
        %911 = vmatpush.msra.mxu0 %v545
        %912 = vmatpush.msra.mxu0 %v537
        %913 = vmatpush.msra.mxu0 %v529
        %914 = vmatpush.msra.mxu0 %v521
        %915 = vmatpush.msra.mxu0 %v513
        %916 = vmatpush.msra.mxu0 %v505
        %917 = vmatpush.msra.mxu0 %v497
        %918 = vmatmul.f32.gmra.mxu0 %v622
        %v919 = vpop.f32.mrf.mxu0
        %v920 = vadd.f32 %v900, %v919
        %921 = vdwg.mxu0
        %922 = vmatpush.msra.mxu0 %v490
        %923 = vmatpush.msra.mxu0 %v482
        %924 = vmatpush.msra.mxu0 %v474
        %925 = vmatpush.msra.mxu0 %v466
        %926 = vmatpush.msra.mxu0 %v458
        %927 = vmatpush.msra.mxu0 %v450
        %928 = vmatpush.msra.mxu0 %v442
        %929 = vmatpush.msra.mxu0 %v434
        %930 = vmatpush.msra.mxu0 %v426
        %931 = vmatpush.msra.mxu0 %v418
        %932 = vmatpush.msra.mxu0 %v410
        %933 = vmatpush.msra.mxu0 %v402
        %934 = vmatpush.msra.mxu0 %v394
        %935 = vmatpush.msra.mxu0 %v386
        %936 = vmatpush.msra.mxu0 %v378
        %937 = vmatpush.msra.mxu0 %v370
        %938 = vmatmul.f32.gmra.mxu0 %v621
        %v939 = vpop.f32.mrf.mxu0
        %v940 = vadd.f32 %v633, %v939
        %941 = vdwg.mxu0
        %942 = vmatpush.msra.mxu0 %v618
        %943 = vmatpush.msra.mxu0 %v610
        %944 = vmatpush.msra.mxu0 %v602
        %945 = vmatpush.msra.mxu0 %v594
        %946 = vmatpush.msra.mxu0 %v586
        %947 = vmatpush.msra.mxu0 %v578
        %948 = vmatpush.msra.mxu0 %v570
        %949 = vmatpush.msra.mxu0 %v562
        %950 = vmatpush.msra.mxu0 %v554
        %951 = vmatpush.msra.mxu0 %v546
        %952 = vmatpush.msra.mxu0 %v538
        %953 = vmatpush.msra.mxu0 %v530
        %954 = vmatpush.msra.mxu0 %v522
        %955 = vmatpush.msra.mxu0 %v514
        %956 = vmatpush.msra.mxu0 %v506
        %957 = vmatpush.msra.mxu0 %v498
        %958 = vmatmul.f32.gmra.mxu0 %v622
        %v959 = vpop.f32.mrf.mxu0
        %v960 = vadd.f32 %v940, %v959
        %961 = vdwg.mxu0
        %v962 = vld [vmem:[%s315] sm:$0xff]
        %v963 = vld [vmem:[%s315 + $0x8] sm:$0xff]
        %v964 = vld [vmem:[%s315 + $0x10] sm:$0xff]
        %v965 = vld [vmem:[%s315 + $0x18] sm:$0xff]
        %v966 = vld [vmem:[%s315 + $0x20] sm:$0xff]
        %v967 = vld [vmem:[%s315 + $0x28] sm:$0xff]
        %v968 = vld [vmem:[%s315 + $0x30] sm:$0xff]
        %v969 = vld [vmem:[%s315 + $0x38] sm:$0xff]
        %v970 = vperm.slane %v760, 0
        %v971 = vperm.slane %v800, 0
        %v972 = vmul.f32 %v970, %v962
        %v973 = vmul.f32 %v971, %v963
        %v974 = vmul.f32 %v970, %v964
        %v975 = vmul.f32 %v971, %v965
        %v976 = vmul.f32 %v970, %v966
        %v977 = vmul.f32 %v971, %v967
        %v978 = vmul.f32 %v970, %v968
        %v979 = vmul.f32 %v971, %v969
        %v980 = vperm.slane %v680, 0
        %v981 = vperm.slane %v720, 0
        %v982 = vadd.f32 %v972, %v980
        %v983 = vadd.f32 %v973, %v981
        %v984 = vadd.f32 %v974, %v980
        %v985 = vadd.f32 %v975, %v981
        %v986 = vadd.f32 %v976, %v980
        %v987 = vadd.f32 %v977, %v981
        %v988 = vadd.f32 %v978, %v980
        %v989 = vadd.f32 %v979, %v981
        %v990 = vmax.f32 %v982, 0.0
        %v991 = vmax.f32 %v983, 0.0
        %v992 = vmax.f32 %v984, 0.0
        %v993 = vmax.f32 %v985, 0.0
        %v994 = vmax.f32 %v986, 0.0
        %v995 = vmax.f32 %v987, 0.0
        %v996 = vmax.f32 %v988, 0.0
        %v997 = vmax.f32 %v989, 0.0
        %v998 = vld [vmem:[#allocation10] sm:$0xff]
        %v999 = vld [vmem:[#allocation10 + $0x8] sm:$0xff]
        %v1000 = vld [vmem:[#allocation10 + $0x10] sm:$0xff]
        %v1001 = vld [vmem:[#allocation10 + $0x18] sm:$0xff]
        %v1002 = vld [vmem:[#allocation10 + $0x20] sm:$0xff]
        %v1003 = vld [vmem:[#allocation10 + $0x28] sm:$0xff]
        %v1004 = vld [vmem:[#allocation10 + $0x30] sm:$0xff]
        %v1005 = vld [vmem:[#allocation10 + $0x38] sm:$0xff]
        %v1006 = vld [vmem:[#allocation10 + $0x40] sm:$0xff]
        %v1007 = vld [vmem:[#allocation10 + $0x48] sm:$0xff]
        %v1008 = vld [vmem:[#allocation10 + $0x50] sm:$0xff]
        %v1009 = vld [vmem:[#allocation10 + $0x58] sm:$0xff]
        %v1010 = vld [vmem:[#allocation10 + $0x60] sm:$0xff]
        %v1011 = vld [vmem:[#allocation10 + $0x68] sm:$0xff]
        %v1012 = vld [vmem:[#allocation10 + $0x70] sm:$0xff]
        %v1013 = vld [vmem:[#allocation10 + $0x78] sm:$0xff]
        %v1014 = vld [vmem:[#allocation10 + $0x80] sm:$0xff]
        %v1015 = vld [vmem:[#allocation10 + $0x88] sm:$0xff]
        %v1016 = vld [vmem:[#allocation10 + $0x90] sm:$0xff]
        %v1017 = vld [vmem:[#allocation10 + $0x98] sm:$0xff]
        %v1018 = vld [vmem:[#allocation10 + $0xa0] sm:$0xff]
        %v1019 = vld [vmem:[#allocation10 + $0xa8] sm:$0xff]
        %v1020 = vld [vmem:[#allocation10 + $0xb0] sm:$0xff]
        %v1021 = vld [vmem:[#allocation10 + $0xb8] sm:$0xff]
        %v1022 = vld [vmem:[#allocation10 + $0xc0] sm:$0xff]
        %v1023 = vld [vmem:[#allocation10 + $0xc8] sm:$0xff]
        %v1024 = vld [vmem:[#allocation10 + $0xd0] sm:$0xff]
        %v1025 = vld [vmem:[#allocation10 + $0xd8] sm:$0xff]
        %v1026 = vld [vmem:[#allocation10 + $0xe0] sm:$0xff]
        %v1027 = vld [vmem:[#allocation10 + $0xe8] sm:$0xff]
        %v1028 = vld [vmem:[#allocation10 + $0xf0] sm:$0xff]
        %v1029 = vld [vmem:[#allocation10 + $0xf8] sm:$0xff]
        %v1030 = vld [vmem:[#allocation10 + $0x100] sm:$0xff]
        %v1031 = vld [vmem:[#allocation10 + $0x108] sm:$0xff]
        %v1032 = vld [vmem:[#allocation10 + $0x110] sm:$0xff]
        %v1033 = vld [vmem:[#allocation10 + $0x118] sm:$0xff]
        %v1034 = vld [vmem:[#allocation10 + $0x120] sm:$0xff]
        %v1035 = vld [vmem:[#allocation10 + $0x128] sm:$0xff]
        %v1036 = vld [vmem:[#allocation10 + $0x130] sm:$0xff]
        %v1037 = vld [vmem:[#allocation10 + $0x138] sm:$0xff]
        %v1038 = vld [vmem:[#allocation10 + $0x140] sm:$0xff]
        %v1039 = vld [vmem:[#allocation10 + $0x148] sm:$0xff]
        %v1040 = vld [vmem:[#allocation10 + $0x150] sm:$0xff]
        %v1041 = vld [vmem:[#allocation10 + $0x158] sm:$0xff]
        %v1042 = vld [vmem:[#allocation10 + $0x160] sm:$0xff]
        %v1043 = vld [vmem:[#allocation10 + $0x168] sm:$0xff]
        %v1044 = vld [vmem:[#allocation10 + $0x170] sm:$0xff]
        %v1045 = vld [vmem:[#allocation10 + $0x178] sm:$0xff]
        %v1046 = vld [vmem:[#allocation10 + $0x180] sm:$0xff]
        %v1047 = vld [vmem:[#allocation10 + $0x188] sm:$0xff]
        %v1048 = vld [vmem:[#allocation10 + $0x190] sm:$0xff]
        %v1049 = vld [vmem:[#allocation10 + $0x198] sm:$0xff]
        %v1050 = vld [vmem:[#allocation10 + $0x1a0] sm:$0xff]
        %v1051 = vld [vmem:[#allocation10 + $0x1a8] sm:$0xff]
        %v1052 = vld [vmem:[#allocation10 + $0x1b0] sm:$0xff]
        %v1053 = vld [vmem:[#allocation10 + $0x1b8] sm:$0xff]
        %v1054 = vld [vmem:[#allocation10 + $0x1c0] sm:$0xff]
        %v1055 = vld [vmem:[#allocation10 + $0x1c8] sm:$0xff]
        %v1056 = vld [vmem:[#allocation10 + $0x1d0] sm:$0xff]
        %v1057 = vld [vmem:[#allocation10 + $0x1d8] sm:$0xff]
        %v1058 = vld [vmem:[#allocation10 + $0x1e0] sm:$0xff]
        %v1059 = vld [vmem:[#allocation10 + $0x1e8] sm:$0xff]
        %v1060 = vld [vmem:[#allocation10 + $0x1f0] sm:$0xff]
        %v1061 = vld [vmem:[#allocation10 + $0x1f8] sm:$0xff]
        %v1062 = vld [vmem:[%s5] sm:$0x3]
        %v1064 = vperm.slane %v1062, 0
        %v1065 = vperm.slane %v1062, 1
        %1068 = vmatpush.msra.mxu0 %v1028
        %1069 = vmatpush.msra.mxu0 %v1026
        %1070 = vmatpush.msra.mxu0 %v1024
        %1071 = vmatpush.msra.mxu0 %v1022
        %1072 = vmatpush.msra.mxu0 %v1020
        %1073 = vmatpush.msra.mxu0 %v1018
        %1074 = vmatpush.msra.mxu0 %v1016
        %1075 = vmatpush.msra.mxu0 %v1014
        %1076 = vmatpush.msra.mxu0 %v1012
        %1077 = vmatpush.msra.mxu0 %v1010
        %1078 = vmatpush.msra.mxu0 %v1008
        %1079 = vmatpush.msra.mxu0 %v1006
        %1080 = vmatpush.msra.mxu0 %v1004
        %1081 = vmatpush.msra.mxu0 %v1002
        %1082 = vmatpush.msra.mxu0 %v1000
        %1083 = vmatpush.msra.mxu0 %v998
        %1084 = vmatmul.f32.gmra.mxu0 %v990
        %v1085 = vpop.f32.mrf.mxu0
        %v1086 = vadd.f32 %v1064, %v1085
        %1087 = vmatmul.f32.gmra.mxu0 %v992
        %v1088 = vpop.f32.mrf.mxu0
        %v1089 = vadd.f32 %v1064, %v1088
        %1090 = vmatmul.f32.gmra.mxu0 %v994
        %v1091 = vpop.f32.mrf.mxu0
        %v1092 = vadd.f32 %v1064, %v1091
        %1093 = vmatmul.f32.gmra.mxu0 %v996
        %v1094 = vpop.f32.mrf.mxu0
        %v1095 = vadd.f32 %v1064, %v1094
        %1096 = vdwg.mxu0
        %1097 = vmatpush.msra.mxu0 %v1060
        %1098 = vmatpush.msra.mxu0 %v1058
        %1099 = vmatpush.msra.mxu0 %v1056
        %1100 = vmatpush.msra.mxu0 %v1054
        %1101 = vmatpush.msra.mxu0 %v1052
        %1102 = vmatpush.msra.mxu0 %v1050
        %1103 = vmatpush.msra.mxu0 %v1048
        %1104 = vmatpush.msra.mxu0 %v1046
        %1105 = vmatpush.msra.mxu0 %v1044
        %1106 = vmatpush.msra.mxu0 %v1042
        %1107 = vmatpush.msra.mxu0 %v1040
        %1108 = vmatpush.msra.mxu0 %v1038
        %1109 = vmatpush.msra.mxu0 %v1036
        %1110 = vmatpush.msra.mxu0 %v1034
        %1111 = vmatpush.msra.mxu0 %v1032
        %1112 = vmatpush.msra.mxu0 %v1030
        %1113 = vmatmul.f32.gmra.mxu0 %v991
        %v1114 = vpop.f32.mrf.mxu0
        %v1115 = vadd.f32 %v1086, %v1114
        %1116 = vmatmul.f32.gmra.mxu0 %v993
        %v1117 = vpop.f32.mrf.mxu0
        %v1118 = vadd.f32 %v1089, %v1117
        %1119 = vmatmul.f32.gmra.mxu0 %v995
        %v1120 = vpop.f32.mrf.mxu0
        %v1121 = vadd.f32 %v1092, %v1120
        %1122 = vmatmul.f32.gmra.mxu0 %v997
        %v1123 = vpop.f32.mrf.mxu0
        %v1124 = vadd.f32 %v1095, %v1123
        %1125 = vdwg.mxu0
        %1126 = vmatpush.msra.mxu0 %v1029
        %1127 = vmatpush.msra.mxu0 %v1027
        %1128 = vmatpush.msra.mxu0 %v1025
        %1129 = vmatpush.msra.mxu0 %v1023
        %1130 = vmatpush.msra.mxu0 %v1021
        %1131 = vmatpush.msra.mxu0 %v1019
        %1132 = vmatpush.msra.mxu0 %v1017
        %1133 = vmatpush.msra.mxu0 %v1015
        %1134 = vmatpush.msra.mxu0 %v1013
        %1135 = vmatpush.msra.mxu0 %v1011
        %1136 = vmatpush.msra.mxu0 %v1009
        %1137 = vmatpush.msra.mxu0 %v1007
        %1138 = vmatpush.msra.mxu0 %v1005
        %1139 = vmatpush.msra.mxu0 %v1003
        %1140 = vmatpush.msra.mxu0 %v1001
        %1141 = vmatpush.msra.mxu0 %v999
        %1142 = vmatmul.f32.gmra.mxu0 %v990
        %v1143 = vpop.f32.mrf.mxu0
        %v1144 = vadd.f32 %v1065, %v1143
        %1145 = vmatmul.f32.gmra.mxu0 %v992
        %v1146 = vpop.f32.mrf.mxu0
        %v1147 = vadd.f32 %v1065, %v1146
        %1148 = vmatmul.f32.gmra.mxu0 %v994
        %v1149 = vpop.f32.mrf.mxu0
        %v1150 = vadd.f32 %v1065, %v1149
        %1151 = vmatmul.f32.gmra.mxu0 %v996
        %v1152 = vpop.f32.mrf.mxu0
        %v1153 = vadd.f32 %v1065, %v1152
        %1154 = vdwg.mxu0
        %1155 = vmatpush.msra.mxu0 %v1061
        %1156 = vmatpush.msra.mxu0 %v1059
        %1157 = vmatpush.msra.mxu0 %v1057
        %1158 = vmatpush.msra.mxu0 %v1055
        %1159 = vmatpush.msra.mxu0 %v1053
        %1160 = vmatpush.msra.mxu0 %v1051
        %1161 = vmatpush.msra.mxu0 %v1049
        %1162 = vmatpush.msra.mxu0 %v1047
        %1163 = vmatpush.msra.mxu0 %v1045
        %1164 = vmatpush.msra.mxu0 %v1043
        %1165 = vmatpush.msra.mxu0 %v1041
        %1166 = vmatpush.msra.mxu0 %v1039
        %1167 = vmatpush.msra.mxu0 %v1037
        %1168 = vmatpush.msra.mxu0 %v1035
        %1169 = vmatpush.msra.mxu0 %v1033
        %1170 = vmatpush.msra.mxu0 %v1031
        %1171 = vmatmul.f32.gmra.mxu0 %v991
        %v1172 = vpop.f32.mrf.mxu0
        %v1173 = vadd.f32 %v1144, %v1172
        %1174 = vmatmul.f32.gmra.mxu0 %v993
        %v1175 = vpop.f32.mrf.mxu0
        %v1176 = vadd.f32 %v1147, %v1175
        %1177 = vmatmul.f32.gmra.mxu0 %v995
        %v1178 = vpop.f32.mrf.mxu0
        %v1179 = vadd.f32 %v1150, %v1178
        %1180 = vmatmul.f32.gmra.mxu0 %v997
        %v1181 = vpop.f32.mrf.mxu0
        %v1182 = vadd.f32 %v1153, %v1181
        %1183 = vdwg.mxu0
        %v1184 = vperm.slane %v920, 0
        %v1185 = vperm.slane %v960, 0
        %v1186 = vmul.f32 %v1184, %v1115
        %v1187 = vmul.f32 %v1185, %v1173
        %v1188 = vmul.f32 %v1184, %v1118
        %v1189 = vmul.f32 %v1185, %v1176
        %v1190 = vmul.f32 %v1184, %v1121
        %v1191 = vmul.f32 %v1185, %v1179
        %v1192 = vmul.f32 %v1184, %v1124
        %v1193 = vmul.f32 %v1185, %v1182
        %v1194 = vperm.slane %v840, 0
        %v1195 = vperm.slane %v880, 0
        %v1196 = vadd.f32 %v1186, %v1194
        %v1197 = vadd.f32 %v1187, %v1195
        %v1198 = vadd.f32 %v1188, %v1194
        %v1199 = vadd.f32 %v1189, %v1195
        %v1200 = vadd.f32 %v1190, %v1194
        %v1201 = vadd.f32 %v1191, %v1195
        %v1202 = vadd.f32 %v1192, %v1194
        %v1203 = vadd.f32 %v1193, %v1195
        %v1204 = vmax.f32 %v1196, 0.0
        %v1205 = vmax.f32 %v1197, 0.0
        %v1206 = vmax.f32 %v1198, 0.0
        %v1207 = vmax.f32 %v1199, 0.0
        %v1208 = vmax.f32 %v1200, 0.0
        %v1209 = vmax.f32 %v1201, 0.0
        %v1210 = vmax.f32 %v1202, 0.0
        %v1211 = vmax.f32 %v1203, 0.0
        %s1212 = scalar_lea.vmem [#allocation10], 512
        %v1213 = vld [vmem:[%s1212] sm:$0xff]
        %v1214 = vld [vmem:[%s1212 + $0x8] sm:$0xff]
        %v1215 = vld [vmem:[%s1212 + $0x10] sm:$0xff]
        %v1216 = vld [vmem:[%s1212 + $0x18] sm:$0xff]
        %v1217 = vld [vmem:[%s1212 + $0x20] sm:$0xff]
        %v1218 = vld [vmem:[%s1212 + $0x28] sm:$0xff]
        %v1219 = vld [vmem:[%s1212 + $0x30] sm:$0xff]
        %v1220 = vld [vmem:[%s1212 + $0x38] sm:$0xff]
        %v1221 = vld [vmem:[%s1212 + $0x40] sm:$0xff]
        %v1222 = vld [vmem:[%s1212 + $0x48] sm:$0xff]
        %v1223 = vld [vmem:[%s1212 + $0x50] sm:$0xff]
        %v1224 = vld [vmem:[%s1212 + $0x58] sm:$0xff]
        %v1225 = vld [vmem:[%s1212 + $0x60] sm:$0xff]
        %v1226 = vld [vmem:[%s1212 + $0x68] sm:$0xff]
        %v1227 = vld [vmem:[%s1212 + $0x70] sm:$0xff]
        %v1228 = vld [vmem:[%s1212 + $0x78] sm:$0xff]
        %v1229 = vld [vmem:[%s1212 + $0x80] sm:$0xff]
        %v1230 = vld [vmem:[%s1212 + $0x88] sm:$0xff]
        %v1231 = vld [vmem:[%s1212 + $0x90] sm:$0xff]
        %v1232 = vld [vmem:[%s1212 + $0x98] sm:$0xff]
        %v1233 = vld [vmem:[%s1212 + $0xa0] sm:$0xff]
        %v1234 = vld [vmem:[%s1212 + $0xa8] sm:$0xff]
        %v1235 = vld [vmem:[%s1212 + $0xb0] sm:$0xff]
        %v1236 = vld [vmem:[%s1212 + $0xb8] sm:$0xff]
        %v1237 = vld [vmem:[%s1212 + $0xc0] sm:$0xff]
        %v1238 = vld [vmem:[%s1212 + $0xc8] sm:$0xff]
        %v1239 = vld [vmem:[%s1212 + $0xd0] sm:$0xff]
        %v1240 = vld [vmem:[%s1212 + $0xd8] sm:$0xff]
        %v1241 = vld [vmem:[%s1212 + $0xe0] sm:$0xff]
        %v1242 = vld [vmem:[%s1212 + $0xe8] sm:$0xff]
        %v1243 = vld [vmem:[%s1212 + $0xf0] sm:$0xff]
        %v1244 = vld [vmem:[%s1212 + $0xf8] sm:$0xff]
        %v1245 = vld [vmem:[%s1212 + $0x100] sm:$0xff]
        %v1246 = vld [vmem:[%s1212 + $0x108] sm:$0xff]
        %v1247 = vld [vmem:[%s1212 + $0x110] sm:$0xff]
        %v1248 = vld [vmem:[%s1212 + $0x118] sm:$0xff]
        %v1249 = vld [vmem:[%s1212 + $0x120] sm:$0xff]
        %v1250 = vld [vmem:[%s1212 + $0x128] sm:$0xff]
        %v1251 = vld [vmem:[%s1212 + $0x130] sm:$0xff]
        %v1252 = vld [vmem:[%s1212 + $0x138] sm:$0xff]
        %v1253 = vld [vmem:[%s1212 + $0x140] sm:$0xff]
        %v1254 = vld [vmem:[%s1212 + $0x148] sm:$0xff]
        %v1255 = vld [vmem:[%s1212 + $0x150] sm:$0xff]
        %v1256 = vld [vmem:[%s1212 + $0x158] sm:$0xff]
        %v1257 = vld [vmem:[%s1212 + $0x160] sm:$0xff]
        %v1258 = vld [vmem:[%s1212 + $0x168] sm:$0xff]
        %v1259 = vld [vmem:[%s1212 + $0x170] sm:$0xff]
        %v1260 = vld [vmem:[%s1212 + $0x178] sm:$0xff]
        %v1261 = vld [vmem:[%s1212 + $0x180] sm:$0xff]
        %v1262 = vld [vmem:[%s1212 + $0x188] sm:$0xff]
        %v1263 = vld [vmem:[%s1212 + $0x190] sm:$0xff]
        %v1264 = vld [vmem:[%s1212 + $0x198] sm:$0xff]
        %v1265 = vld [vmem:[%s1212 + $0x1a0] sm:$0xff]
        %v1266 = vld [vmem:[%s1212 + $0x1a8] sm:$0xff]
        %v1267 = vld [vmem:[%s1212 + $0x1b0] sm:$0xff]
        %v1268 = vld [vmem:[%s1212 + $0x1b8] sm:$0xff]
        %v1269 = vld [vmem:[%s1212 + $0x1c0] sm:$0xff]
        %v1270 = vld [vmem:[%s1212 + $0x1c8] sm:$0xff]
        %v1271 = vld [vmem:[%s1212 + $0x1d0] sm:$0xff]
        %v1272 = vld [vmem:[%s1212 + $0x1d8] sm:$0xff]
        %v1273 = vld [vmem:[%s1212 + $0x1e0] sm:$0xff]
        %v1274 = vld [vmem:[%s1212 + $0x1e8] sm:$0xff]
        %v1275 = vld [vmem:[%s1212 + $0x1f0] sm:$0xff]
        %v1276 = vld [vmem:[%s1212 + $0x1f8] sm:$0xff]
        %s1277 = scalar_lea.vmem %s5, 2
        %v1278 = vld [vmem:[%s1277] sm:$0x3]
        %v1280 = vperm.slane %v1278, 0
        %v1281 = vperm.slane %v1278, 1
        %1284 = vmatpush.msra.mxu0 %v1243
        %1285 = vmatpush.msra.mxu0 %v1241
        %1286 = vmatpush.msra.mxu0 %v1239
        %1287 = vmatpush.msra.mxu0 %v1237
        %1288 = vmatpush.msra.mxu0 %v1235
        %1289 = vmatpush.msra.mxu0 %v1233
        %1290 = vmatpush.msra.mxu0 %v1231
        %1291 = vmatpush.msra.mxu0 %v1229
        %1292 = vmatpush.msra.mxu0 %v1227
        %1293 = vmatpush.msra.mxu0 %v1225
        %1294 = vmatpush.msra.mxu0 %v1223
        %1295 = vmatpush.msra.mxu0 %v1221
        %1296 = vmatpush.msra.mxu0 %v1219
        %1297 = vmatpush.msra.mxu0 %v1217
        %1298 = vmatpush.msra.mxu0 %v1215
        %1299 = vmatpush.msra.mxu0 %v1213
        %1300 = vmatmul.f32.gmra.mxu0 %v1204
        %v1301 = vpop.f32.mrf.mxu0
        %v1302 = vadd.f32 %v1280, %v1301
        %1303 = vmatmul.f32.gmra.mxu0 %v1206
        %v1304 = vpop.f32.mrf.mxu0
        %v1305 = vadd.f32 %v1280, %v1304
        %1306 = vmatmul.f32.gmra.mxu0 %v1208
        %v1307 = vpop.f32.mrf.mxu0
        %v1308 = vadd.f32 %v1280, %v1307
        %1309 = vmatmul.f32.gmra.mxu0 %v1210
        %v1310 = vpop.f32.mrf.mxu0
        %v1311 = vadd.f32 %v1280, %v1310
        %1312 = vdwg.mxu0
        %1313 = vmatpush.msra.mxu0 %v1275
        %1314 = vmatpush.msra.mxu0 %v1273
        %1315 = vmatpush.msra.mxu0 %v1271
        %1316 = vmatpush.msra.mxu0 %v1269
        %1317 = vmatpush.msra.mxu0 %v1267
        %1318 = vmatpush.msra.mxu0 %v1265
        %1319 = vmatpush.msra.mxu0 %v1263
        %1320 = vmatpush.msra.mxu0 %v1261
        %1321 = vmatpush.msra.mxu0 %v1259
        %1322 = vmatpush.msra.mxu0 %v1257
        %1323 = vmatpush.msra.mxu0 %v1255
        %1324 = vmatpush.msra.mxu0 %v1253
        %1325 = vmatpush.msra.mxu0 %v1251
        %1326 = vmatpush.msra.mxu0 %v1249
        %1327 = vmatpush.msra.mxu0 %v1247
        %1328 = vmatpush.msra.mxu0 %v1245
        %1329 = vmatmul.f32.gmra.mxu0 %v1205
        %v1330 = vpop.f32.mrf.mxu0
        %v1331 = vadd.f32 %v1302, %v1330
        %1332 = vmatmul.f32.gmra.mxu0 %v1207
        %v1333 = vpop.f32.mrf.mxu0
        %v1334 = vadd.f32 %v1305, %v1333
        %1335 = vmatmul.f32.gmra.mxu0 %v1209
        %v1336 = vpop.f32.mrf.mxu0
        %v1337 = vadd.f32 %v1308, %v1336
        %1338 = vmatmul.f32.gmra.mxu0 %v1211
        %v1339 = vpop.f32.mrf.mxu0
        %v1340 = vadd.f32 %v1311, %v1339
        %1341 = vdwg.mxu0
        %1342 = vmatpush.msra.mxu0 %v1244
        %1343 = vmatpush.msra.mxu0 %v1242
        %1344 = vmatpush.msra.mxu0 %v1240
        %1345 = vmatpush.msra.mxu0 %v1238
        %1346 = vmatpush.msra.mxu0 %v1236
        %1347 = vmatpush.msra.mxu0 %v1234
        %1348 = vmatpush.msra.mxu0 %v1232
        %1349 = vmatpush.msra.mxu0 %v1230
        %1350 = vmatpush.msra.mxu0 %v1228
        %1351 = vmatpush.msra.mxu0 %v1226
        %1352 = vmatpush.msra.mxu0 %v1224
        %1353 = vmatpush.msra.mxu0 %v1222
        %1354 = vmatpush.msra.mxu0 %v1220
        %1355 = vmatpush.msra.mxu0 %v1218
        %1356 = vmatpush.msra.mxu0 %v1216
        %1357 = vmatpush.msra.mxu0 %v1214
        %1358 = vmatmul.f32.gmra.mxu0 %v1204
        %v1359 = vpop.f32.mrf.mxu0
        %v1360 = vadd.f32 %v1281, %v1359
        %1361 = vmatmul.f32.gmra.mxu0 %v1206
        %v1362 = vpop.f32.mrf.mxu0
        %v1363 = vadd.f32 %v1281, %v1362
        %1364 = vmatmul.f32.gmra.mxu0 %v1208
        %v1365 = vpop.f32.mrf.mxu0
        %v1366 = vadd.f32 %v1281, %v1365
        %1367 = vmatmul.f32.gmra.mxu0 %v1210
        %v1368 = vpop.f32.mrf.mxu0
        %v1369 = vadd.f32 %v1281, %v1368
        %1370 = vdwg.mxu0
        %1371 = vmatpush.msra.mxu0 %v1276
        %1372 = vmatpush.msra.mxu0 %v1274
        %1373 = vmatpush.msra.mxu0 %v1272
        %1374 = vmatpush.msra.mxu0 %v1270
        %1375 = vmatpush.msra.mxu0 %v1268
        %1376 = vmatpush.msra.mxu0 %v1266
        %1377 = vmatpush.msra.mxu0 %v1264
        %1378 = vmatpush.msra.mxu0 %v1262
        %1379 = vmatpush.msra.mxu0 %v1260
        %1380 = vmatpush.msra.mxu0 %v1258
        %1381 = vmatpush.msra.mxu0 %v1256
        %1382 = vmatpush.msra.mxu0 %v1254
        %1383 = vmatpush.msra.mxu0 %v1252
        %1384 = vmatpush.msra.mxu0 %v1250
        %1385 = vmatpush.msra.mxu0 %v1248
        %1386 = vmatpush.msra.mxu0 %v1246
        %1387 = vmatmul.f32.gmra.mxu0 %v1205
        %v1388 = vpop.f32.mrf.mxu0
        %v1389 = vadd.f32 %v1360, %v1388
        %1390 = vmatmul.f32.gmra.mxu0 %v1207
        %v1391 = vpop.f32.mrf.mxu0
        %v1392 = vadd.f32 %v1363, %v1391
        %1393 = vmatmul.f32.gmra.mxu0 %v1209
        %v1394 = vpop.f32.mrf.mxu0
        %v1395 = vadd.f32 %v1366, %v1394
        %1396 = vmatmul.f32.gmra.mxu0 %v1211
        %v1397 = vpop.f32.mrf.mxu0
        %v1398 = vadd.f32 %v1369, %v1397
        %1399 = vdwg.mxu0
        %v1400 = vadd.f32 %v982, %v1331
        %v1401 = vadd.f32 %v983, %v1389
        %v1402 = vadd.f32 %v984, %v1334
        %v1403 = vadd.f32 %v985, %v1392
        %v1404 = vadd.f32 %v986, %v1337
        %v1405 = vadd.f32 %v987, %v1395
        %v1406 = vadd.f32 %v988, %v1340
        %v1407 = vadd.f32 %v989, %v1398
        %1408 = vst [vmem:[%s359] sm:$0xff] %v1400
        %1409 = vst [vmem:[%s359 + $0x8] sm:$0xff] %v1401
        %1410 = vst [vmem:[%s359 + $0x10] sm:$0xff] %v1402
        %1411 = vst [vmem:[%s359 + $0x18] sm:$0xff] %v1403
        %1412 = vst [vmem:[%s359 + $0x20] sm:$0xff] %v1404
        %1413 = vst [vmem:[%s359 + $0x28] sm:$0xff] %v1405
        %1414 = vst [vmem:[%s359 + $0x30] sm:$0xff] %v1406
        %1415 = vst [vmem:[%s359 + $0x38] sm:$0xff] %v1407
        %s1416 = sand.u32 %s185, 1
        %s1417 = scalar_lea.sflag [#allocation4], %s1416
        %s1418 = sand.u32 %s185, 1
        %s1419 = smul.addr %s1418, 64
        %s1420 = scalar_lea.vmem [#allocation11], %s1419
        // Predicated region
        $region65: #{tpu_custom_call.1} parent=43 // pred_check
          %p1421 = pneg %p195
        $region66: #{tpu_custom_call.1} parent=43 // pred_check_branch
          %1423 = sbr.rel (%p1421) target = $region68
        $region67: #{tpu_custom_call.1} parent=43 // pred_region
          %s1424 = smul.u32 4, %s30
          %1426 = vsyncadd %s1417, 0
          %s1427 = smul.addr %s1424, 2
          %s1428 = smul.addr %s29, 16
          %s1429 = sadd.s32 %s1427, %s1428
          %s1430 = smul.addr %s1429, 8
          %s1431 = scalar_lea.hbm %s6, %s1430
          %s1432 = sshll.u32 %s1420, 4
          %s1433 = int_to_ptr.vmem [resolvable:$true] %s1432
          %s1434 = sshll.u32 %s1431, 4
          %s1435 = int_to_ptr.hbm [resolvable:$true] %s1434
          %1440 = dma.vmem_to_hbm [thread:$0]  %s1433, 1024, %s1435, %s1417, 256, 256, 16
        $region68: #{tpu_custom_call.1} parent=43 // pred_fallthru
          _
      $region44: #{tpu_custom_call.1} parent=5 // pred_fallthru
        _
      %p1441 = scmp.le.s32.totalorder 2, %s20
      // Predicated region
      $region69: #{tpu_custom_call.1} parent=5 // pred_check
        %p1442 = pneg %p1441
      $region70: #{tpu_custom_call.1} parent=5 // pred_check_branch
        %1444 = sbr.rel (%p1442) target = $region72
      $region71: #{tpu_custom_call.1} parent=5 // pred_region
        %s1445 = ssub.s32 %s20, 2
        // Predicated region
        $region73: #{tpu_custom_call.1} parent=71 // pred_check
          %p1446 = pneg %p201
        $region74: #{tpu_custom_call.1} parent=71 // pred_check_branch
          %1448 = sbr.rel (%p1446) target = $region76
        $region75: #{tpu_custom_call.1} parent=71 // pred_region
          %s1449 = sand.u32 %s186, 1
          %s1450 = scalar_lea.sflag [#allocation4], %s1449
          %s1451 = sand.u32 %s186, 1
          %s1452 = smul.addr %s1451, 64
          %s1453 = scalar_lea.vmem [#allocation11], %s1452
          %1455 = dma.done %s1450, 1024
        $region76: #{tpu_custom_call.1} parent=71 // pred_fallthru
          _
      $region72: #{tpu_custom_call.1} parent=5 // pred_fallthru
        _
    $region6: #{tpu_custom_call.1} parent=1 // loop_footer
      %s24 = sadd.s32 1, %s20
    $region7: #{tpu_custom_call.1} parent=1 // loop_footer_branch
      %19 = sbr.rel target = $region3
    $region8: #{tpu_custom_call.1} parent=1 // loop_exit
      _
    %1456 = vsyncpa [#allocation3], 1
    %s1457 = scalar_lea.sflag [#allocation3], 1
    %1458 = vsyncpa %s1457, 1
    %1459 = vsyncpa [#allocation6], 1
    %s1460 = scalar_lea.sflag [#allocation6], 1
    %1461 = vsyncpa %s1460, 1
    %1462 = vsyncpa [#allocation9], 1
    %1463 = vsyncpa [#allocation4], 1
    %s1464 = scalar_lea.sflag [#allocation4], 1
    %1465 = vsyncpa %s1464, 1

// kernel: tpu_custom_call.1
$region0: #{tpu_custom_call.1}
  #allocation0 [shape = 'u32[]', space=smem, size = 0x4, offset = 0x4, fixed_abs, tag = 'smem constant byte address 0x4 - core index']
  #allocation1 [shape = 'u32[72,128]{1,0:T(1,128)}', space=vmem, size = 0x9000, scoped, tag = 'internal scratch']
  %s0 = inlined_call_operand.hbm [shape: f32[1,256], index: 0, kind: input, shape index: {}]
  %s1 = inlined_call_operand.hbm [shape: f32[1,64,256], index: 1, kind: input, shape index: {}]
  %s2 = inlined_call_operand.hbm [shape: f32[256,1024], index: 2, kind: input, shape index: {}]
  %s3 = inlined_call_operand.hbm [shape: f32[1,1024], index: 3, kind: input, shape index: {}]
  %s4 = inlined_call_operand.hbm [shape: f32[2,256,256], index: 4, kind: input, shape index: {}]
  %s5 = inlined_call_operand.vmem [shape: f32[2,1,256], index: 5, kind: input, shape index: {}]
  %s6 = inlined_call_operand.hbm [shape: f32[1,64,256], index: 6, kind: output, shape index: {}]
  %s7 = sld [smem:[#allocation0]]
  $region77: #{tpu_custom_call.1} parent=0
    _
  %s9 = ssub.s32 1, %s7
  %s10 = scalar_select 0, %s9, %s7
  $region1: #{tpu_custom_call.1} parent=0
    #allocation2 [shape = 'u8[1024]{0}', space=vmem, size = 0x400, scoped, tag = 'input window, operand 0, single buffered']
    #allocation3 [shape = 's32[2]{0}', space=sflag, size = 0x8, scoped, tag = 'scoped memory for tpu_custom_call.1']
    #allocation4 [shape = 's32[2]{0}', space=sflag, size = 0x8, scoped, tag = 'scoped memory for tpu_custom_call.1']
    #allocation5 [shape = 'u8[65536]{0}', space=vmem, size = 0x10000, scoped, tag = 'input window, operand 1']
    #allocation6 [shape = 's32[2]{0}', space=sflag, size = 0x8, scoped, tag = 'scoped memory for tpu_custom_call.1']
    #allocation7 [shape = 'u8[1048576]{0}', space=vmem, size = 0x100000, scoped, tag = 'input window, operand 2, single buffered']
    #allocation8 [shape = 'u8[4096]{0}', space=vmem, size = 0x1000, scoped, tag = 'input window, operand 3, single buffered']
    #allocation9 [shape = 's32[1]{0}', space=sflag, size = 0x4, scoped, tag = 'scoped memory for tpu_custom_call.1']
    #allocation10 [shape = 'u8[524288]{0}', space=vmem, size = 0x80000, scoped, tag = 'input window, operand 4, single buffered']
    #allocation11 [shape = 'u8[65536]{0}', space=vmem, size = 0x10000, scoped, tag = 'output window, operand 0']
    %11 = vsyncpa [#allocation3], 0
    %12 = vsyncpa [#allocation6], 0
    %s13 = scalar_lea.sflag [#allocation6], 1
    %14 = vsyncpa %s13, 0
    %15 = vsyncpa [#allocation9], 0
    %16 = vsyncpa [#allocation4], 0
    %s17 = scalar_lea.sflag [#allocation4], 1
    %18 = vsyncpa %s17, 0
    loop: start=0, step=1, limit=4
    $region2: #{tpu_custom_call.1} parent=1 // loop_pre_header
      _
    $region3: #{tpu_custom_call.1} parent=1 // loop_header
      %s20 = sphi 0, %s24
      %p21 = scmp.ge.s32.totalorder %s20, 4
      %s27 = sphi 0, %s39
      %s28 = sphi 0, %s35
      %s29 = sphi 0, %s27
      %s30 = sphi 0, %s28
      %s31 = sphi 0, %s29
      %s32 = sphi 0, %s30
      %s42 = sphi 0, %s44
      %s45 = sphi 0, %s42
      %s46 = sphi 0, %s45
      %s62 = sphi 0, %s46
      %s70 = sphi 0, %s72
      %s73 = sphi 0, %s70
      %s74 = sphi 0, %s73
      %s90 = sphi 0, %s74
      %s94 = sphi 0, %s94
      %s96 = sphi 0, %s94
      %s97 = sphi 0, %s96
      %s111 = sphi 0, %s97
      %s115 = sphi 0, %s115
      %s117 = sphi 0, %s115
      %s118 = sphi 0, %s117
      %s132 = sphi 0, %s118
      %s136 = sphi 0, %s136
      %s138 = sphi 0, %s136
      %s139 = sphi 0, %s138
      %s153 = sphi 0, %s139
      %s157 = sphi 0, %s157
      %s159 = sphi 0, %s157
      %s160 = sphi 0, %s159
      %s174 = sphi 0, %s160
      %s182 = sphi 0, %s184
      %s185 = sphi 0, %s182
      %s186 = sphi 0, %s185
      %s202 = sphi 0, %s186
    $region4: #{tpu_custom_call.1} parent=1 // loop_header_branch
      %23 = sbr.rel (%p21) target = $region8
    $region5: #{tpu_custom_call.1} parent=1 // loop_body
      %s25 = ssub.s32 %s20, 1
      %s26 = ssub.s32 %s20, 2
      %s33 = sadd.s32 1, %s28
      %p34 = scmp.ge.s32.totalorder %s33, 2
      %s35 = scalar_select %p34, 0, %s33
      %s36 = sadd.s32 1, %s27
      %s37 = scalar_select %p34, %s36, %s27
      %p38 = scmp.ge.s32.totalorder %s37, 1
      %s39 = scalar_select %p38, 0, %s37
      %s40 = ssub.s32 %s27, %s39
      %p41 = scmp.eq.s32.totalorder %s40, 0
      %s43 = sadd.s32 %s42, 1
      %s44 = scalar_select %p41, %s42, %s43
      %p47 = pneg %p41
      %p48 = scmp.eq.s32.totalorder %s20, 1
      %p49 = por %p47, %p48
      %p50 = scmp.ne.s32.totalorder %s42, %s45
      %p51 = scmp.eq.s32.totalorder %s20, 0
      %p52 = por %p50, %p51
      %p53 = scmp.ne.s32.totalorder %s42, %s45
      %p54 = scmp.eq.s32.totalorder %s25, 1
      %p55 = por %p53, %p54
      %p56 = scmp.ne.s32.totalorder %s45, %s46
      %p57 = scmp.eq.s32.totalorder %s25, 0
      %p58 = por %p56, %p57
      %p59 = scmp.ne.s32.totalorder %s45, %s46
      %p60 = scmp.eq.s32.totalorder %s26, 1
      %p61 = por %p59, %p60
      %p63 = scmp.ne.s32.totalorder %s46, %s62
      %p64 = scmp.eq.s32.totalorder %s26, 0
      %p65 = por %p63, %p64
      %s66 = ssub.s32 %s27, %s39
      %s67 = ssub.s32 %s28, %s35
      %s68 = sor.u32 %s66, %s67
      %p69 = scmp.eq.s32.totalorder %s68, 0
      %s71 = sadd.s32 %s70, 1
      %s72 = scalar_select %p69, %s70, %s71
      %p75 = pneg %p69
      %p76 = scmp.eq.s32.totalorder %s20, 1
      %p77 = por %p75, %p76
      %p78 = scmp.ne.s32.totalorder %s70, %s73
      %p79 = scmp.eq.s32.totalorder %s20, 0
      %p80 = por %p78, %p79
      %p81 = scmp.ne.s32.totalorder %s70, %s73
      %p82 = scmp.eq.s32.totalorder %s25, 1
      %p83 = por %p81, %p82
      %p84 = scmp.ne.s32.totalorder %s73, %s74
      %p85 = scmp.eq.s32.totalorder %s25, 0
      %p86 = por %p84, %p85
      %p87 = scmp.ne.s32.totalorder %s73, %s74
      %p88 = scmp.eq.s32.totalorder %s26, 1
      %p89 = por %p87, %p88
      %p91 = scmp.ne.s32.totalorder %s74, %s90
      %p92 = scmp.eq.s32.totalorder %s26, 0
      %p93 = por %p91, %p92
      %s95 = sadd.s32 %s94, 1
      %p98 = scmp.eq.s32.totalorder %s20, 1
      %p99 = scmp.ne.s32.totalorder %s94, %s96
      %p100 = scmp.eq.s32.totalorder %s20, 0
      %p101 = por %p99, %p100
      %p102 = scmp.ne.s32.totalorder %s94, %s96
      %p103 = scmp.eq.s32.totalorder %s25, 1
      %p104 = por %p102, %p103
      %p105 = scmp.ne.s32.totalorder %s96, %s97
      %p106 = scmp.eq.s32.totalorder %s25, 0
      %p107 = por %p105, %p106
      %p108 = scmp.ne.s32.totalorder %s96, %s97
      %p109 = scmp.eq.s32.totalorder %s26, 1
      %p110 = por %p108, %p109
      %p112 = scmp.ne.s32.totalorder %s97, %s111
      %p113 = scmp.eq.s32.totalorder %s26, 0
      %p114 = por %p112, %p113
      %s116 = sadd.s32 %s115, 1
      %p119 = scmp.eq.s32.totalorder %s20, 1
      %p120 = scmp.ne.s32.totalorder %s115, %s117
      %p121 = scmp.eq.s32.totalorder %s20, 0
      %p122 = por %p120, %p121
      %p123 = scmp.ne.s32.totalorder %s115, %s117
      %p124 = scmp.eq.s32.totalorder %s25, 1
      %p125 = por %p123, %p124
      %p126 = scmp.ne.s32.totalorder %s117, %s118
      %p127 = scmp.eq.s32.totalorder %s25, 0
      %p128 = por %p126, %p127
      %p129 = scmp.ne.s32.totalorder %s117, %s118
      %p130 = scmp.eq.s32.totalorder %s26, 1
      %p131 = por %p129, %p130
      %p133 = scmp.ne.s32.totalorder %s118, %s132
      %p134 = scmp.eq.s32.totalorder %s26, 0
      %p135 = por %p133, %p134
      %s137 = sadd.s32 %s136, 1
      %p140 = scmp.eq.s32.totalorder %s20, 1
      %p141 = scmp.ne.s32.totalorder %s136, %s138
      %p142 = scmp.eq.s32.totalorder %s20, 0
      %p143 = por %p141, %p142
      %p144 = scmp.ne.s32.totalorder %s136, %s138
      %p145 = scmp.eq.s32.totalorder %s25, 1
      %p146 = por %p144, %p145
      %p147 = scmp.ne.s32.totalorder %s138, %s139
      %p148 = scmp.eq.s32.totalorder %s25, 0
      %p149 = por %p147, %p148
      %p150 = scmp.ne.s32.totalorder %s138, %s139
      %p151 = scmp.eq.s32.totalorder %s26, 1
      %p152 = por %p150, %p151
      %p154 = scmp.ne.s32.totalorder %s139, %s153
      %p155 = scmp.eq.s32.totalorder %s26, 0
      %p156 = por %p154, %p155
      %s158 = sadd.s32 %s157, 1
      %p161 = scmp.eq.s32.totalorder %s20, 1
      %p162 = scmp.ne.s32.totalorder %s157, %s159
      %p163 = scmp.eq.s32.totalorder %s20, 0
      %p164 = por %p162, %p163
      %p165 = scmp.ne.s32.totalorder %s157, %s159
      %p166 = scmp.eq.s32.totalorder %s25, 1
      %p167 = por %p165, %p166
      %p168 = scmp.ne.s32.totalorder %s159, %s160
      %p169 = scmp.eq.s32.totalorder %s25, 0
      %p170 = por %p168, %p169
      %p171 = scmp.ne.s32.totalorder %s159, %s160
      %p172 = scmp.eq.s32.totalorder %s26, 1
      %p173 = por %p171, %p172
      %p175 = scmp.ne.s32.totalorder %s160, %s174
      %p176 = scmp.eq.s32.totalorder %s26, 0
      %p177 = por %p175, %p176
      %s178 = ssub.s32 %s27, %s39
      %s179 = ssub.s32 %s28, %s35
      %s180 = sor.u32 %s178, %s179
      %p181 = scmp.eq.s32.totalorder %s180, 0
      %s183 = sadd.s32 %s182, 1
      %s184 = scalar_select %p181, %s182, %s183
      %p187 = pneg %p181
      %p188 = scmp.eq.s32.totalorder %s20, 1
      %p189 = por %p187, %p188
      %p190 = scmp.ne.s32.totalorder %s182, %s185
      %p191 = scmp.eq.s32.totalorder %s20, 0
      %p192 = por %p190, %p191
      %p193 = scmp.ne.s32.totalorder %s182, %s185
      %p194 = scmp.eq.s32.totalorder %s25, 1
      %p195 = por %p193, %p194
      %p196 = scmp.ne.s32.totalorder %s185, %s186
      %p197 = scmp.eq.s32.totalorder %s25, 0
      %p198 = por %p196, %p197
      %p199 = scmp.ne.s32.totalorder %s185, %s186
      %p200 = scmp.eq.s32.totalorder %s26, 1
      %p201 = por %p199, %p200
      %p203 = scmp.ne.s32.totalorder %s186, %s202
      %p204 = scmp.eq.s32.totalorder %s26, 0
      %p205 = por %p203, %p204
      %p206 = scmp.le.s32.totalorder 1, %s20
      %p207 = scmp.lt.s32.totalorder %s20, 3
      %p208 = pnand %p206, %p207
      %p209 = pneg %p208
      // Predicated region
      $region9: #{tpu_custom_call.1} parent=5 // pred_check
        _
      $region10: #{tpu_custom_call.1} parent=5 // pred_check_branch
        %211 = sbr.rel (%p208) target = $region12
      $region11: #{tpu_custom_call.1} parent=5 // pred_region
        %s212 = ssub.s32 %s20, 1
        // Predicated region
        $region13: #{tpu_custom_call.1} parent=11 // pred_check
          %p213 = pneg %p58
        $region14: #{tpu_custom_call.1} parent=11 // pred_check_branch
          %215 = sbr.rel (%p213) target = $region16
        $region15: #{tpu_custom_call.1} parent=11 // pred_region
          %217 = vsyncadd [#allocation3], 0
          %s218 = smul.addr %s29, 2
          %s219 = scalar_lea.hbm %s0, %s218
          %s221 = sshll.u32 %s219, 4
          %s222 = int_to_ptr.hbm [resolvable:$true] %s221
          %s223 = sshll.u32 [#allocation2], 4
          %s224 = int_to_ptr.vmem [resolvable:$true] %s223
          %226 = dma.hbm_to_vmem [thread:$0]  %s222, 32, %s224, [#allocation3]
        $region16: #{tpu_custom_call.1} parent=11 // pred_fallthru
          _
        // Predicated region
        $region17: #{tpu_custom_call.1} parent=11 // pred_check
          %p227 = pneg %p107
        $region18: #{tpu_custom_call.1} parent=11 // pred_check_branch
          %229 = sbr.rel (%p227) target = $region20
        $region19: #{tpu_custom_call.1} parent=11 // pred_region
          %231 = vsyncadd [#allocation6], 0
          %s232 = sshll.u32 %s2, 4
          %s233 = int_to_ptr.hbm [resolvable:$true] %s232
          %s234 = sshll.u32 [#allocation7], 4
          %s235 = int_to_ptr.vmem [resolvable:$true] %s234
          %240 = dma.hbm_to_vmem [thread:$0]  %s233, 32768, %s235, [#allocation6], 1024, 1024, 64
        $region20: #{tpu_custom_call.1} parent=11 // pred_fallthru
          _
        // Predicated region
        $region21: #{tpu_custom_call.1} parent=11 // pred_check
          %p241 = pneg %p128
        $region22: #{tpu_custom_call.1} parent=11 // pred_check_branch
          %243 = sbr.rel (%p241) target = $region24
        $region23: #{tpu_custom_call.1} parent=11 // pred_region
          %245 = vsyncadd [#allocation9], 0
          %s247 = sshll.u32 %s3, 4
          %s248 = int_to_ptr.hbm [resolvable:$true] %s247
          %s249 = sshll.u32 [#allocation8], 4
          %s250 = int_to_ptr.vmem [resolvable:$true] %s249
          %252 = dma.hbm_to_vmem [thread:$0]  %s248, 128, %s250, [#allocation9]
        $region24: #{tpu_custom_call.1} parent=11 // pred_fallthru
          _
        // Predicated region
        $region25: #{tpu_custom_call.1} parent=11 // pred_check
          %p253 = pneg %p149
        $region26: #{tpu_custom_call.1} parent=11 // pred_check_branch
          %255 = sbr.rel (%p253) target = $region28
        $region27: #{tpu_custom_call.1} parent=11 // pred_region
          %257 = vsyncadd [#allocation9], 0
          %s258 = sshll.u32 %s4, 4
          %s259 = int_to_ptr.hbm [resolvable:$true] %s258
          %s260 = sshll.u32 [#allocation10], 4
          %s261 = int_to_ptr.vmem [resolvable:$true] %s260
          %266 = dma.hbm_to_vmem [thread:$0]  %s259, 16384, %s261, [#allocation9], 256, 256, 16
        $region28: #{tpu_custom_call.1} parent=11 // pred_fallthru
          _
        // Predicated region
        $region29: #{tpu_custom_call.1} parent=11 // pred_check
          %p267 = pneg %p170
        $region30: #{tpu_custom_call.1} parent=11 // pred_check_branch
          %269 = sbr.rel (%p267) target = $region32
        $region31: #{tpu_custom_call.1} parent=11 // pred_region
          _
        $region32: #{tpu_custom_call.1} parent=11 // pred_fallthru
          _
      $region12: #{tpu_custom_call.1} parent=5 // pred_fallthru
        _
      %p270 = scmp.lt.s32.totalorder %s20, 2
      // Predicated region
      $region33: #{tpu_custom_call.1} parent=5 // pred_check
        %p271 = pneg %p270
      $region34: #{tpu_custom_call.1} parent=5 // pred_check_branch
        %273 = sbr.rel (%p271) target = $region36
      $region35: #{tpu_custom_call.1} parent=5 // pred_region
        // Predicated region
        $region37: #{tpu_custom_call.1} parent=35 // pred_check
          %p274 = pneg %p80
        $region38: #{tpu_custom_call.1} parent=35 // pred_check_branch
          %276 = sbr.rel (%p274) target = $region40
        $region39: #{tpu_custom_call.1} parent=35 // pred_region
          %s277 = sand.u32 %s20, 1
          %s278 = scalar_lea.sflag [#allocation6], %s277
          %s279 = sand.u32 %s70, 1
          %s280 = smul.addr %s279, 64
          %s281 = scalar_lea.vmem [#allocation5], %s280
          %s282 = smul.u32 4, %s28
          %284 = vsyncadd %s278, 0
          %s285 = smul.addr %s282, 2
          %s286 = smul.addr %s27, 16
          %s287 = sadd.s32 %s285, %s286
          %s288 = smul.addr %s287, 8
          %s289 = scalar_lea.hbm %s1, %s288
          %s290 = sshll.u32 %s289, 4
          %s291 = int_to_ptr.hbm [resolvable:$true] %s290
          %s292 = sshll.u32 %s281, 4
          %s293 = int_to_ptr.vmem [resolvable:$true] %s292
          %298 = dma.hbm_to_vmem [thread:$0]  %s291, 1024, %s293, %s278, 256, 256, 16
        $region40: #{tpu_custom_call.1} parent=35 // pred_fallthru
          _
      $region36: #{tpu_custom_call.1} parent=5 // pred_fallthru
        _
      %p299 = scmp.le.s32.totalorder 1, %s20
      %p300 = scmp.lt.s32.totalorder %s20, 3
      %p301 = pnand %p299, %p300
      %p302 = pneg %p301
      // Predicated region
      $region41: #{tpu_custom_call.1} parent=5 // pred_check
        _
      $region42: #{tpu_custom_call.1} parent=5 // pred_check_branch
        %304 = sbr.rel (%p301) target = $region44
      $region43: #{tpu_custom_call.1} parent=5 // pred_region
        %s305 = ssub.s32 %s20, 1
        // Predicated region
        $region45: #{tpu_custom_call.1} parent=43 // pred_check
          %p306 = pneg %p58
        $region46: #{tpu_custom_call.1} parent=43 // pred_check_branch
          %308 = sbr.rel (%p306) target = $region48
        $region47: #{tpu_custom_call.1} parent=43 // pred_region
          %310 = dma.done [#allocation3], 32
        $region48: #{tpu_custom_call.1} parent=43 // pred_fallthru
          _
        %s311 = sand.u32 %s25, 1
        %s312 = scalar_lea.sflag [#allocation6], %s311
        %s313 = sand.u32 %s73, 1
        %s314 = smul.addr %s313, 64
        %s315 = scalar_lea.vmem [#allocation5], %s314
        // Predicated region
        $region49: #{tpu_custom_call.1} parent=43 // pred_check
          %p316 = pneg %p86
        $region50: #{tpu_custom_call.1} parent=43 // pred_check_branch
          %318 = sbr.rel (%p316) target = $region52
        $region51: #{tpu_custom_call.1} parent=43 // pred_region
          %320 = dma.done %s312, 1024
        $region52: #{tpu_custom_call.1} parent=43 // pred_fallthru
          _
        // Predicated region
        $region53: #{tpu_custom_call.1} parent=43 // pred_check
          %p321 = pneg %p107
        $region54: #{tpu_custom_call.1} parent=43 // pred_check_branch
          %323 = sbr.rel (%p321) target = $region56
        $region55: #{tpu_custom_call.1} parent=43 // pred_region
          %325 = dma.done [#allocation6], 32768
        $region56: #{tpu_custom_call.1} parent=43 // pred_fallthru
          _
        // Predicated region
        $region57: #{tpu_custom_call.1} parent=43 // pred_check
          %p326 = pneg %p128
        $region58: #{tpu_custom_call.1} parent=43 // pred_check_branch
          %328 = sbr.rel (%p326) target = $region60
        $region59: #{tpu_custom_call.1} parent=43 // pred_region
          %330 = dma.done [#allocation9], 128
        $region60: #{tpu_custom_call.1} parent=43 // pred_fallthru
          _
        // Predicated region
        $region61: #{tpu_custom_call.1} parent=43 // pred_check
          %p331 = pneg %p149
        $region62: #{tpu_custom_call.1} parent=43 // pred_check_branch
          %333 = sbr.rel (%p331) target = $region64
        $region63: #{tpu_custom_call.1} parent=43 // pred_region
          %335 = dma.done [#allocation9], 16384
        $region64: #{tpu_custom_call.1} parent=43 // pred_fallthru
          _
        %p336 = pneg %p58
        %p337 = pneg %p55
        %s338 = sand.u32 %s25, 1
        %s339 = scalar_lea.sflag [#allocation6], %s338
        %s340 = sand.u32 %s73, 1
        %s341 = smul.addr %s340, 64
        %s342 = scalar_lea.vmem [#allocation5], %s341
        %p343 = pneg %p86
        %p344 = pneg %p83
        %p345 = pneg %p107
        %p346 = pneg %p104
        %p347 = pneg %p128
        %p348 = pneg %p125
        %p349 = pneg %p149
        %p350 = pneg %p146
        %p351 = pneg %p170
        %p352 = pneg %p167
        %p353 = pneg %p198
        %p354 = pneg %p195
        %s355 = sand.u32 %s185, 1
        %s356 = scalar_lea.sflag [#allocation4], %s355
        %s357 = sand.u32 %s185, 1
        %s358 = smul.addr %s357, 64
        %s359 = scalar_lea.vmem [#allocation11], %s358
        %s360 = smul.u32 4, %s30
        %s361 = smul.u32 4, %s30
        %v362 = vld [vmem:[#allocation2] sm:$0x3]
        %v363 = vld [vmem:[#allocation7] sm:$0xff]
        %v364 = vld [vmem:[#allocation7 + $0x8] sm:$0xff]
        %v365 = vld [vmem:[#allocation7 + $0x10] sm:$0xff]
        %v366 = vld [vmem:[#allocation7 + $0x18] sm:$0xff]
        %v367 = vld [vmem:[#allocation7 + $0x20] sm:$0xff]
        %v368 = vld [vmem:[#allocation7 + $0x28] sm:$0xff]
        %v369 = vld [vmem:[#allocation7 + $0x30] sm:$0xff]
        %v370 = vld [vmem:[#allocation7 + $0x38] sm:$0xff]
        %v371 = vld [vmem:[#allocation7 + $0x40] sm:$0xff]
        %v372 = vld [vmem:[#allocation7 + $0x48] sm:$0xff]
        %v373 = vld [vmem:[#allocation7 + $0x50] sm:$0xff]
        %v374 = vld [vmem:[#allocation7 + $0x58] sm:$0xff]
        %v375 = vld [vmem:[#allocation7 + $0x60] sm:$0xff]
        %v376 = vld [vmem:[#allocation7 + $0x68] sm:$0xff]
        %v377 = vld [vmem:[#allocation7 + $0x70] sm:$0xff]
        %v378 = vld [vmem:[#allocation7 + $0x78] sm:$0xff]
        %v379 = vld [vmem:[#allocation7 + $0x80] sm:$0xff]
        %v380 = vld [vmem:[#allocation7 + $0x88] sm:$0xff]
        %v381 = vld [vmem:[#allocation7 + $0x90] sm:$0xff]
        %v382 = vld [vmem:[#allocation7 + $0x98] sm:$0xff]
        %v383 = vld [vmem:[#allocation7 + $0xa0] sm:$0xff]
        %v384 = vld [vmem:[#allocation7 + $0xa8] sm:$0xff]
        %v385 = vld [vmem:[#allocation7 + $0xb0] sm:$0xff]
        %v386 = vld [vmem:[#allocation7 + $0xb8] sm:$0xff]
        %v387 = vld [vmem:[#allocation7 + $0xc0] sm:$0xff]
        %v388 = vld [vmem:[#allocation7 + $0xc8] sm:$0xff]
        %v389 = vld [vmem:[#allocation7 + $0xd0] sm:$0xff]
        %v390 = vld [vmem:[#allocation7 + $0xd8] sm:$0xff]
        %v391 = vld [vmem:[#allocation7 + $0xe0] sm:$0xff]
        %v392 = vld [vmem:[#allocation7 + $0xe8] sm:$0xff]
        %v393 = vld [vmem:[#allocation7 + $0xf0] sm:$0xff]
        %v394 = vld [vmem:[#allocation7 + $0xf8] sm:$0xff]
        %v395 = vld [vmem:[#allocation7 + $0x100] sm:$0xff]
        %v396 = vld [vmem:[#allocation7 + $0x108] sm:$0xff]
        %v397 = vld [vmem:[#allocation7 + $0x110] sm:$0xff]
        %v398 = vld [vmem:[#allocation7 + $0x118] sm:$0xff]
        %v399 = vld [vmem:[#allocation7 + $0x120] sm:$0xff]
        %v400 = vld [vmem:[#allocation7 + $0x128] sm:$0xff]
        %v401 = vld [vmem:[#allocation7 + $0x130] sm:$0xff]
        %v402 = vld [vmem:[#allocation7 + $0x138] sm:$0xff]
        %v403 = vld [vmem:[#allocation7 + $0x140] sm:$0xff]
        %v404 = vld [vmem:[#allocation7 + $0x148] sm:$0xff]
        %v405 = vld [vmem:[#allocation7 + $0x150] sm:$0xff]
        %v406 = vld [vmem:[#allocation7 + $0x158] sm:$0xff]
        %v407 = vld [vmem:[#allocation7 + $0x160] sm:$0xff]
        %v408 = vld [vmem:[#allocation7 + $0x168] sm:$0xff]
        %v409 = vld [vmem:[#allocation7 + $0x170] sm:$0xff]
        %v410 = vld [vmem:[#allocation7 + $0x178] sm:$0xff]
        %v411 = vld [vmem:[#allocation7 + $0x180] sm:$0xff]
        %v412 = vld [vmem:[#allocation7 + $0x188] sm:$0xff]
        %v413 = vld [vmem:[#allocation7 + $0x190] sm:$0xff]
        %v414 = vld [vmem:[#allocation7 + $0x198] sm:$0xff]
        %v415 = vld [vmem:[#allocation7 + $0x1a0] sm:$0xff]
        %v416 = vld [vmem:[#allocation7 + $0x1a8] sm:$0xff]
        %v417 = vld [vmem:[#allocation7 + $0x1b0] sm:$0xff]
        %v418 = vld [vmem:[#allocation7 + $0x1b8] sm:$0xff]
        %v419 = vld [vmem:[#allocation7 + $0x1c0] sm:$0xff]
        %v420 = vld [vmem:[#allocation7 + $0x1c8] sm:$0xff]
        %v421 = vld [vmem:[#allocation7 + $0x1d0] sm:$0xff]
        %v422 = vld [vmem:[#allocation7 + $0x1d8] sm:$0xff]
        %v423 = vld [vmem:[#allocation7 + $0x1e0] sm:$0xff]
        %v424 = vld [vmem:[#allocation7 + $0x1e8] sm:$0xff]
        %v425 = vld [vmem:[#allocation7 + $0x1f0] sm:$0xff]
        %v426 = vld [vmem:[#allocation7 + $0x1f8] sm:$0xff]
        %v427 = vld [vmem:[#allocation7 + $0x200] sm:$0xff]
        %v428 = vld [vmem:[#allocation7 + $0x208] sm:$0xff]
        %v429 = vld [vmem:[#allocation7 + $0x210] sm:$0xff]
        %v430 = vld [vmem:[#allocation7 + $0x218] sm:$0xff]
        %v431 = vld [vmem:[#allocation7 + $0x220] sm:$0xff]
        %v432 = vld [vmem:[#allocation7 + $0x228] sm:$0xff]
        %v433 = vld [vmem:[#allocation7 + $0x230] sm:$0xff]
        %v434 = vld [vmem:[#allocation7 + $0x238] sm:$0xff]
        %v435 = vld [vmem:[#allocation7 + $0x240] sm:$0xff]
        %v436 = vld [vmem:[#allocation7 + $0x248] sm:$0xff]
        %v437 = vld [vmem:[#allocation7 + $0x250] sm:$0xff]
        %v438 = vld [vmem:[#allocation7 + $0x258] sm:$0xff]
        %v439 = vld [vmem:[#allocation7 + $0x260] sm:$0xff]
        %v440 = vld [vmem:[#allocation7 + $0x268] sm:$0xff]
        %v441 = vld [vmem:[#allocation7 + $0x270] sm:$0xff]
        %v442 = vld [vmem:[#allocation7 + $0x278] sm:$0xff]
        %v443 = vld [vmem:[#allocation7 + $0x280] sm:$0xff]
        %v444 = vld [vmem:[#allocation7 + $0x288] sm:$0xff]
        %v445 = vld [vmem:[#allocation7 + $0x290] sm:$0xff]
        %v446 = vld [vmem:[#allocation7 + $0x298] sm:$0xff]
        %v447 = vld [vmem:[#allocation7 + $0x2a0] sm:$0xff]
        %v448 = vld [vmem:[#allocation7 + $0x2a8] sm:$0xff]
        %v449 = vld [vmem:[#allocation7 + $0x2b0] sm:$0xff]
        %v450 = vld [vmem:[#allocation7 + $0x2b8] sm:$0xff]
        %v451 = vld [vmem:[#allocation7 + $0x2c0] sm:$0xff]
        %v452 = vld [vmem:[#allocation7 + $0x2c8] sm:$0xff]
        %v453 = vld [vmem:[#allocation7 + $0x2d0] sm:$0xff]
        %v454 = vld [vmem:[#allocation7 + $0x2d8] sm:$0xff]
        %v455 = vld [vmem:[#allocation7 + $0x2e0] sm:$0xff]
        %v456 = vld [vmem:[#allocation7 + $0x2e8] sm:$0xff]
        %v457 = vld [vmem:[#allocation7 + $0x2f0] sm:$0xff]
        %v458 = vld [vmem:[#allocation7 + $0x2f8] sm:$0xff]
        %v459 = vld [vmem:[#allocation7 + $0x300] sm:$0xff]
        %v460 = vld [vmem:[#allocation7 + $0x308] sm:$0xff]
        %v461 = vld [vmem:[#allocation7 + $0x310] sm:$0xff]
        %v462 = vld [vmem:[#allocation7 + $0x318] sm:$0xff]
        %v463 = vld [vmem:[#allocation7 + $0x320] sm:$0xff]
        %v464 = vld [vmem:[#allocation7 + $0x328] sm:$0xff]
        %v465 = vld [vmem:[#allocation7 + $0x330] sm:$0xff]
        %v466 = vld [vmem:[#allocation7 + $0x338] sm:$0xff]
        %v467 = vld [vmem:[#allocation7 + $0x340] sm:$0xff]
        %v468 = vld [vmem:[#allocation7 + $0x348] sm:$0xff]
        %v469 = vld [vmem:[#allocation7 + $0x350] sm:$0xff]
        %v470 = vld [vmem:[#allocation7 + $0x358] sm:$0xff]
        %v471 = vld [vmem:[#allocation7 + $0x360] sm:$0xff]
        %v472 = vld [vmem:[#allocation7 + $0x368] sm:$0xff]
        %v473 = vld [vmem:[#allocation7 + $0x370] sm:$0xff]
        %v474 = vld [vmem:[#allocation7 + $0x378] sm:$0xff]
        %v475 = vld [vmem:[#allocation7 + $0x380] sm:$0xff]
        %v476 = vld [vmem:[#allocation7 + $0x388] sm:$0xff]
        %v477 = vld [vmem:[#allocation7 + $0x390] sm:$0xff]
        %v478 = vld [vmem:[#allocation7 + $0x398] sm:$0xff]
        %v479 = vld [vmem:[#allocation7 + $0x3a0] sm:$0xff]
        %v480 = vld [vmem:[#allocation7 + $0x3a8] sm:$0xff]
        %v481 = vld [vmem:[#allocation7 + $0x3b0] sm:$0xff]
        %v482 = vld [vmem:[#allocation7 + $0x3b8] sm:$0xff]
        %v483 = vld [vmem:[#allocation7 + $0x3c0] sm:$0xff]
        %v484 = vld [vmem:[#allocation7 + $0x3c8] sm:$0xff]
        %v485 = vld [vmem:[#allocation7 + $0x3d0] sm:$0xff]
        %v486 = vld [vmem:[#allocation7 + $0x3d8] sm:$0xff]
        %v487 = vld [vmem:[#allocation7 + $0x3e0] sm:$0xff]
        %v488 = vld [vmem:[#allocation7 + $0x3e8] sm:$0xff]
        %v489 = vld [vmem:[#allocation7 + $0x3f0] sm:$0xff]
        %v490 = vld [vmem:[#allocation7 + $0x3f8] sm:$0xff]
        %v491 = vld [vmem:[#allocation7 + $0x400] sm:$0xff]
        %v492 = vld [vmem:[#allocation7 + $0x408] sm:$0xff]
        %v493 = vld [vmem:[#allocation7 + $0x410] sm:$0xff]
        %v494 = vld [vmem:[#allocation7 + $0x418] sm:$0xff]
        %v495 = vld [vmem:[#allocation7 + $0x420] sm:$0xff]
        %v496 = vld [vmem:[#allocation7 + $0x428] sm:$0xff]
        %v497 = vld [vmem:[#allocation7 + $0x430] sm:$0xff]
        %v498 = vld [vmem:[#allocation7 + $0x438] sm:$0xff]
        %v499 = vld [vmem:[#allocation7 + $0x440] sm:$0xff]
        %v500 = vld [vmem:[#allocation7 + $0x448] sm:$0xff]
        %v501 = vld [vmem:[#allocation7 + $0x450] sm:$0xff]
        %v502 = vld [vmem:[#allocation7 + $0x458] sm:$0xff]
        %v503 = vld [vmem:[#allocation7 + $0x460] sm:$0xff]
        %v504 = vld [vmem:[#allocation7 + $0x468] sm:$0xff]
        %v505 = vld [vmem:[#allocation7 + $0x470] sm:$0xff]
        %v506 = vld [vmem:[#allocation7 + $0x478] sm:$0xff]
        %v507 = vld [vmem:[#allocation7 + $0x480] sm:$0xff]
        %v508 = vld [vmem:[#allocation7 + $0x488] sm:$0xff]
        %v509 = vld [vmem:[#allocation7 + $0x490] sm:$0xff]
        %v510 = vld [vmem:[#allocation7 + $0x498] sm:$0xff]
        %v511 = vld [vmem:[#allocation7 + $0x4a0] sm:$0xff]
        %v512 = vld [vmem:[#allocation7 + $0x4a8] sm:$0xff]
        %v513 = vld [vmem:[#allocation7 + $0x4b0] sm:$0xff]
        %v514 = vld [vmem:[#allocation7 + $0x4b8] sm:$0xff]
        %v515 = vld [vmem:[#allocation7 + $0x4c0] sm:$0xff]
        %v516 = vld [vmem:[#allocation7 + $0x4c8] sm:$0xff]
        %v517 = vld [vmem:[#allocation7 + $0x4d0] sm:$0xff]
        %v518 = vld [vmem:[#allocation7 + $0x4d8] sm:$0xff]
        %v519 = vld [vmem:[#allocation7 + $0x4e0] sm:$0xff]
        %v520 = vld [vmem:[#allocation7 + $0x4e8] sm:$0xff]
        %v521 = vld [vmem:[#allocation7 + $0x4f0] sm:$0xff]
        %v522 = vld [vmem:[#allocation7 + $0x4f8] sm:$0xff]
        %v523 = vld [vmem:[#allocation7 + $0x500] sm:$0xff]
        %v524 = vld [vmem:[#allocation7 + $0x508] sm:$0xff]
        %v525 = vld [vmem:[#allocation7 + $0x510] sm:$0xff]
        %v526 = vld [vmem:[#allocation7 + $0x518] sm:$0xff]
        %v527 = vld [vmem:[#allocation7 + $0x520] sm:$0xff]
        %v528 = vld [vmem:[#allocation7 + $0x528] sm:$0xff]
        %v529 = vld [vmem:[#allocation7 + $0x530] sm:$0xff]
        %v530 = vld [vmem:[#allocation7 + $0x538] sm:$0xff]
        %v531 = vld [vmem:[#allocation7 + $0x540] sm:$0xff]
        %v532 = vld [vmem:[#allocation7 + $0x548] sm:$0xff]
        %v533 = vld [vmem:[#allocation7 + $0x550] sm:$0xff]
        %v534 = vld [vmem:[#allocation7 + $0x558] sm:$0xff]
        %v535 = vld [vmem:[#allocation7 + $0x560] sm:$0xff]
        %v536 = vld [vmem:[#allocation7 + $0x568] sm:$0xff]
        %v537 = vld [vmem:[#allocation7 + $0x570] sm:$0xff]
        %v538 = vld [vmem:[#allocation7 + $0x578] sm:$0xff]
        %v539 = vld [vmem:[#allocation7 + $0x580] sm:$0xff]
        %v540 = vld [vmem:[#allocation7 + $0x588] sm:$0xff]
        %v541 = vld [vmem:[#allocation7 + $0x590] sm:$0xff]
        %v542 = vld [vmem:[#allocation7 + $0x598] sm:$0xff]
        %v543 = vld [vmem:[#allocation7 + $0x5a0] sm:$0xff]
        %v544 = vld [vmem:[#allocation7 + $0x5a8] sm:$0xff]
        %v545 = vld [vmem:[#allocation7 + $0x5b0] sm:$0xff]
        %v546 = vld [vmem:[#allocation7 + $0x5b8] sm:$0xff]
        %v547 = vld [vmem:[#allocation7 + $0x5c0] sm:$0xff]
        %v548 = vld [vmem:[#allocation7 + $0x5c8] sm:$0xff]
        %v549 = vld [vmem:[#allocation7 + $0x5d0] sm:$0xff]
        %v550 = vld [vmem:[#allocation7 + $0x5d8] sm:$0xff]
        %v551 = vld [vmem:[#allocation7 + $0x5e0] sm:$0xff]
        %v552 = vld [vmem:[#allocation7 + $0x5e8] sm:$0xff]
        %v553 = vld [vmem:[#allocation7 + $0x5f0] sm:$0xff]
        %v554 = vld [vmem:[#allocation7 + $0x5f8] sm:$0xff]
        %v555 = vld [vmem:[#allocation7 + $0x600] sm:$0xff]
        %v556 = vld [vmem:[#allocation7 + $0x608] sm:$0xff]
        %v557 = vld [vmem:[#allocation7 + $0x610] sm:$0xff]
        %v558 = vld [vmem:[#allocation7 + $0x618] sm:$0xff]
        %v559 = vld [vmem:[#allocation7 + $0x620] sm:$0xff]
        %v560 = vld [vmem:[#allocation7 + $0x628] sm:$0xff]
        %v561 = vld [vmem:[#allocation7 + $0x630] sm:$0xff]
        %v562 = vld [vmem:[#allocation7 + $0x638] sm:$0xff]
        %v563 = vld [vmem:[#allocation7 + $0x640] sm:$0xff]
        %v564 = vld [vmem:[#allocation7 + $0x648] sm:$0xff]
        %v565 = vld [vmem:[#allocation7 + $0x650] sm:$0xff]
        %v566 = vld [vmem:[#allocation7 + $0x658] sm:$0xff]
        %v567 = vld [vmem:[#allocation7 + $0x660] sm:$0xff]
        %v568 = vld [vmem:[#allocation7 + $0x668] sm:$0xff]
        %v569 = vld [vmem:[#allocation7 + $0x670] sm:$0xff]
        %v570 = vld [vmem:[#allocation7 + $0x678] sm:$0xff]
        %v571 = vld [vmem:[#allocation7 + $0x680] sm:$0xff]
        %v572 = vld [vmem:[#allocation7 + $0x688] sm:$0xff]
        %v573 = vld [vmem:[#allocation7 + $0x690] sm:$0xff]
        %v574 = vld [vmem:[#allocation7 + $0x698] sm:$0xff]
        %v575 = vld [vmem:[#allocation7 + $0x6a0] sm:$0xff]
        %v576 = vld [vmem:[#allocation7 + $0x6a8] sm:$0xff]
        %v577 = vld [vmem:[#allocation7 + $0x6b0] sm:$0xff]
        %v578 = vld [vmem:[#allocation7 + $0x6b8] sm:$0xff]
        %v579 = vld [vmem:[#allocation7 + $0x6c0] sm:$0xff]
        %v580 = vld [vmem:[#allocation7 + $0x6c8] sm:$0xff]
        %v581 = vld [vmem:[#allocation7 + $0x6d0] sm:$0xff]
        %v582 = vld [vmem:[#allocation7 + $0x6d8] sm:$0xff]
        %v583 = vld [vmem:[#allocation7 + $0x6e0] sm:$0xff]
        %v584 = vld [vmem:[#allocation7 + $0x6e8] sm:$0xff]
        %v585 = vld [vmem:[#allocation7 + $0x6f0] sm:$0xff]
        %v586 = vld [vmem:[#allocation7 + $0x6f8] sm:$0xff]
        %v587 = vld [vmem:[#allocation7 + $0x700] sm:$0xff]
        %v588 = vld [vmem:[#allocation7 + $0x708] sm:$0xff]
        %v589 = vld [vmem:[#allocation7 + $0x710] sm:$0xff]
        %v590 = vld [vmem:[#allocation7 + $0x718] sm:$0xff]
        %v591 = vld [vmem:[#allocation7 + $0x720] sm:$0xff]
        %v592 = vld [vmem:[#allocation7 + $0x728] sm:$0xff]
        %v593 = vld [vmem:[#allocation7 + $0x730] sm:$0xff]
        %v594 = vld [vmem:[#allocation7 + $0x738] sm:$0xff]
        %v595 = vld [vmem:[#allocation7 + $0x740] sm:$0xff]
        %v596 = vld [vmem:[#allocation7 + $0x748] sm:$0xff]
        %v597 = vld [vmem:[#allocation7 + $0x750] sm:$0xff]
        %v598 = vld [vmem:[#allocation7 + $0x758] sm:$0xff]
        %v599 = vld [vmem:[#allocation7 + $0x760] sm:$0xff]
        %v600 = vld [vmem:[#allocation7 + $0x768] sm:$0xff]
        %v601 = vld [vmem:[#allocation7 + $0x770] sm:$0xff]
        %v602 = vld [vmem:[#allocation7 + $0x778] sm:$0xff]
        %v603 = vld [vmem:[#allocation7 + $0x780] sm:$0xff]
        %v604 = vld [vmem:[#allocation7 + $0x788] sm:$0xff]
        %v605 = vld [vmem:[#allocation7 + $0x790] sm:$0xff]
        %v606 = vld [vmem:[#allocation7 + $0x798] sm:$0xff]
        %v607 = vld [vmem:[#allocation7 + $0x7a0] sm:$0xff]
        %v608 = vld [vmem:[#allocation7 + $0x7a8] sm:$0xff]
        %v609 = vld [vmem:[#allocation7 + $0x7b0] sm:$0xff]
        %v610 = vld [vmem:[#allocation7 + $0x7b8] sm:$0xff]
        %v611 = vld [vmem:[#allocation7 + $0x7c0] sm:$0xff]
        %v612 = vld [vmem:[#allocation7 + $0x7c8] sm:$0xff]
        %v613 = vld [vmem:[#allocation7 + $0x7d0] sm:$0xff]
        %v614 = vld [vmem:[#allocation7 + $0x7d8] sm:$0xff]
        %v615 = vld [vmem:[#allocation7 + $0x7e0] sm:$0xff]
        %v616 = vld [vmem:[#allocation7 + $0x7e8] sm:$0xff]
        %v617 = vld [vmem:[#allocation7 + $0x7f0] sm:$0xff]
        %v618 = vld [vmem:[#allocation7 + $0x7f8] sm:$0xff]
        %v619 = vld [vmem:[#allocation8] sm:$0xff]
        %v621 = vperm.slane %v362, 0
        %v622 = vperm.slane %v362, 1
        %v626 = vperm.slane %v619, 0
        %v627 = vperm.slane %v619, 1
        %v628 = vperm.slane %v619, 2
        %v629 = vperm.slane %v619, 3
        %v630 = vperm.slane %v619, 4
        %v631 = vperm.slane %v619, 5
        %v632 = vperm.slane %v619, 6
        %v633 = vperm.slane %v619, 7
        %642 = vmatpush.msra.mxu0 %v483
        %643 = vmatpush.msra.mxu0 %v475
        %644 = vmatpush.msra.mxu0 %v467
        %645 = vmatpush.msra.mxu0 %v459
        %646 = vmatpush.msra.mxu0 %v451
        %647 = vmatpush.msra.mxu0 %v443
        %648 = vmatpush.msra.mxu0 %v435
        %649 = vmatpush.msra.mxu0 %v427
        %650 = vmatpush.msra.mxu0 %v419
        %651 = vmatpush.msra.mxu0 %v411
        %652 = vmatpush.msra.mxu0 %v403
        %653 = vmatpush.msra.mxu0 %v395
        %654 = vmatpush.msra.mxu0 %v387
        %655 = vmatpush.msra.mxu0 %v379
        %656 = vmatpush.msra.mxu0 %v371
        %657 = vmatpush.msra.mxu0 %v363
        %658 = vmatmul.f32.gmra.mxu0 %v621
        %v659 = vpop.f32.mrf.mxu0
        %v660 = vadd.f32 %v626, %v659
        %661 = vdwg.mxu0
        %662 = vmatpush.msra.mxu0 %v611
        %663 = vmatpush.msra.mxu0 %v603
        %664 = vmatpush.msra.mxu0 %v595
        %665 = vmatpush.msra.mxu0 %v587
        %666 = vmatpush.msra.mxu0 %v579
        %667 = vmatpush.msra.mxu0 %v571
        %668 = vmatpush.msra.mxu0 %v563
        %669 = vmatpush.msra.mxu0 %v555
        %670 = vmatpush.msra.mxu0 %v547
        %671 = vmatpush.msra.mxu0 %v539
        %672 = vmatpush.msra.mxu0 %v531
        %673 = vmatpush.msra.mxu0 %v523
        %674 = vmatpush.msra.mxu0 %v515
        %675 = vmatpush.msra.mxu0 %v507
        %676 = vmatpush.msra.mxu0 %v499
        %677 = vmatpush.msra.mxu0 %v491
        %678 = vmatmul.f32.gmra.mxu0 %v622
        %v679 = vpop.f32.mrf.mxu0
        %v680 = vadd.f32 %v660, %v679
        %681 = vdwg.mxu0
        %682 = vmatpush.msra.mxu0 %v484
        %683 = vmatpush.msra.mxu0 %v476
        %684 = vmatpush.msra.mxu0 %v468
        %685 = vmatpush.msra.mxu0 %v460
        %686 = vmatpush.msra.mxu0 %v452
        %687 = vmatpush.msra.mxu0 %v444
        %688 = vmatpush.msra.mxu0 %v436
        %689 = vmatpush.msra.mxu0 %v428
        %690 = vmatpush.msra.mxu0 %v420
        %691 = vmatpush.msra.mxu0 %v412
        %692 = vmatpush.msra.mxu0 %v404
        %693 = vmatpush.msra.mxu0 %v396
        %694 = vmatpush.msra.mxu0 %v388
        %695 = vmatpush.msra.mxu0 %v380
        %696 = vmatpush.msra.mxu0 %v372
        %697 = vmatpush.msra.mxu0 %v364
        %698 = vmatmul.f32.gmra.mxu0 %v621
        %v699 = vpop.f32.mrf.mxu0
        %v700 = vadd.f32 %v627, %v699
        %701 = vdwg.mxu0
        %702 = vmatpush.msra.mxu0 %v612
        %703 = vmatpush.msra.mxu0 %v604
        %704 = vmatpush.msra.mxu0 %v596
        %705 = vmatpush.msra.mxu0 %v588
        %706 = vmatpush.msra.mxu0 %v580
        %707 = vmatpush.msra.mxu0 %v572
        %708 = vmatpush.msra.mxu0 %v564
        %709 = vmatpush.msra.mxu0 %v556
        %710 = vmatpush.msra.mxu0 %v548
        %711 = vmatpush.msra.mxu0 %v540
        %712 = vmatpush.msra.mxu0 %v532
        %713 = vmatpush.msra.mxu0 %v524
        %714 = vmatpush.msra.mxu0 %v516
        %715 = vmatpush.msra.mxu0 %v508
        %716 = vmatpush.msra.mxu0 %v500
        %717 = vmatpush.msra.mxu0 %v492
        %718 = vmatmul.f32.gmra.mxu0 %v622
        %v719 = vpop.f32.mrf.mxu0
        %v720 = vadd.f32 %v700, %v719
        %721 = vdwg.mxu0
        %722 = vmatpush.msra.mxu0 %v485
        %723 = vmatpush.msra.mxu0 %v477
        %724 = vmatpush.msra.mxu0 %v469
        %725 = vmatpush.msra.mxu0 %v461
        %726 = vmatpush.msra.mxu0 %v453
        %727 = vmatpush.msra.mxu0 %v445
        %728 = vmatpush.msra.mxu0 %v437
        %729 = vmatpush.msra.mxu0 %v429
        %730 = vmatpush.msra.mxu0 %v421
        %731 = vmatpush.msra.mxu0 %v413
        %732 = vmatpush.msra.mxu0 %v405
        %733 = vmatpush.msra.mxu0 %v397
        %734 = vmatpush.msra.mxu0 %v389
        %735 = vmatpush.msra.mxu0 %v381
        %736 = vmatpush.msra.mxu0 %v373
        %737 = vmatpush.msra.mxu0 %v365
        %738 = vmatmul.f32.gmra.mxu0 %v621
        %v739 = vpop.f32.mrf.mxu0
        %v740 = vadd.f32 %v628, %v739
        %741 = vdwg.mxu0
        %742 = vmatpush.msra.mxu0 %v613
        %743 = vmatpush.msra.mxu0 %v605
        %744 = vmatpush.msra.mxu0 %v597
        %745 = vmatpush.msra.mxu0 %v589
        %746 = vmatpush.msra.mxu0 %v581
        %747 = vmatpush.msra.mxu0 %v573
        %748 = vmatpush.msra.mxu0 %v565
        %749 = vmatpush.msra.mxu0 %v557
        %750 = vmatpush.msra.mxu0 %v549
        %751 = vmatpush.msra.mxu0 %v541
        %752 = vmatpush.msra.mxu0 %v533
        %753 = vmatpush.msra.mxu0 %v525
        %754 = vmatpush.msra.mxu0 %v517
        %755 = vmatpush.msra.mxu0 %v509
        %756 = vmatpush.msra.mxu0 %v501
        %757 = vmatpush.msra.mxu0 %v493
        %758 = vmatmul.f32.gmra.mxu0 %v622
        %v759 = vpop.f32.mrf.mxu0
        %v760 = vadd.f32 %v740, %v759
        %761 = vdwg.mxu0
        %762 = vmatpush.msra.mxu0 %v486
        %763 = vmatpush.msra.mxu0 %v478
        %764 = vmatpush.msra.mxu0 %v470
        %765 = vmatpush.msra.mxu0 %v462
        %766 = vmatpush.msra.mxu0 %v454
        %767 = vmatpush.msra.mxu0 %v446
        %768 = vmatpush.msra.mxu0 %v438
        %769 = vmatpush.msra.mxu0 %v430
        %770 = vmatpush.msra.mxu0 %v422
        %771 = vmatpush.msra.mxu0 %v414
        %772 = vmatpush.msra.mxu0 %v406
        %773 = vmatpush.msra.mxu0 %v398
        %774 = vmatpush.msra.mxu0 %v390
        %775 = vmatpush.msra.mxu0 %v382
        %776 = vmatpush.msra.mxu0 %v374
        %777 = vmatpush.msra.mxu0 %v366
        %778 = vmatmul.f32.gmra.mxu0 %v621
        %v779 = vpop.f32.mrf.mxu0
        %v780 = vadd.f32 %v629, %v779
        %781 = vdwg.mxu0
        %782 = vmatpush.msra.mxu0 %v614
        %783 = vmatpush.msra.mxu0 %v606
        %784 = vmatpush.msra.mxu0 %v598
        %785 = vmatpush.msra.mxu0 %v590
        %786 = vmatpush.msra.mxu0 %v582
        %787 = vmatpush.msra.mxu0 %v574
        %788 = vmatpush.msra.mxu0 %v566
        %789 = vmatpush.msra.mxu0 %v558
        %790 = vmatpush.msra.mxu0 %v550
        %791 = vmatpush.msra.mxu0 %v542
        %792 = vmatpush.msra.mxu0 %v534
        %793 = vmatpush.msra.mxu0 %v526
        %794 = vmatpush.msra.mxu0 %v518
        %795 = vmatpush.msra.mxu0 %v510
        %796 = vmatpush.msra.mxu0 %v502
        %797 = vmatpush.msra.mxu0 %v494
        %798 = vmatmul.f32.gmra.mxu0 %v622
        %v799 = vpop.f32.mrf.mxu0
        %v800 = vadd.f32 %v780, %v799
        %801 = vdwg.mxu0
        %802 = vmatpush.msra.mxu0 %v487
        %803 = vmatpush.msra.mxu0 %v479
        %804 = vmatpush.msra.mxu0 %v471
        %805 = vmatpush.msra.mxu0 %v463
        %806 = vmatpush.msra.mxu0 %v455
        %807 = vmatpush.msra.mxu0 %v447
        %808 = vmatpush.msra.mxu0 %v439
        %809 = vmatpush.msra.mxu0 %v431
        %810 = vmatpush.msra.mxu0 %v423
        %811 = vmatpush.msra.mxu0 %v415
        %812 = vmatpush.msra.mxu0 %v407
        %813 = vmatpush.msra.mxu0 %v399
        %814 = vmatpush.msra.mxu0 %v391
        %815 = vmatpush.msra.mxu0 %v383
        %816 = vmatpush.msra.mxu0 %v375
        %817 = vmatpush.msra.mxu0 %v367
        %818 = vmatmul.f32.gmra.mxu0 %v621
        %v819 = vpop.f32.mrf.mxu0
        %v820 = vadd.f32 %v630, %v819
        %821 = vdwg.mxu0
        %822 = vmatpush.msra.mxu0 %v615
        %823 = vmatpush.msra.mxu0 %v607
        %824 = vmatpush.msra.mxu0 %v599
        %825 = vmatpush.msra.mxu0 %v591
        %826 = vmatpush.msra.mxu0 %v583
        %827 = vmatpush.msra.mxu0 %v575
        %828 = vmatpush.msra.mxu0 %v567
        %829 = vmatpush.msra.mxu0 %v559
        %830 = vmatpush.msra.mxu0 %v551
        %831 = vmatpush.msra.mxu0 %v543
        %832 = vmatpush.msra.mxu0 %v535
        %833 = vmatpush.msra.mxu0 %v527
        %834 = vmatpush.msra.mxu0 %v519
        %835 = vmatpush.msra.mxu0 %v511
        %836 = vmatpush.msra.mxu0 %v503
        %837 = vmatpush.msra.mxu0 %v495
        %838 = vmatmul.f32.gmra.mxu0 %v622
        %v839 = vpop.f32.mrf.mxu0
        %v840 = vadd.f32 %v820, %v839
        %841 = vdwg.mxu0
        %842 = vmatpush.msra.mxu0 %v488
        %843 = vmatpush.msra.mxu0 %v480
        %844 = vmatpush.msra.mxu0 %v472
        %845 = vmatpush.msra.mxu0 %v464
        %846 = vmatpush.msra.mxu0 %v456
        %847 = vmatpush.msra.mxu0 %v448
        %848 = vmatpush.msra.mxu0 %v440
        %849 = vmatpush.msra.mxu0 %v432
        %850 = vmatpush.msra.mxu0 %v424
        %851 = vmatpush.msra.mxu0 %v416
        %852 = vmatpush.msra.mxu0 %v408
        %853 = vmatpush.msra.mxu0 %v400
        %854 = vmatpush.msra.mxu0 %v392
        %855 = vmatpush.msra.mxu0 %v384
        %856 = vmatpush.msra.mxu0 %v376
        %857 = vmatpush.msra.mxu0 %v368
        %858 = vmatmul.f32.gmra.mxu0 %v621
        %v859 = vpop.f32.mrf.mxu0
        %v860 = vadd.f32 %v631, %v859
        %861 = vdwg.mxu0
        %862 = vmatpush.msra.mxu0 %v616
        %863 = vmatpush.msra.mxu0 %v608
        %864 = vmatpush.msra.mxu0 %v600
        %865 = vmatpush.msra.mxu0 %v592
        %866 = vmatpush.msra.mxu0 %v584
        %867 = vmatpush.msra.mxu0 %v576
        %868 = vmatpush.msra.mxu0 %v568
        %869 = vmatpush.msra.mxu0 %v560
        %870 = vmatpush.msra.mxu0 %v552
        %871 = vmatpush.msra.mxu0 %v544
        %872 = vmatpush.msra.mxu0 %v536
        %873 = vmatpush.msra.mxu0 %v528
        %874 = vmatpush.msra.mxu0 %v520
        %875 = vmatpush.msra.mxu0 %v512
        %876 = vmatpush.msra.mxu0 %v504
        %877 = vmatpush.msra.mxu0 %v496
        %878 = vmatmul.f32.gmra.mxu0 %v622
        %v879 = vpop.f32.mrf.mxu0
        %v880 = vadd.f32 %v860, %v879
        %881 = vdwg.mxu0
        %882 = vmatpush.msra.mxu0 %v489
        %883 = vmatpush.msra.mxu0 %v481
        %884 = vmatpush.msra.mxu0 %v473
        %885 = vmatpush.msra.mxu0 %v465
        %886 = vmatpush.msra.mxu0 %v457
        %887 = vmatpush.msra.mxu0 %v449
        %888 = vmatpush.msra.mxu0 %v441
        %889 = vmatpush.msra.mxu0 %v433
        %890 = vmatpush.msra.mxu0 %v425
        %891 = vmatpush.msra.mxu0 %v417
        %892 = vmatpush.msra.mxu0 %v409
        %893 = vmatpush.msra.mxu0 %v401
        %894 = vmatpush.msra.mxu0 %v393
        %895 = vmatpush.msra.mxu0 %v385
        %896 = vmatpush.msra.mxu0 %v377
        %897 = vmatpush.msra.mxu0 %v369
        %898 = vmatmul.f32.gmra.mxu0 %v621
        %v899 = vpop.f32.mrf.mxu0
        %v900 = vadd.f32 %v632, %v899
        %901 = vdwg.mxu0
        %902 = vmatpush.msra.mxu0 %v617
        %903 = vmatpush.msra.mxu0 %v609
        %904 = vmatpush.msra.mxu0 %v601
        %905 = vmatpush.msra.mxu0 %v593
        %906 = vmatpush.msra.mxu0 %v585
        %907 = vmatpush.msra.mxu0 %v577
        %908 = vmatpush.msra.mxu0 %v569
        %909 = vmatpush.msra.mxu0 %v561
        %910 = vmatpush.msra.mxu0 %v553
        %911 = vmatpush.msra.mxu0 %v545
        %912 = vmatpush.msra.mxu0 %v537
        %913 = vmatpush.msra.mxu0 %v529
        %914 = vmatpush.msra.mxu0 %v521
        %915 = vmatpush.msra.mxu0 %v513
        %916 = vmatpush.msra.mxu0 %v505
        %917 = vmatpush.msra.mxu0 %v497
        %918 = vmatmul.f32.gmra.mxu0 %v622
        %v919 = vpop.f32.mrf.mxu0
        %v920 = vadd.f32 %v900, %v919
        %921 = vdwg.mxu0
        %922 = vmatpush.msra.mxu0 %v490
        %923 = vmatpush.msra.mxu0 %v482
        %924 = vmatpush.msra.mxu0 %v474
        %925 = vmatpush.msra.mxu0 %v466
        %926 = vmatpush.msra.mxu0 %v458
        %927 = vmatpush.msra.mxu0 %v450
        %928 = vmatpush.msra.mxu0 %v442
        %929 = vmatpush.msra.mxu0 %v434
        %930 = vmatpush.msra.mxu0 %v426
        %931 = vmatpush.msra.mxu0 %v418
        %932 = vmatpush.msra.mxu0 %v410
        %933 = vmatpush.msra.mxu0 %v402
        %934 = vmatpush.msra.mxu0 %v394
        %935 = vmatpush.msra.mxu0 %v386
        %936 = vmatpush.msra.mxu0 %v378
        %937 = vmatpush.msra.mxu0 %v370
        %938 = vmatmul.f32.gmra.mxu0 %v621
        %v939 = vpop.f32.mrf.mxu0
        %v940 = vadd.f32 %v633, %v939
        %941 = vdwg.mxu0
        %942 = vmatpush.msra.mxu0 %v618
        %943 = vmatpush.msra.mxu0 %v610
        %944 = vmatpush.msra.mxu0 %v602
        %945 = vmatpush.msra.mxu0 %v594
        %946 = vmatpush.msra.mxu0 %v586
        %947 = vmatpush.msra.mxu0 %v578
        %948 = vmatpush.msra.mxu0 %v570
        %949 = vmatpush.msra.mxu0 %v562
        %950 = vmatpush.msra.mxu0 %v554
        %951 = vmatpush.msra.mxu0 %v546
        %952 = vmatpush.msra.mxu0 %v538
        %953 = vmatpush.msra.mxu0 %v530
        %954 = vmatpush.msra.mxu0 %v522
        %955 = vmatpush.msra.mxu0 %v514
        %956 = vmatpush.msra.mxu0 %v506
        %957 = vmatpush.msra.mxu0 %v498
        %958 = vmatmul.f32.gmra.mxu0 %v622
        %v959 = vpop.f32.mrf.mxu0
        %v960 = vadd.f32 %v940, %v959
        %961 = vdwg.mxu0
        %v962 = vld [vmem:[%s315] sm:$0xff]
        %v963 = vld [vmem:[%s315 + $0x8] sm:$0xff]
        %v964 = vld [vmem:[%s315 + $0x10] sm:$0xff]
        %v965 = vld [vmem:[%s315 + $0x18] sm:$0xff]
        %v966 = vld [vmem:[%s315 + $0x20] sm:$0xff]
        %v967 = vld [vmem:[%s315 + $0x28] sm:$0xff]
        %v968 = vld [vmem:[%s315 + $0x30] sm:$0xff]
        %v969 = vld [vmem:[%s315 + $0x38] sm:$0xff]
        %v970 = vperm.slane %v760, 0
        %v971 = vperm.slane %v800, 0
        %v972 = vmul.f32 %v970, %v962
        %v973 = vmul.f32 %v971, %v963
        %v974 = vmul.f32 %v970, %v964
        %v975 = vmul.f32 %v971, %v965
        %v976 = vmul.f32 %v970, %v966
        %v977 = vmul.f32 %v971, %v967
        %v978 = vmul.f32 %v970, %v968
        %v979 = vmul.f32 %v971, %v969
        %v980 = vperm.slane %v680, 0
        %v981 = vperm.slane %v720, 0
        %v982 = vadd.f32 %v972, %v980
        %v983 = vadd.f32 %v973, %v981
        %v984 = vadd.f32 %v974, %v980
        %v985 = vadd.f32 %v975, %v981
        %v986 = vadd.f32 %v976, %v980
        %v987 = vadd.f32 %v977, %v981
        %v988 = vadd.f32 %v978, %v980
        %v989 = vadd.f32 %v979, %v981
        %v990 = vmax.f32 %v982, 0.0
        %v991 = vmax.f32 %v983, 0.0
        %v992 = vmax.f32 %v984, 0.0
        %v993 = vmax.f32 %v985, 0.0
        %v994 = vmax.f32 %v986, 0.0
        %v995 = vmax.f32 %v987, 0.0
        %v996 = vmax.f32 %v988, 0.0
        %v997 = vmax.f32 %v989, 0.0
        %v998 = vld [vmem:[#allocation10] sm:$0xff]
        %v999 = vld [vmem:[#allocation10 + $0x8] sm:$0xff]
        %v1000 = vld [vmem:[#allocation10 + $0x10] sm:$0xff]
        %v1001 = vld [vmem:[#allocation10 + $0x18] sm:$0xff]
        %v1002 = vld [vmem:[#allocation10 + $0x20] sm:$0xff]
        %v1003 = vld [vmem:[#allocation10 + $0x28] sm:$0xff]
        %v1004 = vld [vmem:[#allocation10 + $0x30] sm:$0xff]
        %v1005 = vld [vmem:[#allocation10 + $0x38] sm:$0xff]
        %v1006 = vld [vmem:[#allocation10 + $0x40] sm:$0xff]
        %v1007 = vld [vmem:[#allocation10 + $0x48] sm:$0xff]
        %v1008 = vld [vmem:[#allocation10 + $0x50] sm:$0xff]
        %v1009 = vld [vmem:[#allocation10 + $0x58] sm:$0xff]
        %v1010 = vld [vmem:[#allocation10 + $0x60] sm:$0xff]
        %v1011 = vld [vmem:[#allocation10 + $0x68] sm:$0xff]
        %v1012 = vld [vmem:[#allocation10 + $0x70] sm:$0xff]
        %v1013 = vld [vmem:[#allocation10 + $0x78] sm:$0xff]
        %v1014 = vld [vmem:[#allocation10 + $0x80] sm:$0xff]
        %v1015 = vld [vmem:[#allocation10 + $0x88] sm:$0xff]
        %v1016 = vld [vmem:[#allocation10 + $0x90] sm:$0xff]
        %v1017 = vld [vmem:[#allocation10 + $0x98] sm:$0xff]
        %v1018 = vld [vmem:[#allocation10 + $0xa0] sm:$0xff]
        %v1019 = vld [vmem:[#allocation10 + $0xa8] sm:$0xff]
        %v1020 = vld [vmem:[#allocation10 + $0xb0] sm:$0xff]
        %v1021 = vld [vmem:[#allocation10 + $0xb8] sm:$0xff]
        %v1022 = vld [vmem:[#allocation10 + $0xc0] sm:$0xff]
        %v1023 = vld [vmem:[#allocation10 + $0xc8] sm:$0xff]
        %v1024 = vld [vmem:[#allocation10 + $0xd0] sm:$0xff]
        %v1025 = vld [vmem:[#allocation10 + $0xd8] sm:$0xff]
        %v1026 = vld [vmem:[#allocation10 + $0xe0] sm:$0xff]
        %v1027 = vld [vmem:[#allocation10 + $0xe8] sm:$0xff]
        %v1028 = vld [vmem:[#allocation10 + $0xf0] sm:$0xff]
        %v1029 = vld [vmem:[#allocation10 + $0xf8] sm:$0xff]
        %v1030 = vld [vmem:[#allocation10 + $0x100] sm:$0xff]
        %v1031 = vld [vmem:[#allocation10 + $0x108] sm:$0xff]
        %v1032 = vld [vmem:[#allocation10 + $0x110] sm:$0xff]
        %v1033 = vld [vmem:[#allocation10 + $0x118] sm:$0xff]
        %v1034 = vld [vmem:[#allocation10 + $0x120] sm:$0xff]
        %v1035 = vld [vmem:[#allocation10 + $0x128] sm:$0xff]
        %v1036 = vld [vmem:[#allocation10 + $0x130] sm:$0xff]
        %v1037 = vld [vmem:[#allocation10 + $0x138] sm:$0xff]
        %v1038 = vld [vmem:[#allocation10 + $0x140] sm:$0xff]
        %v1039 = vld [vmem:[#allocation10 + $0x148] sm:$0xff]
        %v1040 = vld [vmem:[#allocation10 + $0x150] sm:$0xff]
        %v1041 = vld [vmem:[#allocation10 + $0x158] sm:$0xff]
        %v1042 = vld [vmem:[#allocation10 + $0x160] sm:$0xff]
        %v1043 = vld [vmem:[#allocation10 + $0x168] sm:$0xff]
        %v1044 = vld [vmem:[#allocation10 + $0x170] sm:$0xff]
        %v1045 = vld [vmem:[#allocation10 + $0x178] sm:$0xff]
        %v1046 = vld [vmem:[#allocation10 + $0x180] sm:$0xff]
        %v1047 = vld [vmem:[#allocation10 + $0x188] sm:$0xff]
        %v1048 = vld [vmem:[#allocation10 + $0x190] sm:$0xff]
        %v1049 = vld [vmem:[#allocation10 + $0x198] sm:$0xff]
        %v1050 = vld [vmem:[#allocation10 + $0x1a0] sm:$0xff]
        %v1051 = vld [vmem:[#allocation10 + $0x1a8] sm:$0xff]
        %v1052 = vld [vmem:[#allocation10 + $0x1b0] sm:$0xff]
        %v1053 = vld [vmem:[#allocation10 + $0x1b8] sm:$0xff]
        %v1054 = vld [vmem:[#allocation10 + $0x1c0] sm:$0xff]
        %v1055 = vld [vmem:[#allocation10 + $0x1c8] sm:$0xff]
        %v1056 = vld [vmem:[#allocation10 + $0x1d0] sm:$0xff]
        %v1057 = vld [vmem:[#allocation10 + $0x1d8] sm:$0xff]
        %v1058 = vld [vmem:[#allocation10 + $0x1e0] sm:$0xff]
        %v1059 = vld [vmem:[#allocation10 + $0x1e8] sm:$0xff]
        %v1060 = vld [vmem:[#allocation10 + $0x1f0] sm:$0xff]
        %v1061 = vld [vmem:[#allocation10 + $0x1f8] sm:$0xff]
        %v1062 = vld [vmem:[%s5] sm:$0x3]
        %v1064 = vperm.slane %v1062, 0
        %v1065 = vperm.slane %v1062, 1
        %1068 = vmatpush.msra.mxu0 %v1028
        %1069 = vmatpush.msra.mxu0 %v1026
        %1070 = vmatpush.msra.mxu0 %v1024
        %1071 = vmatpush.msra.mxu0 %v1022
        %1072 = vmatpush.msra.mxu0 %v1020
        %1073 = vmatpush.msra.mxu0 %v1018
        %1074 = vmatpush.msra.mxu0 %v1016
        %1075 = vmatpush.msra.mxu0 %v1014
        %1076 = vmatpush.msra.mxu0 %v1012
        %1077 = vmatpush.msra.mxu0 %v1010
        %1078 = vmatpush.msra.mxu0 %v1008
        %1079 = vmatpush.msra.mxu0 %v1006
        %1080 = vmatpush.msra.mxu0 %v1004
        %1081 = vmatpush.msra.mxu0 %v1002
        %1082 = vmatpush.msra.mxu0 %v1000
        %1083 = vmatpush.msra.mxu0 %v998
        %1084 = vmatmul.f32.gmra.mxu0 %v990
        %v1085 = vpop.f32.mrf.mxu0
        %v1086 = vadd.f32 %v1064, %v1085
        %1087 = vmatmul.f32.gmra.mxu0 %v992
        %v1088 = vpop.f32.mrf.mxu0
        %v1089 = vadd.f32 %v1064, %v1088
        %1090 = vmatmul.f32.gmra.mxu0 %v994
        %v1091 = vpop.f32.mrf.mxu0
        %v1092 = vadd.f32 %v1064, %v1091
        %1093 = vmatmul.f32.gmra.mxu0 %v996
        %v1094 = vpop.f32.mrf.mxu0
        %v1095 = vadd.f32 %v1064, %v1094
        %1096 = vdwg.mxu0
        %1097 = vmatpush.msra.mxu0 %v1060
        %1098 = vmatpush.msra.mxu0 %v1058
        %1099 = vmatpush.msra.mxu0 %v1056
        %1100 = vmatpush.msra.mxu0 %v1054
        %1101 = vmatpush.msra.mxu0 %v1052
        %1102 = vmatpush.msra.mxu0 %v1050
        %1103 = vmatpush.msra.mxu0 %v1048
        %1104 = vmatpush.msra.mxu0 %v1046
        %1105 = vmatpush.msra.mxu0 %v1044
        %1106 = vmatpush.msra.mxu0 %v1042
        %1107 = vmatpush.msra.mxu0 %v1040
        %1108 = vmatpush.msra.mxu0 %v1038
        %1109 = vmatpush.msra.mxu0 %v1036
        %1110 = vmatpush.msra.mxu0 %v1034
        %1111 = vmatpush.msra.mxu0 %v1032
        %1112 = vmatpush.msra.mxu0 %v1030
        %1113 = vmatmul.f32.gmra.mxu0 %v991
        %v1114 = vpop.f32.mrf.mxu0
        %v1115 = vadd.f32 %v1086, %v1114
        %1116 = vmatmul.f32.gmra.mxu0 %v993
        %v1117 = vpop.f32.mrf.mxu0
        %v1118 = vadd.f32 %v1089, %v1117
        %1119 = vmatmul.f32.gmra.mxu0 %v995
        %v1120 = vpop.f32.mrf.mxu0
        %v1121 = vadd.f32 %v1092, %v1120
        %1122 = vmatmul.f32.gmra.mxu0 %v997
        %v1123 = vpop.f32.mrf.mxu0
        %v1124 = vadd.f32 %v1095, %v1123
        %1125 = vdwg.mxu0
        %1126 = vmatpush.msra.mxu0 %v1029
        %1127 = vmatpush.msra.mxu0 %v1027
        %1128 = vmatpush.msra.mxu0 %v1025
        %1129 = vmatpush.msra.mxu0 %v1023
        %1130 = vmatpush.msra.mxu0 %v1021
        %1131 = vmatpush.msra.mxu0 %v1019
        %1132 = vmatpush.msra.mxu0 %v1017
        %1133 = vmatpush.msra.mxu0 %v1015
        %1134 = vmatpush.msra.mxu0 %v1013
        %1135 = vmatpush.msra.mxu0 %v1011
        %1136 = vmatpush.msra.mxu0 %v1009
        %1137 = vmatpush.msra.mxu0 %v1007
        %1138 = vmatpush.msra.mxu0 %v1005
        %1139 = vmatpush.msra.mxu0 %v1003
        %1140 = vmatpush.msra.mxu0 %v1001
        %1141 = vmatpush.msra.mxu0 %v999
        %1142 = vmatmul.f32.gmra.mxu0 %v990
        %v1143 = vpop.f32.mrf.mxu0
        %v1144 = vadd.f32 %v1065, %v1143
        %1145 = vmatmul.f32.gmra.mxu0 %v992
        %v1146 = vpop.f32.mrf.mxu0
        %v1147 = vadd.f32 %v1065, %v1146
        %1148 = vmatmul.f32.gmra.mxu0 %v994
        %v1149 = vpop.f32.mrf.mxu0
        %v1150 = vadd.f32 %v1065, %v1149
        %1151 = vmatmul.f32.gmra.mxu0 %v996
        %v1152 = vpop.f32.mrf.mxu0
        %v1153 = vadd.f32 %v1065, %v1152
        %1154 = vdwg.mxu0
        %1155 = vmatpush.msra.mxu0 %v1061
        %1156 = vmatpush.msra.mxu0 %v1059
        %1157 = vmatpush.msra.mxu0 %v1057
        %1158 = vmatpush.msra.mxu0 %v1055
        %1159 = vmatpush.msra.mxu0 %v1053
        %1160 = vmatpush.msra.mxu0 %v1051
        %1161 = vmatpush.msra.mxu0 %v1049
        %1162 = vmatpush.msra.mxu0 %v1047
        %1163 = vmatpush.msra.mxu0 %v1045
        %1164 = vmatpush.msra.mxu0 %v1043
        %1165 = vmatpush.msra.mxu0 %v1041
        %1166 = vmatpush.msra.mxu0 %v1039
        %1167 = vmatpush.msra.mxu0 %v1037
        %1168 = vmatpush.msra.mxu0 %v1035
        %1169 = vmatpush.msra.mxu0 %v1033
        %1170 = vmatpush.msra.mxu0 %v1031
        %1171 = vmatmul.f32.gmra.mxu0 %v991
        %v1172 = vpop.f32.mrf.mxu0
        %v1173 = vadd.f32 %v1144, %v1172
        %1174 = vmatmul.f32.gmra.mxu0 %v993
        %v1175 = vpop.f32.mrf.mxu0
        %v1176 = vadd.f32 %v1147, %v1175
        %1177 = vmatmul.f32.gmra.mxu0 %v995
        %v1178 = vpop.f32.mrf.mxu0
        %v1179 = vadd.f32 %v1150, %v1178
        %1180 = vmatmul.f32.gmra.mxu0 %v997
        %v1181 = vpop.f32.mrf.mxu0
        %v1182 = vadd.f32 %v1153, %v1181
        %1183 = vdwg.mxu0
        %v1184 = vperm.slane %v920, 0
        %v1185 = vperm.slane %v960, 0
        %v1186 = vmul.f32 %v1184, %v1115
        %v1187 = vmul.f32 %v1185, %v1173
        %v1188 = vmul.f32 %v1184, %v1118
        %v1189 = vmul.f32 %v1185, %v1176
        %v1190 = vmul.f32 %v1184, %v1121
        %v1191 = vmul.f32 %v1185, %v1179
        %v1192 = vmul.f32 %v1184, %v1124
        %v1193 = vmul.f32 %v1185, %v1182
        %v1194 = vperm.slane %v840, 0
        %v1195 = vperm.slane %v880, 0
        %v1196 = vadd.f32 %v1186, %v1194
        %v1197 = vadd.f32 %v1187, %v1195
        %v1198 = vadd.f32 %v1188, %v1194
        %v1199 = vadd.f32 %v1189, %v1195
        %v1200 = vadd.f32 %v1190, %v1194
        %v1201 = vadd.f32 %v1191, %v1195
        %v1202 = vadd.f32 %v1192, %v1194
        %v1203 = vadd.f32 %v1193, %v1195
        %v1204 = vmax.f32 %v1196, 0.0
        %v1205 = vmax.f32 %v1197, 0.0
        %v1206 = vmax.f32 %v1198, 0.0
        %v1207 = vmax.f32 %v1199, 0.0
        %v1208 = vmax.f32 %v1200, 0.0
        %v1209 = vmax.f32 %v1201, 0.0
        %v1210 = vmax.f32 %v1202, 0.0
        %v1211 = vmax.f32 %v1203, 0.0
        %s1212 = scalar_lea.vmem [#allocation10], 512
        %v1213 = vld [vmem:[%s1212] sm:$0xff]
        %v1214 = vld [vmem:[%s1212 + $0x8] sm:$0xff]
        %v1215 = vld [vmem:[%s1212 + $0x10] sm:$0xff]
        %v1216 = vld [vmem:[%s1212 + $0x18] sm:$0xff]
        %v1217 = vld [vmem:[%s1212 + $0x20] sm:$0xff]
        %v1218 = vld [vmem:[%s1212 + $0x28] sm:$0xff]
        %v1219 = vld [vmem:[%s1212 + $0x30] sm:$0xff]
        %v1220 = vld [vmem:[%s1212 + $0x38] sm:$0xff]
        %v1221 = vld [vmem:[%s1212 + $0x40] sm:$0xff]
        %v1222 = vld [vmem:[%s1212 + $0x48] sm:$0xff]
        %v1223 = vld [vmem:[%s1212 + $0x50] sm:$0xff]
        %v1224 = vld [vmem:[%s1212 + $0x58] sm:$0xff]
        %v1225 = vld [vmem:[%s1212 + $0x60] sm:$0xff]
        %v1226 = vld [vmem:[%s1212 + $0x68] sm:$0xff]
        %v1227 = vld [vmem:[%s1212 + $0x70] sm:$0xff]
        %v1228 = vld [vmem:[%s1212 + $0x78] sm:$0xff]
        %v1229 = vld [vmem:[%s1212 + $0x80] sm:$0xff]
        %v1230 = vld [vmem:[%s1212 + $0x88] sm:$0xff]
        %v1231 = vld [vmem:[%s1212 + $0x90] sm:$0xff]
        %v1232 = vld [vmem:[%s1212 + $0x98] sm:$0xff]
        %v1233 = vld [vmem:[%s1212 + $0xa0] sm:$0xff]
        %v1234 = vld [vmem:[%s1212 + $0xa8] sm:$0xff]
        %v1235 = vld [vmem:[%s1212 + $0xb0] sm:$0xff]
        %v1236 = vld [vmem:[%s1212 + $0xb8] sm:$0xff]
        %v1237 = vld [vmem:[%s1212 + $0xc0] sm:$0xff]
        %v1238 = vld [vmem:[%s1212 + $0xc8] sm:$0xff]
        %v1239 = vld [vmem:[%s1212 + $0xd0] sm:$0xff]
        %v1240 = vld [vmem:[%s1212 + $0xd8] sm:$0xff]
        %v1241 = vld [vmem:[%s1212 + $0xe0] sm:$0xff]
        %v1242 = vld [vmem:[%s1212 + $0xe8] sm:$0xff]
        %v1243 = vld [vmem:[%s1212 + $0xf0] sm:$0xff]
        %v1244 = vld [vmem:[%s1212 + $0xf8] sm:$0xff]
        %v1245 = vld [vmem:[%s1212 + $0x100] sm:$0xff]
        %v1246 = vld [vmem:[%s1212 + $0x108] sm:$0xff]
        %v1247 = vld [vmem:[%s1212 + $0x110] sm:$0xff]
        %v1248 = vld [vmem:[%s1212 + $0x118] sm:$0xff]
        %v1249 = vld [vmem:[%s1212 + $0x120] sm:$0xff]
        %v1250 = vld [vmem:[%s1212 + $0x128] sm:$0xff]
        %v1251 = vld [vmem:[%s1212 + $0x130] sm:$0xff]
        %v1252 = vld [vmem:[%s1212 + $0x138] sm:$0xff]
        %v1253 = vld [vmem:[%s1212 + $0x140] sm:$0xff]
        %v1254 = vld [vmem:[%s1212 + $0x148] sm:$0xff]
        %v1255 = vld [vmem:[%s1212 + $0x150] sm:$0xff]
        %v1256 = vld [vmem:[%s1212 + $0x158] sm:$0xff]
        %v1257 = vld [vmem:[%s1212 + $0x160] sm:$0xff]
        %v1258 = vld [vmem:[%s1212 + $0x168] sm:$0xff]
        %v1259 = vld [vmem:[%s1212 + $0x170] sm:$0xff]
        %v1260 = vld [vmem:[%s1212 + $0x178] sm:$0xff]
        %v1261 = vld [vmem:[%s1212 + $0x180] sm:$0xff]
        %v1262 = vld [vmem:[%s1212 + $0x188] sm:$0xff]
        %v1263 = vld [vmem:[%s1212 + $0x190] sm:$0xff]
        %v1264 = vld [vmem:[%s1212 + $0x198] sm:$0xff]
        %v1265 = vld [vmem:[%s1212 + $0x1a0] sm:$0xff]
        %v1266 = vld [vmem:[%s1212 + $0x1a8] sm:$0xff]
        %v1267 = vld [vmem:[%s1212 + $0x1b0] sm:$0xff]
        %v1268 = vld [vmem:[%s1212 + $0x1b8] sm:$0xff]
        %v1269 = vld [vmem:[%s1212 + $0x1c0] sm:$0xff]
        %v1270 = vld [vmem:[%s1212 + $0x1c8] sm:$0xff]
        %v1271 = vld [vmem:[%s1212 + $0x1d0] sm:$0xff]
        %v1272 = vld [vmem:[%s1212 + $0x1d8] sm:$0xff]
        %v1273 = vld [vmem:[%s1212 + $0x1e0] sm:$0xff]
        %v1274 = vld [vmem:[%s1212 + $0x1e8] sm:$0xff]
        %v1275 = vld [vmem:[%s1212 + $0x1f0] sm:$0xff]
        %v1276 = vld [vmem:[%s1212 + $0x1f8] sm:$0xff]
        %s1277 = scalar_lea.vmem %s5, 2
        %v1278 = vld [vmem:[%s1277] sm:$0x3]
        %v1280 = vperm.slane %v1278, 0
        %v1281 = vperm.slane %v1278, 1
        %1284 = vmatpush.msra.mxu0 %v1243
        %1285 = vmatpush.msra.mxu0 %v1241
        %1286 = vmatpush.msra.mxu0 %v1239
        %1287 = vmatpush.msra.mxu0 %v1237
        %1288 = vmatpush.msra.mxu0 %v1235
        %1289 = vmatpush.msra.mxu0 %v1233
        %1290 = vmatpush.msra.mxu0 %v1231
        %1291 = vmatpush.msra.mxu0 %v1229
        %1292 = vmatpush.msra.mxu0 %v1227
        %1293 = vmatpush.msra.mxu0 %v1225
        %1294 = vmatpush.msra.mxu0 %v1223
        %1295 = vmatpush.msra.mxu0 %v1221
        %1296 = vmatpush.msra.mxu0 %v1219
        %1297 = vmatpush.msra.mxu0 %v1217
        %1298 = vmatpush.msra.mxu0 %v1215
        %1299 = vmatpush.msra.mxu0 %v1213
        %1300 = vmatmul.f32.gmra.mxu0 %v1204
        %v1301 = vpop.f32.mrf.mxu0
        %v1302 = vadd.f32 %v1280, %v1301
        %1303 = vmatmul.f32.gmra.mxu0 %v1206
        %v1304 = vpop.f32.mrf.mxu0
        %v1305 = vadd.f32 %v1280, %v1304
        %1306 = vmatmul.f32.gmra.mxu0 %v1208
        %v1307 = vpop.f32.mrf.mxu0
        %v1308 = vadd.f32 %v1280, %v1307
        %1309 = vmatmul.f32.gmra.mxu0 %v1210
        %v1310 = vpop.f32.mrf.mxu0
        %v1311 = vadd.f32 %v1280, %v1310
        %1312 = vdwg.mxu0
        %1313 = vmatpush.msra.mxu0 %v1275
        %1314 = vmatpush.msra.mxu0 %v1273
        %1315 = vmatpush.msra.mxu0 %v1271
        %1316 = vmatpush.msra.mxu0 %v1269
        %1317 = vmatpush.msra.mxu0 %v1267
        %1318 = vmatpush.msra.mxu0 %v1265
        %1319 = vmatpush.msra.mxu0 %v1263
        %1320 = vmatpush.msra.mxu0 %v1261
        %1321 = vmatpush.msra.mxu0 %v1259
        %1322 = vmatpush.msra.mxu0 %v1257
        %1323 = vmatpush.msra.mxu0 %v1255
        %1324 = vmatpush.msra.mxu0 %v1253
        %1325 = vmatpush.msra.mxu0 %v1251
        %1326 = vmatpush.msra.mxu0 %v1249
        %1327 = vmatpush.msra.mxu0 %v1247
        %1328 = vmatpush.msra.mxu0 %v1245
        %1329 = vmatmul.f32.gmra.mxu0 %v1205
        %v1330 = vpop.f32.mrf.mxu0
        %v1331 = vadd.f32 %v1302, %v1330
        %1332 = vmatmul.f32.gmra.mxu0 %v1207
        %v1333 = vpop.f32.mrf.mxu0
        %v1334 = vadd.f32 %v1305, %v1333
        %1335 = vmatmul.f32.gmra.mxu0 %v1209
        %v1336 = vpop.f32.mrf.mxu0
        %v1337 = vadd.f32 %v1308, %v1336
        %1338 = vmatmul.f32.gmra.mxu0 %v1211
        %v1339 = vpop.f32.mrf.mxu0
        %v1340 = vadd.f32 %v1311, %v1339
        %1341 = vdwg.mxu0
        %1342 = vmatpush.msra.mxu0 %v1244
        %1343 = vmatpush.msra.mxu0 %v1242
        %1344 = vmatpush.msra.mxu0 %v1240
        %1345 = vmatpush.msra.mxu0 %v1238
        %1346 = vmatpush.msra.mxu0 %v1236
        %1347 = vmatpush.msra.mxu0 %v1234
        %1348 = vmatpush.msra.mxu0 %v1232
        %1349 = vmatpush.msra.mxu0 %v1230
        %1350 = vmatpush.msra.mxu0 %v1228
        %1351 = vmatpush.msra.mxu0 %v1226
        %1352 = vmatpush.msra.mxu0 %v1224
        %1353 = vmatpush.msra.mxu0 %v1222
        %1354 = vmatpush.msra.mxu0 %v1220
        %1355 = vmatpush.msra.mxu0 %v1218
        %1356 = vmatpush.msra.mxu0 %v1216
        %1357 = vmatpush.msra.mxu0 %v1214
        %1358 = vmatmul.f32.gmra.mxu0 %v1204
        %v1359 = vpop.f32.mrf.mxu0
        %v1360 = vadd.f32 %v1281, %v1359
        %1361 = vmatmul.f32.gmra.mxu0 %v1206
        %v1362 = vpop.f32.mrf.mxu0
        %v1363 = vadd.f32 %v1281, %v1362
        %1364 = vmatmul.f32.gmra.mxu0 %v1208
        %v1365 = vpop.f32.mrf.mxu0
        %v1366 = vadd.f32 %v1281, %v1365
        %1367 = vmatmul.f32.gmra.mxu0 %v1210
        %v1368 = vpop.f32.mrf.mxu0
        %v1369 = vadd.f32 %v1281, %v1368
        %1370 = vdwg.mxu0
        %1371 = vmatpush.msra.mxu0 %v1276
        %1372 = vmatpush.msra.mxu0 %v1274
        %1373 = vmatpush.msra.mxu0 %v1272
        %1374 = vmatpush.msra.mxu0 %v1270
        %1375 = vmatpush.msra.mxu0 %v1268
        %1376 = vmatpush.msra.mxu0 %v1266
        %1377 = vmatpush.msra.mxu0 %v1264
        %1378 = vmatpush.msra.mxu0 %v1262
        %1379 = vmatpush.msra.mxu0 %v1260
        %1380 = vmatpush.msra.mxu0 %v1258
        %1381 = vmatpush.msra.mxu0 %v1256
        %1382 = vmatpush.msra.mxu0 %v1254
        %1383 = vmatpush.msra.mxu0 %v1252
        %1384 = vmatpush.msra.mxu0 %v1250
        %1385 = vmatpush.msra.mxu0 %v1248
        %1386 = vmatpush.msra.mxu0 %v1246
        %1387 = vmatmul.f32.gmra.mxu0 %v1205
        %v1388 = vpop.f32.mrf.mxu0
        %v1389 = vadd.f32 %v1360, %v1388
        %1390 = vmatmul.f32.gmra.mxu0 %v1207
        %v1391 = vpop.f32.mrf.mxu0
        %v1392 = vadd.f32 %v1363, %v1391
        %1393 = vmatmul.f32.gmra.mxu0 %v1209
        %v1394 = vpop.f32.mrf.mxu0
        %v1395 = vadd.f32 %v1366, %v1394
        %1396 = vmatmul.f32.gmra.mxu0 %v1211
        %v1397 = vpop.f32.mrf.mxu0
        %v1398 = vadd.f32 %v1369, %v1397
        %1399 = vdwg.mxu0
        %v1400 = vadd.f32 %v982, %v1331
        %v1401 = vadd.f32 %v983, %v1389
        %v1402 = vadd.f32 %v984, %v1334
        %v1403 = vadd.f32 %v985, %v1392
        %v1404 = vadd.f32 %v986, %v1337
        %v1405 = vadd.f32 %v987, %v1395
        %v1406 = vadd.f32 %v988, %v1340
        %v1407 = vadd.f32 %v989, %v1398
        %1408 = vst [vmem:[%s359] sm:$0xff] %v1400
        %1409 = vst [vmem:[%s359 + $0x8] sm:$0xff] %v1401
        %1410 = vst [vmem:[%s359 + $0x10] sm:$0xff] %v1402
        %1411 = vst [vmem:[%s359 + $0x18] sm:$0xff] %v1403
        %1412 = vst [vmem:[%s359 + $0x20] sm:$0xff] %v1404
        %1413 = vst [vmem:[%s359 + $0x28] sm:$0xff] %v1405
        %1414 = vst [vmem:[%s359 + $0x30] sm:$0xff] %v1406
        %1415 = vst [vmem:[%s359 + $0x38] sm:$0xff] %v1407
        %s1416 = sand.u32 %s185, 1
        %s1417 = scalar_lea.sflag [#allocation4], %s1416
        %s1418 = sand.u32 %s185, 1
        %s1419 = smul.addr %s1418, 64
        %s1420 = scalar_lea.vmem [#allocation11], %s1419
        // Predicated region
        $region65: #{tpu_custom_call.1} parent=43 // pred_check
          %p1421 = pneg %p195
        $region66: #{tpu_custom_call.1} parent=43 // pred_check_branch
          %1423 = sbr.rel (%p1421) target = $region68
        $region67: #{tpu_custom_call.1} parent=43 // pred_region
          %s1424 = smul.u32 4, %s30
          %1426 = vsyncadd %s1417, 0
          %s1427 = smul.addr %s1424, 2
          %s1428 = smul.addr %s29, 16
          %s1429 = sadd.s32 %s1427, %s1428
          %s1430 = smul.addr %s1429, 8
          %s1431 = scalar_lea.hbm %s6, %s1430
          %s1432 = sshll.u32 %s1420, 4
          %s1433 = int_to_ptr.vmem [resolvable:$true] %s1432
          %s1434 = sshll.u32 %s1431, 4
          %s1435 = int_to_ptr.hbm [resolvable:$true] %s1434
          %1440 = dma.vmem_to_hbm [thread:$0]  %s1433, 1024, %s1435, %s1417, 256, 256, 16
        $region68: #{tpu_custom_call.1} parent=43 // pred_fallthru
          _
      $region44: #{tpu_custom_call.1} parent=5 // pred_fallthru
        _
      %p1441 = scmp.le.s32.totalorder 2, %s20
      // Predicated region
      $region69: #{tpu_custom_call.1} parent=5 // pred_check
        %p1442 = pneg %p1441
      $region70: #{tpu_custom_call.1} parent=5 // pred_check_branch
        %1444 = sbr.rel (%p1442) target = $region72
      $region71: #{tpu_custom_call.1} parent=5 // pred_region
        %s1445 = ssub.s32 %s20, 2
        // Predicated region
        $region73: #{tpu_custom_call.1} parent=71 // pred_check
          %p1446 = pneg %p201
        $region74: #{tpu_custom_call.1} parent=71 // pred_check_branch
          %1448 = sbr.rel (%p1446) target = $region76
        $region75: #{tpu_custom_call.1} parent=71 // pred_region
          %s1449 = sand.u32 %s186, 1
          %s1450 = scalar_lea.sflag [#allocation4], %s1449
          %s1451 = sand.u32 %s186, 1
          %s1452 = smul.addr %s1451, 64
          %s1453 = scalar_lea.vmem [#allocation11], %s1452
          %1455 = dma.done %s1450, 1024
        $region76: #{tpu_custom_call.1} parent=71 // pred_fallthru
          _
      $region72: #{tpu_custom_call.1} parent=5 // pred_fallthru
        _
    $region6: #{tpu_custom_call.1} parent=1 // loop_footer
      %s24 = sadd.s32 1, %s20
    $region7: #{tpu_custom_call.1} parent=1 // loop_footer_branch
      %19 = sbr.rel target = $region3
    $region8: #{tpu_custom_call.1} parent=1 // loop_exit
      _
    %1456 = vsyncpa [#allocation3], 1
    %s1457 = scalar_lea.sflag [#allocation3], 1
    %1458 = vsyncpa %s1457, 1
    %1459 = vsyncpa [#allocation6], 1
    %s1460 = scalar_lea.sflag [#allocation6], 1
    %1461 = vsyncpa %s1460, 1
    %1462 = vsyncpa [#allocation9], 1
    %1463 = vsyncpa [#allocation4], 1
    %s1464 = scalar_lea.sflag [#allocation4], 1
    %1465 = vsyncpa %s1464, 1

</llo_original>
